<compile_context>
chip_gen: v7x
topology: tpu7x:2x2x1
jax: 0.10.0
libtpu: 0.0.40
codegen_flags: <defaults>
</compile_context>

<pallas_src>
import functools

import jax
import jax.numpy as jnp
from jax.experimental import pallas as pl
from jax.experimental.pallas import tpu as pltpu


def _round_up(n, m):
    return ((n + m - 1) // m) * m


def _pad_axis(x, axis, new_size):
    pad = new_size - x.shape[axis]
    if pad <= 0:
        return x
    widths = [(0, 0)] * x.ndim
    widths[axis] = (0, pad)
    return jnp.pad(x, widths)


def _im2col_nhwc(x, kh, kw):
    """(B, H, W, C) -> (B, Ho*Wo, kh*kw*C) patches, channel ordering (i, j, c)."""
    B, H, W, C = x.shape
    Ho, Wo = H - kh + 1, W - kw + 1
    cols = [x[:, i:i + Ho, j:j + Wo, :] for i in range(kh) for j in range(kw)]
    patches = jnp.concatenate(cols, axis=-1)           # (B, Ho, Wo, kh*kw*C)
    return patches.reshape(B, Ho * Wo, kh * kw * C)


def _fused_conv_kernel(kh, kw, W1, M2w,
                       p1_ref, w1_ref, b1_ref, c_ref, w2_ref, b2_ref,
                       o_ref, act1_ref):
    # ---- conv1 (bf16 MXU matmul, f32 accum) + bias + ReLU + const ----------
    a = jnp.dot(p1_ref[0], w1_ref[...], preferred_element_type=jnp.float32)
    a = jnp.maximum(a + b1_ref[...], 0.0) + c_ref[...]
    act1_ref[...] = a                                   # stays in VMEM

    # ---- conv2: kh*kw shifted matmuls in the flattened pixel domain --------
    # out_acc[r] = sum_{di,dj} act1_flat[r + di*W1 + dj] @ w2[di,dj]
    # (rows r with r % W1 >= W2 receive garbage and are trimmed wrapper-side)
    acc = jnp.zeros((M2w, o_ref.shape[-1]), jnp.float32)
    for di in range(kh):
        for dj in range(kw):
            off = di * W1 + dj
            lhs = act1_ref[pl.ds(off, M2w), :]
            acc = acc + jnp.dot(lhs, w2_ref[di * kw + dj],
                                preferred_element_type=jnp.float32)
    o_ref[0] = (acc + b2_ref[...]).astype(o_ref.dtype)


def advanced_const_quant_net(x, w1, b1, const, w2, b2):
    """x: NCHW (B,3,H,W); w1:(130,3,3,3); const broadcastable to (1,130,1,1);
    w2:(16,130,3,3).  Returns NCHW (B,16,H-4,W-4)."""
    B, Cin, H, W = x.shape
    C1, C2 = w1.shape[0], w2.shape[0]
    kh, kw = w1.shape[2], w1.shape[3]
    H1, W1 = H - kh + 1, W - kw + 1
    H2, W2 = H1 - kh + 1, W1 - kw + 1

    K1 = kh * kw * Cin                                  # 27 (unpadded)
    M1 = H1 * W1                                        # conv1 output pixels
    M2w = H2 * W1                                       # conv2 rows incl. trim cols
    max_off = (kh - 1) * W1 + (kw - 1)
    M1p = _round_up(M2w + max_off, 8)                   # small row pad (196 -> 200)

    x_nhwc = jnp.transpose(x, (0, 2, 3, 1))

    # conv1 im2col patches; streamed operands in bf16 (f32 accumulation in-kernel)
    p1 = _im2col_nhwc(x_nhwc, kh, kw)                   # (B, M1, 27)
    p1 = _pad_axis(p1, 1, M1p).astype(jnp.bfloat16)     # (B, M1p, 27)

    w1_mat = jnp.transpose(w1, (2, 3, 1, 0)).reshape(K1, C1).astype(jnp.bfloat16)
    b1_row = b1.reshape(1, C1).astype(jnp.float32)
    c_row = jnp.asarray(const, jnp.float32).reshape(1, C1)

    # conv2 weights as per-tap (kh*kw, C1, C2) matrices, f32 (tiny, VMEM-resident)
    w2_taps = jnp.transpose(w2, (2, 3, 1, 0)).reshape(kh * kw, C1, C2)
    w2_taps = w2_taps.astype(jnp.float32)
    b2_row = b2.reshape(1, C2).astype(jnp.float32)

    kernel = functools.partial(_fused_conv_kernel, kh, kw, W1, M2w)

    flops = 2 * B * (M1p * K1 * C1 + kh * kw * M2w * C1 * C2)
    bytes_accessed = (B * M1p * K1 * 2 + K1 * C1 * 2 + 2 * C1 * 4
                      + kh * kw * C1 * C2 * 4 + C2 * 4 + B * M2w * C2 * 4)

    out_flat = pl.pallas_call(
        kernel,
        out_shape=jax.ShapeDtypeStruct((B, M2w, C2), jnp.float32),
        grid_spec=pltpu.PrefetchScalarGridSpec(
            num_scalar_prefetch=0,
            grid=(B,),
            in_specs=[
                pl.BlockSpec((1, M1p, K1), lambda b: (b, 0, 0)),     # patches
                pl.BlockSpec((K1, C1), lambda b: (0, 0)),            # w1 (resident)
                pl.BlockSpec((1, C1), lambda b: (0, 0)),             # b1
                pl.BlockSpec((1, C1), lambda b: (0, 0)),             # const
                pl.BlockSpec((kh * kw, C1, C2), lambda b: (0, 0, 0)),  # w2 taps
                pl.BlockSpec((1, C2), lambda b: (0, 0)),             # b2
            ],
            out_specs=pl.BlockSpec((1, M2w, C2), lambda b: (b, 0, 0)),
            scratch_shapes=[pltpu.VMEM((M1p, C1), jnp.float32)],     # act1 tile
        ),
        compiler_params=pltpu.CompilerParams(
            dimension_semantics=("parallel",)),
        cost_estimate=pl.CostEstimate(
            flops=flops, transcendentals=0, bytes_accessed=bytes_accessed),
    )(p1, w1_mat, b1_row, c_row, w2_taps, b2_row)

    # Trim the kw-1 garbage columns and go back to NCHW (tiny layout pass).
    out = out_flat.reshape(B, H2, W1, C2)[:, :, :W2, :]
    return jnp.transpose(out, (0, 3, 1, 2))


def _reference(x, w1, b1, const, w2, b2):
    dn = ("NCHW", "OIHW", "NCHW")
    y = jax.lax.conv_general_dilated(
        x, w1, (1, 1), "VALID", dimension_numbers=dn,
        precision=jax.lax.Precision.HIGHEST) + b1.reshape(1, -1, 1, 1)
    y = jnp.maximum(y, 0.0)
    y = y + const.reshape(1, -1, 1, 1)
    y = jax.lax.conv_general_dilated(
        y, w2, (1, 1), "VALID", dimension_numbers=dn,
        precision=jax.lax.Precision.HIGHEST) + b2.reshape(1, -1, 1, 1)
    return y


if __name__ == "__main__":
    key = jax.random.PRNGKey(0)
    kx, kw1, kb1, kc, kw2, kb2 = jax.random.split(key, 6)

    B, Cin, H, W = 2, 3, 16, 16
    C1, C2, K = 130, 16, 3

    x = jax.random.normal(kx, (B, Cin, H, W), dtype=jnp.float32)
    w1 = 0.1 * jax.random.normal(kw1, (C1, Cin, K, K), dtype=jnp.float32)
    b1 = 0.1 * jax.random.normal(kb1, (C1,), dtype=jnp.float32)
    const = jax.random.uniform(kc, (1, C1, 1, 1), dtype=jnp.float32)
    w2 = 0.05 * jax.random.normal(kw2, (C2, C1, K, K), dtype=jnp.float32)
    b2 = 0.1 * jax.random.normal(kb2, (C2,), dtype=jnp.float32)

    fwd = jax.jit(advanced_const_quant_net)
    out = jax.block_until_ready(fwd(x, w1, b1, const, w2, b2))

    ref = _reference(x, w1, b1, const, w2, b2)
    assert out.shape == (B, C2, H - 2 * (K - 1), W - 2 * (K - 1)), out.shape
    rel_err = float(jnp.max(jnp.abs(out - ref)) / (jnp.max(jnp.abs(ref)) + 1e-12))
    assert rel_err < 5e-3, f"mismatch vs reference: rel err {rel_err}"

    print("KERNEL_OK")
</pallas_src>

<mosaic_0001>
module attributes {stable_mosaic.version = 11 : i64} {
  func.func @_fused_conv_kernel(%arg0: i32, %arg1: memref<1x200x27xbf16, #tpu.memory_space<vmem>>, %arg2: memref<27x130xbf16, #tpu.memory_space<vmem>>, %arg3: memref<1x130xf32, #tpu.memory_space<vmem>>, %arg4: memref<1x130xf32, #tpu.memory_space<vmem>>, %arg5: memref<9x130x16xf32, #tpu.memory_space<vmem>>, %arg6: memref<1x16xf32, #tpu.memory_space<vmem>>, %arg7: memref<1x168x16xf32, #tpu.memory_space<vmem>>, %arg8: memref<200x130xf32, #tpu.memory_space<vmem>>) attributes {dimension_semantics = [#tpu.dimension_semantics<parallel>], iteration_bounds = array<i64: 2>, scalar_prefetch = 0 : i64, scratch_operands = 1 : i64, tpu.core_type = #tpu.core_type<tc>, window_params = [{transform_indices = @transform_0, window_bounds = array<i64: 1, 200, 27>}, {pipeline_mode = #tpu.pipeline_mode<synchronous>, transform_indices = @transform_1, window_bounds = array<i64: 27, 130>}, {pipeline_mode = #tpu.pipeline_mode<synchronous>, transform_indices = @transform_2, window_bounds = array<i64: 1, 130>}, {pipeline_mode = #tpu.pipeline_mode<synchronous>, transform_indices = @transform_3, window_bounds = array<i64: 1, 130>}, {pipeline_mode = #tpu.pipeline_mode<synchronous>, transform_indices = @transform_4, window_bounds = array<i64: 9, 130, 16>}, {pipeline_mode = #tpu.pipeline_mode<synchronous>, transform_indices = @transform_5, window_bounds = array<i64: 1, 16>}, {transform_indices = @transform_6, window_bounds = array<i64: 1, 168, 16>}]} {
    %c0 = arith.constant 0 : index
    %c0_0 = arith.constant 0 : index
    %c0_1 = arith.constant 0 : index
    %0 = vector.load %arg1[%c0, %c0_0, %c0_1] : memref<1x200x27xbf16, #tpu.memory_space<vmem>>, vector<1x200x27xbf16>
    %1 = vector.shape_cast %0 : vector<1x200x27xbf16> to vector<200x27xbf16>
    %c0_2 = arith.constant 0 : index
    %c0_3 = arith.constant 0 : index
    %2 = vector.load %arg2[%c0_2, %c0_3] : memref<27x130xbf16, #tpu.memory_space<vmem>>, vector<27x130xbf16>
    %cst = arith.constant dense<0.000000e+00> : vector<200x130xf32>
    %3 = tpu.matmul %1, %2, %cst {dimension_numbers = #tpu.dot_dimension_numbers<[1], [0], [0], [1], [0, 0, 1, 1], [], []>} : vector<200x27xbf16>, vector<27x130xbf16>, vector<200x130xf32> -> vector<200x130xf32>
    %c0_4 = arith.constant 0 : index
    %c0_5 = arith.constant 0 : index
    %4 = vector.load %arg3[%c0_4, %c0_5] : memref<1x130xf32, #tpu.memory_space<vmem>>, vector<1x130xf32>
    %5 = vector.broadcast %4 : vector<1x130xf32> to vector<200x130xf32>
    %6 = arith.addf %3, %5 : vector<200x130xf32>
    %cst_6 = arith.constant 0.000000e+00 : f32
    %7 = vector.broadcast %cst_6 : f32 to vector<200x130xf32>
    %8 = arith.maximumf %6, %7 : vector<200x130xf32>
    %c0_7 = arith.constant 0 : index
    %c0_8 = arith.constant 0 : index
    %9 = vector.load %arg4[%c0_7, %c0_8] : memref<1x130xf32, #tpu.memory_space<vmem>>, vector<1x130xf32>
    %10 = vector.broadcast %9 : vector<1x130xf32> to vector<200x130xf32>
    %11 = arith.addf %8, %10 : vector<200x130xf32>
    %c0_9 = arith.constant 0 : index
    %c0_10 = arith.constant 0 : index
    %12 = vector.load %arg8[%c0_9, %c0_10] : memref<200x130xf32, #tpu.memory_space<vmem>>, vector<200x130xf32>
    tpu.vector_store %arg8[%c0_9, %c0_10], %11 {strides = array<i32>} : memref<200x130xf32, #tpu.memory_space<vmem>>, vector<200x130xf32>,
    %cst_11 = arith.constant 0.000000e+00 : f32
    %13 = vector.broadcast %cst_11 : f32 to vector<168x16xf32>
    %c0_12 = arith.constant 0 : index
    %c0_13 = arith.constant 0 : index
    %14 = vector.load %arg8[%c0_12, %c0_13] : memref<200x130xf32, #tpu.memory_space<vmem>>, vector<168x130xf32>
    %c0_14 = arith.constant 0 : index
    %c0_15 = arith.constant 0 : index
    %c0_16 = arith.constant 0 : index
    %15 = vector.load %arg5[%c0_14, %c0_15, %c0_16] : memref<9x130x16xf32, #tpu.memory_space<vmem>>, vector<1x130x16xf32>
    %16 = vector.shape_cast %15 : vector<1x130x16xf32> to vector<130x16xf32>
    %cst_17 = arith.constant dense<0.000000e+00> : vector<168x16xf32>
    %17 = tpu.matmul %14, %16, %cst_17 {dimension_numbers = #tpu.dot_dimension_numbers<[1], [0], [0], [1], [0, 0, 1, 1], [], []>} : vector<168x130xf32>, vector<130x16xf32>, vector<168x16xf32> -> vector<168x16xf32>
    %18 = arith.addf %13, %17 : vector<168x16xf32>
    %c1 = arith.constant 1 : index
    %c0_18 = arith.constant 0 : index
    %19 = vector.load %arg8[%c1, %c0_18] : memref<200x130xf32, #tpu.memory_space<vmem>>, vector<168x130xf32>
    %c1_19 = arith.constant 1 : index
    %c0_20 = arith.constant 0 : index
    %c0_21 = arith.constant 0 : index
    %20 = vector.load %arg5[%c1_19, %c0_20, %c0_21] : memref<9x130x16xf32, #tpu.memory_space<vmem>>, vector<1x130x16xf32>
    %21 = vector.shape_cast %20 : vector<1x130x16xf32> to vector<130x16xf32>
    %cst_22 = arith.constant dense<0.000000e+00> : vector<168x16xf32>
    %22 = tpu.matmul %19, %21, %cst_22 {dimension_numbers = #tpu.dot_dimension_numbers<[1], [0], [0], [1], [0, 0, 1, 1], [], []>} : vector<168x130xf32>, vector<130x16xf32>, vector<168x16xf32> -> vector<168x16xf32>
    %23 = arith.addf %18, %22 : vector<168x16xf32>
    %c2 = arith.constant 2 : index
    %c0_23 = arith.constant 0 : index
    %24 = vector.load %arg8[%c2, %c0_23] : memref<200x130xf32, #tpu.memory_space<vmem>>, vector<168x130xf32>
    %c2_24 = arith.constant 2 : index
    %c0_25 = arith.constant 0 : index
    %c0_26 = arith.constant 0 : index
    %25 = vector.load %arg5[%c2_24, %c0_25, %c0_26] : memref<9x130x16xf32, #tpu.memory_space<vmem>>, vector<1x130x16xf32>
    %26 = vector.shape_cast %25 : vector<1x130x16xf32> to vector<130x16xf32>
    %cst_27 = arith.constant dense<0.000000e+00> : vector<168x16xf32>
    %27 = tpu.matmul %24, %26, %cst_27 {dimension_numbers = #tpu.dot_dimension_numbers<[1], [0], [0], [1], [0, 0, 1, 1], [], []>} : vector<168x130xf32>, vector<130x16xf32>, vector<168x16xf32> -> vector<168x16xf32>
    %28 = arith.addf %23, %27 : vector<168x16xf32>
    %c14 = arith.constant 14 : index
    %c0_28 = arith.constant 0 : index
    %29 = vector.load %arg8[%c14, %c0_28] : memref<200x130xf32, #tpu.memory_space<vmem>>, vector<168x130xf32>
    %c3 = arith.constant 3 : index
    %c0_29 = arith.constant 0 : index
    %c0_30 = arith.constant 0 : index
    %30 = vector.load %arg5[%c3, %c0_29, %c0_30] : memref<9x130x16xf32, #tpu.memory_space<vmem>>, vector<1x130x16xf32>
    %31 = vector.shape_cast %30 : vector<1x130x16xf32> to vector<130x16xf32>
    %cst_31 = arith.constant dense<0.000000e+00> : vector<168x16xf32>
    %32 = tpu.matmul %29, %31, %cst_31 {dimension_numbers = #tpu.dot_dimension_numbers<[1], [0], [0], [1], [0, 0, 1, 1], [], []>} : vector<168x130xf32>, vector<130x16xf32>, vector<168x16xf32> -> vector<168x16xf32>
    %33 = arith.addf %28, %32 : vector<168x16xf32>
    %c15 = arith.constant 15 : index
    %c0_32 = arith.constant 0 : index
    %34 = vector.load %arg8[%c15, %c0_32] : memref<200x130xf32, #tpu.memory_space<vmem>>, vector<168x130xf32>
    %c4 = arith.constant 4 : index
    %c0_33 = arith.constant 0 : index
    %c0_34 = arith.constant 0 : index
    %35 = vector.load %arg5[%c4, %c0_33, %c0_34] : memref<9x130x16xf32, #tpu.memory_space<vmem>>, vector<1x130x16xf32>
    %36 = vector.shape_cast %35 : vector<1x130x16xf32> to vector<130x16xf32>
    %cst_35 = arith.constant dense<0.000000e+00> : vector<168x16xf32>
    %37 = tpu.matmul %34, %36, %cst_35 {dimension_numbers = #tpu.dot_dimension_numbers<[1], [0], [0], [1], [0, 0, 1, 1], [], []>} : vector<168x130xf32>, vector<130x16xf32>, vector<168x16xf32> -> vector<168x16xf32>
    %38 = arith.addf %33, %37 : vector<168x16xf32>
    %c16 = arith.constant 16 : index
    %c0_36 = arith.constant 0 : index
    %39 = vector.load %arg8[%c16, %c0_36] : memref<200x130xf32, #tpu.memory_space<vmem>>, vector<168x130xf32>
    %c5 = arith.constant 5 : index
    %c0_37 = arith.constant 0 : index
    %c0_38 = arith.constant 0 : index
    %40 = vector.load %arg5[%c5, %c0_37, %c0_38] : memref<9x130x16xf32, #tpu.memory_space<vmem>>, vector<1x130x16xf32>
    %41 = vector.shape_cast %40 : vector<1x130x16xf32> to vector<130x16xf32>
    %cst_39 = arith.constant dense<0.000000e+00> : vector<168x16xf32>
    %42 = tpu.matmul %39, %41, %cst_39 {dimension_numbers = #tpu.dot_dimension_numbers<[1], [0], [0], [1], [0, 0, 1, 1], [], []>} : vector<168x130xf32>, vector<130x16xf32>, vector<168x16xf32> -> vector<168x16xf32>
    %43 = arith.addf %38, %42 : vector<168x16xf32>
    %c28 = arith.constant 28 : index
    %c0_40 = arith.constant 0 : index
    %44 = vector.load %arg8[%c28, %c0_40] : memref<200x130xf32, #tpu.memory_space<vmem>>, vector<168x130xf32>
    %c6 = arith.constant 6 : index
    %c0_41 = arith.constant 0 : index
    %c0_42 = arith.constant 0 : index
    %45 = vector.load %arg5[%c6, %c0_41, %c0_42] : memref<9x130x16xf32, #tpu.memory_space<vmem>>, vector<1x130x16xf32>
    %46 = vector.shape_cast %45 : vector<1x130x16xf32> to vector<130x16xf32>
    %cst_43 = arith.constant dense<0.000000e+00> : vector<168x16xf32>
    %47 = tpu.matmul %44, %46, %cst_43 {dimension_numbers = #tpu.dot_dimension_numbers<[1], [0], [0], [1], [0, 0, 1, 1], [], []>} : vector<168x130xf32>, vector<130x16xf32>, vector<168x16xf32> -> vector<168x16xf32>
    %48 = arith.addf %43, %47 : vector<168x16xf32>
    %c29 = arith.constant 29 : index
    %c0_44 = arith.constant 0 : index
    %49 = vector.load %arg8[%c29, %c0_44] : memref<200x130xf32, #tpu.memory_space<vmem>>, vector<168x130xf32>
    %c7 = arith.constant 7 : index
    %c0_45 = arith.constant 0 : index
    %c0_46 = arith.constant 0 : index
    %50 = vector.load %arg5[%c7, %c0_45, %c0_46] : memref<9x130x16xf32, #tpu.memory_space<vmem>>, vector<1x130x16xf32>
    %51 = vector.shape_cast %50 : vector<1x130x16xf32> to vector<130x16xf32>
    %cst_47 = arith.constant dense<0.000000e+00> : vector<168x16xf32>
    %52 = tpu.matmul %49, %51, %cst_47 {dimension_numbers = #tpu.dot_dimension_numbers<[1], [0], [0], [1], [0, 0, 1, 1], [], []>} : vector<168x130xf32>, vector<130x16xf32>, vector<168x16xf32> -> vector<168x16xf32>
    %53 = arith.addf %48, %52 : vector<168x16xf32>
    %c30 = arith.constant 30 : index
    %c0_48 = arith.constant 0 : index
    %54 = vector.load %arg8[%c30, %c0_48] : memref<200x130xf32, #tpu.memory_space<vmem>>, vector<168x130xf32>
    %c8 = arith.constant 8 : index
    %c0_49 = arith.constant 0 : index
    %c0_50 = arith.constant 0 : index
    %55 = vector.load %arg5[%c8, %c0_49, %c0_50] : memref<9x130x16xf32, #tpu.memory_space<vmem>>, vector<1x130x16xf32>
    %56 = vector.shape_cast %55 : vector<1x130x16xf32> to vector<130x16xf32>
    %cst_51 = arith.constant dense<0.000000e+00> : vector<168x16xf32>
    %57 = tpu.matmul %54, %56, %cst_51 {dimension_numbers = #tpu.dot_dimension_numbers<[1], [0], [0], [1], [0, 0, 1, 1], [], []>} : vector<168x130xf32>, vector<130x16xf32>, vector<168x16xf32> -> vector<168x16xf32>
    %58 = arith.addf %53, %57 : vector<168x16xf32>
    %c0_52 = arith.constant 0 : index
    %c0_53 = arith.constant 0 : index
    %59 = vector.load %arg6[%c0_52, %c0_53] : memref<1x16xf32, #tpu.memory_space<vmem>>, vector<1x16xf32>
    %60 = vector.broadcast %59 : vector<1x16xf32> to vector<168x16xf32>
    %61 = arith.addf %58, %60 : vector<168x16xf32>
    %c0_54 = arith.constant 0 : index
    %c0_55 = arith.constant 0 : index
    %c0_56 = arith.constant 0 : index
    %62 = vector.load %arg7[%c0_54, %c0_55, %c0_56] : memref<1x168x16xf32, #tpu.memory_space<vmem>>, vector<1x168x16xf32>
    %63 = vector.shape_cast %62 : vector<1x168x16xf32> to vector<168x16xf32>
    %64 = vector.shape_cast %61 : vector<168x16xf32> to vector<1x168x16xf32>
    tpu.vector_store %arg7[%c0_54, %c0_55, %c0_56], %64 {strides = array<i32>} : memref<1x168x16xf32, #tpu.memory_space<vmem>>, vector<1x168x16xf32>,
    return
  }
  func.func @transform_0(%arg0: i32) -> (i32, i32, i32) {
    %c0_i32 = arith.constant 0 : i32
    %c0_i32_0 = arith.constant 0 : i32
    %c0_i32_1 = arith.constant 0 : i32
    return %arg0, %c0_i32, %c0_i32_0 : i32, i32, i32
  }
  func.func @transform_1(%arg0: i32) -> (i32, i32) {
    %c0_i32 = arith.constant 0 : i32
    %c0_i32_0 = arith.constant 0 : i32
    %c0_i32_1 = arith.constant 0 : i32
    return %c0_i32, %c0_i32_0 : i32, i32
  }
  func.func @transform_2(%arg0: i32) -> (i32, i32) {
    %c0_i32 = arith.constant 0 : i32
    %c0_i32_0 = arith.constant 0 : i32
    %c0_i32_1 = arith.constant 0 : i32
    return %c0_i32, %c0_i32_0 : i32, i32
  }
  func.func @transform_3(%arg0: i32) -> (i32, i32) {
    %c0_i32 = arith.constant 0 : i32
    %c0_i32_0 = arith.constant 0 : i32
    %c0_i32_1 = arith.constant 0 : i32
    return %c0_i32, %c0_i32_0 : i32, i32
  }
  func.func @transform_4(%arg0: i32) -> (i32, i32, i32) {
    %c0_i32 = arith.constant 0 : i32
    %c0_i32_0 = arith.constant 0 : i32
    %c0_i32_1 = arith.constant 0 : i32
    %c0_i32_2 = arith.constant 0 : i32
    return %c0_i32, %c0_i32_0, %c0_i32_1 : i32, i32, i32
  }
  func.func @transform_5(%arg0: i32) -> (i32, i32) {
    %c0_i32 = arith.constant 0 : i32
    %c0_i32_0 = arith.constant 0 : i32
    %c0_i32_1 = arith.constant 0 : i32
    return %c0_i32, %c0_i32_0 : i32, i32
  }
  func.func @transform_6(%arg0: i32) -> (i32, i32, i32) {
    %c0_i32 = arith.constant 0 : i32
    %c0_i32_0 = arith.constant 0 : i32
    %c0_i32_1 = arith.constant 0 : i32
    return %arg0, %c0_i32, %c0_i32_0 : i32, i32, i32
  }
}

</mosaic_0001>

<llo_original>
// kernel: advanced_const_quant_net.1
$region0: #{advanced_const_quant_net.1}
  #allocation0 [shape = 'u32[]', space=smem, size = 0x4, offset = 0x4, fixed_abs, tag = 'smem constant byte address 0x4 - core index']
  #allocation1 [shape = 'u32[144,128]{1,0:T(1,128)}', space=vmem, size = 0x12000, scoped, tag = 'internal scratch']
  #allocation2 [shape = 'f32[200,130]{1,0:T(8,128)}', space=vmem, size = 0x32000, scoped, tag = 'scratch operand']
  %s0 = inlined_call_operand.vmem [shape: bf16[2,200,27], index: 0, kind: input, shape index: {}]
  %s1 = inlined_call_operand.vmem [shape: bf16[27,130], index: 1, kind: input, shape index: {}]
  %s2 = inlined_call_operand.vmem [shape: f32[1,130], index: 2, kind: input, shape index: {}]
  %s3 = inlined_call_operand.vmem [shape: f32[1,130], index: 3, kind: input, shape index: {}]
  %s4 = inlined_call_operand.vmem [shape: f32[9,130,16], index: 4, kind: input, shape index: {}]
  %s5 = inlined_call_operand.vmem [shape: f32[1,16], index: 5, kind: input, shape index: {}]
  %s6 = inlined_call_operand.vmem [shape: f32[2,168,16], index: 6, kind: output, shape index: {}]
  %s7 = sld [smem:[#allocation0]]
  $region57: #{advanced_const_quant_net.1} parent=0
    _
  %s9 = ssub.s32 1, %s7
  %s10 = scalar_select 0, %s9, %s7
  loop: start=0, step=1, limit=4
  $region2: #{advanced_const_quant_net.1} parent=0 // loop_pre_header
    _
  $region3: #{advanced_const_quant_net.1} parent=0 // loop_header
    %s12 = sphi 0, %s16
    %p13 = scmp.ge.s32.totalorder %s12, 4
    %s22 = sphi 0, %s24
    %s25 = sphi 0, %s22
    %s26 = sphi 0, %s25
    %s42 = sphi 0, %s26
    %s46 = sphi 0, %s46
    %s48 = sphi 0, %s46
    %s49 = sphi 0, %s48
    %s63 = sphi 0, %s49
    %s67 = sphi 0, %s67
    %s69 = sphi 0, %s67
    %s70 = sphi 0, %s69
    %s84 = sphi 0, %s70
    %s88 = sphi 0, %s88
    %s90 = sphi 0, %s88
    %s91 = sphi 0, %s90
    %s105 = sphi 0, %s91
    %s109 = sphi 0, %s109
    %s111 = sphi 0, %s109
    %s112 = sphi 0, %s111
    %s126 = sphi 0, %s112
    %s130 = sphi 0, %s130
    %s132 = sphi 0, %s130
    %s133 = sphi 0, %s132
    %s147 = sphi 0, %s133
    %s153 = sphi 0, %s155
    %s156 = sphi 0, %s153
    %s157 = sphi 0, %s156
    %s173 = sphi 0, %s157
  $region4: #{advanced_const_quant_net.1} parent=0 // loop_header_branch
    %15 = sbr.rel (%p13) target = $region8
  $region5: #{advanced_const_quant_net.1} parent=0 // loop_body
    %s17 = ssub.s32 %s12, 1
    %s18 = ssub.s32 %s12, 2
    %s19 = sadd.s32 %s12, 1
    %s20 = ssub.s32 %s12, %s19
    %p21 = scmp.eq.s32.totalorder %s20, 0
    %s23 = sadd.s32 %s22, 1
    %s24 = scalar_select %p21, %s22, %s23
    %p27 = pneg %p21
    %p28 = scmp.eq.s32.totalorder %s12, 1
    %p29 = por %p27, %p28
    %p30 = scmp.ne.s32.totalorder %s22, %s25
    %p31 = scmp.eq.s32.totalorder %s12, 0
    %p32 = por %p30, %p31
    %p33 = scmp.ne.s32.totalorder %s22, %s25
    %p34 = scmp.eq.s32.totalorder %s17, 1
    %p35 = por %p33, %p34
    %p36 = scmp.ne.s32.totalorder %s25, %s26
    %p37 = scmp.eq.s32.totalorder %s17, 0
    %p38 = por %p36, %p37
    %p39 = scmp.ne.s32.totalorder %s25, %s26
    %p40 = scmp.eq.s32.totalorder %s18, 1
    %p41 = por %p39, %p40
    %p43 = scmp.ne.s32.totalorder %s26, %s42
    %p44 = scmp.eq.s32.totalorder %s18, 0
    %p45 = por %p43, %p44
    %s47 = sadd.s32 %s46, 1
    %p50 = scmp.eq.s32.totalorder %s12, 1
    %p51 = scmp.ne.s32.totalorder %s46, %s48
    %p52 = scmp.eq.s32.totalorder %s12, 0
    %p53 = por %p51, %p52
    %p54 = scmp.ne.s32.totalorder %s46, %s48
    %p55 = scmp.eq.s32.totalorder %s17, 1
    %p56 = por %p54, %p55
    %p57 = scmp.ne.s32.totalorder %s48, %s49
    %p58 = scmp.eq.s32.totalorder %s17, 0
    %p59 = por %p57, %p58
    %p60 = scmp.ne.s32.totalorder %s48, %s49
    %p61 = scmp.eq.s32.totalorder %s18, 1
    %p62 = por %p60, %p61
    %p64 = scmp.ne.s32.totalorder %s49, %s63
    %p65 = scmp.eq.s32.totalorder %s18, 0
    %p66 = por %p64, %p65
    %s68 = sadd.s32 %s67, 1
    %p71 = scmp.eq.s32.totalorder %s12, 1
    %p72 = scmp.ne.s32.totalorder %s67, %s69
    %p73 = scmp.eq.s32.totalorder %s12, 0
    %p74 = por %p72, %p73
    %p75 = scmp.ne.s32.totalorder %s67, %s69
    %p76 = scmp.eq.s32.totalorder %s17, 1
    %p77 = por %p75, %p76
    %p78 = scmp.ne.s32.totalorder %s69, %s70
    %p79 = scmp.eq.s32.totalorder %s17, 0
    %p80 = por %p78, %p79
    %p81 = scmp.ne.s32.totalorder %s69, %s70
    %p82 = scmp.eq.s32.totalorder %s18, 1
    %p83 = por %p81, %p82
    %p85 = scmp.ne.s32.totalorder %s70, %s84
    %p86 = scmp.eq.s32.totalorder %s18, 0
    %p87 = por %p85, %p86
    %s89 = sadd.s32 %s88, 1
    %p92 = scmp.eq.s32.totalorder %s12, 1
    %p93 = scmp.ne.s32.totalorder %s88, %s90
    %p94 = scmp.eq.s32.totalorder %s12, 0
    %p95 = por %p93, %p94
    %p96 = scmp.ne.s32.totalorder %s88, %s90
    %p97 = scmp.eq.s32.totalorder %s17, 1
    %p98 = por %p96, %p97
    %p99 = scmp.ne.s32.totalorder %s90, %s91
    %p100 = scmp.eq.s32.totalorder %s17, 0
    %p101 = por %p99, %p100
    %p102 = scmp.ne.s32.totalorder %s90, %s91
    %p103 = scmp.eq.s32.totalorder %s18, 1
    %p104 = por %p102, %p103
    %p106 = scmp.ne.s32.totalorder %s91, %s105
    %p107 = scmp.eq.s32.totalorder %s18, 0
    %p108 = por %p106, %p107
    %s110 = sadd.s32 %s109, 1
    %p113 = scmp.eq.s32.totalorder %s12, 1
    %p114 = scmp.ne.s32.totalorder %s109, %s111
    %p115 = scmp.eq.s32.totalorder %s12, 0
    %p116 = por %p114, %p115
    %p117 = scmp.ne.s32.totalorder %s109, %s111
    %p118 = scmp.eq.s32.totalorder %s17, 1
    %p119 = por %p117, %p118
    %p120 = scmp.ne.s32.totalorder %s111, %s112
    %p121 = scmp.eq.s32.totalorder %s17, 0
    %p122 = por %p120, %p121
    %p123 = scmp.ne.s32.totalorder %s111, %s112
    %p124 = scmp.eq.s32.totalorder %s18, 1
    %p125 = por %p123, %p124
    %p127 = scmp.ne.s32.totalorder %s112, %s126
    %p128 = scmp.eq.s32.totalorder %s18, 0
    %p129 = por %p127, %p128
    %s131 = sadd.s32 %s130, 1
    %p134 = scmp.eq.s32.totalorder %s12, 1
    %p135 = scmp.ne.s32.totalorder %s130, %s132
    %p136 = scmp.eq.s32.totalorder %s12, 0
    %p137 = por %p135, %p136
    %p138 = scmp.ne.s32.totalorder %s130, %s132
    %p139 = scmp.eq.s32.totalorder %s17, 1
    %p140 = por %p138, %p139
    %p141 = scmp.ne.s32.totalorder %s132, %s133
    %p142 = scmp.eq.s32.totalorder %s17, 0
    %p143 = por %p141, %p142
    %p144 = scmp.ne.s32.totalorder %s132, %s133
    %p145 = scmp.eq.s32.totalorder %s18, 1
    %p146 = por %p144, %p145
    %p148 = scmp.ne.s32.totalorder %s133, %s147
    %p149 = scmp.eq.s32.totalorder %s18, 0
    %p150 = por %p148, %p149
    %s151 = ssub.s32 %s12, %s19
    %p152 = scmp.eq.s32.totalorder %s151, 0
    %s154 = sadd.s32 %s153, 1
    %s155 = scalar_select %p152, %s153, %s154
    %p158 = pneg %p152
    %p159 = scmp.eq.s32.totalorder %s12, 1
    %p160 = por %p158, %p159
    %p161 = scmp.ne.s32.totalorder %s153, %s156
    %p162 = scmp.eq.s32.totalorder %s12, 0
    %p163 = por %p161, %p162
    %p164 = scmp.ne.s32.totalorder %s153, %s156
    %p165 = scmp.eq.s32.totalorder %s17, 1
    %p166 = por %p164, %p165
    %p167 = scmp.ne.s32.totalorder %s156, %s157
    %p168 = scmp.eq.s32.totalorder %s17, 0
    %p169 = por %p167, %p168
    %p170 = scmp.ne.s32.totalorder %s156, %s157
    %p171 = scmp.eq.s32.totalorder %s18, 1
    %p172 = por %p170, %p171
    %p174 = scmp.ne.s32.totalorder %s157, %s173
    %p175 = scmp.eq.s32.totalorder %s18, 0
    %p176 = por %p174, %p175
    %p177 = scmp.le.s32.totalorder 1, %s12
    %p178 = scmp.lt.s32.totalorder %s12, 3
    %p179 = pnand %p177, %p178
    %p180 = pneg %p179
    // Predicated region
    $region9: #{advanced_const_quant_net.1} parent=5 // pred_check
      _
    $region10: #{advanced_const_quant_net.1} parent=5 // pred_check_branch
      %182 = sbr.rel (%p179) target = $region12
    $region11: #{advanced_const_quant_net.1} parent=5 // pred_region
      %s183 = ssub.s32 %s12, 1
      // Predicated region
      $region13: #{advanced_const_quant_net.1} parent=11 // pred_check
        %p184 = pneg %p59
      $region14: #{advanced_const_quant_net.1} parent=11 // pred_check_branch
        %186 = sbr.rel (%p184) target = $region16
      $region15: #{advanced_const_quant_net.1} parent=11 // pred_region
        _
      $region16: #{advanced_const_quant_net.1} parent=11 // pred_fallthru
        _
      // Predicated region
      $region17: #{advanced_const_quant_net.1} parent=11 // pred_check
        %p187 = pneg %p80
      $region18: #{advanced_const_quant_net.1} parent=11 // pred_check_branch
        %189 = sbr.rel (%p187) target = $region20
      $region19: #{advanced_const_quant_net.1} parent=11 // pred_region
        _
      $region20: #{advanced_const_quant_net.1} parent=11 // pred_fallthru
        _
      // Predicated region
      $region21: #{advanced_const_quant_net.1} parent=11 // pred_check
        %p190 = pneg %p101
      $region22: #{advanced_const_quant_net.1} parent=11 // pred_check_branch
        %192 = sbr.rel (%p190) target = $region24
      $region23: #{advanced_const_quant_net.1} parent=11 // pred_region
        _
      $region24: #{advanced_const_quant_net.1} parent=11 // pred_fallthru
        _
      // Predicated region
      $region25: #{advanced_const_quant_net.1} parent=11 // pred_check
        %p193 = pneg %p122
      $region26: #{advanced_const_quant_net.1} parent=11 // pred_check_branch
        %195 = sbr.rel (%p193) target = $region28
      $region27: #{advanced_const_quant_net.1} parent=11 // pred_region
        _
      $region28: #{advanced_const_quant_net.1} parent=11 // pred_fallthru
        _
      // Predicated region
      $region29: #{advanced_const_quant_net.1} parent=11 // pred_check
        %p196 = pneg %p143
      $region30: #{advanced_const_quant_net.1} parent=11 // pred_check_branch
        %198 = sbr.rel (%p196) target = $region32
      $region31: #{advanced_const_quant_net.1} parent=11 // pred_region
        _
      $region32: #{advanced_const_quant_net.1} parent=11 // pred_fallthru
        _
    $region12: #{advanced_const_quant_net.1} parent=5 // pred_fallthru
      _
    %p199 = scmp.lt.s32.totalorder %s12, 2
    // Predicated region
    $region33: #{advanced_const_quant_net.1} parent=5 // pred_check
      %p200 = pneg %p199
    $region34: #{advanced_const_quant_net.1} parent=5 // pred_check_branch
      %202 = sbr.rel (%p200) target = $region36
    $region35: #{advanced_const_quant_net.1} parent=5 // pred_region
      // Predicated region
      $region37: #{advanced_const_quant_net.1} parent=35 // pred_check
        %p203 = pneg %p32
      $region38: #{advanced_const_quant_net.1} parent=35 // pred_check_branch
        %205 = sbr.rel (%p203) target = $region40
      $region39: #{advanced_const_quant_net.1} parent=35 // pred_region
        %p206 = scmp.lt.s32.totalorder %s12, 1
        %s207 = scalar_select %p206, %s12, 1
        %s208 = smul.addr %s207, 25
        %s209 = smul.addr %s208, 4
        %s210 = scalar_lea.vmem %s0, %s209
      $region40: #{advanced_const_quant_net.1} parent=35 // pred_fallthru
        _
    $region36: #{advanced_const_quant_net.1} parent=5 // pred_fallthru
      _
    %p211 = scmp.le.s32.totalorder 1, %s12
    %p212 = scmp.lt.s32.totalorder %s12, 3
    %p213 = pnand %p211, %p212
    %p214 = pneg %p213
    // Predicated region
    $region41: #{advanced_const_quant_net.1} parent=5 // pred_check
      _
    $region42: #{advanced_const_quant_net.1} parent=5 // pred_check_branch
      %216 = sbr.rel (%p213) target = $region44
    $region43: #{advanced_const_quant_net.1} parent=5 // pred_region
      %s217 = ssub.s32 %s12, 1
      %p218 = scmp.lt.s32.totalorder %s17, 1
      %s219 = scalar_select %p218, %s17, 1
      %s220 = smul.addr %s219, 25
      %s221 = smul.addr %s220, 4
      %s222 = scalar_lea.vmem %s0, %s221
      %p223 = pneg %p38
      %p224 = pneg %p35
      %p225 = pneg %p59
      %p226 = pneg %p56
      %p227 = pneg %p80
      %p228 = pneg %p77
      %p229 = pneg %p101
      %p230 = pneg %p98
      %p231 = pneg %p122
      %p232 = pneg %p119
      %p233 = pneg %p143
      %p234 = pneg %p140
      %p235 = pneg %p169
      %p236 = pneg %p166
      %p237 = scmp.lt.s32.totalorder %s17, 1
      %s238 = scalar_select %p237, %s17, 1
      %s239 = smul.addr %s238, 21
      %s240 = smul.addr %s239, 8
      %s241 = scalar_lea.vmem %s6, %s240
      %p242 = scmp.lt.s32.totalorder %s17, 1
      %s243 = scalar_select %p242, %s17, 1
      %s244 = smul.addr %s243, 25
      %s245 = smul.addr %s244, 4
      %s246 = scalar_lea.vmem %s0, %s245
      %p247 = scmp.lt.s32.totalorder %s17, 1
      %s248 = scalar_select %p247, %s17, 1
      %s249 = smul.addr %s248, 21
      %s250 = smul.addr %s249, 8
      %s251 = scalar_lea.vmem %s6, %s250
      %v253 = vld [vmem:[%s246] sm:$0xf]
      %v254 = vld [vmem:[%s246 + $0x4] sm:$0xf]
      %v255 = vld [vmem:[%s246 + $0x8] sm:$0xf]
      %v256 = vld [vmem:[%s246 + $0xc] sm:$0xf]
      %v257 = vld [vmem:[%s246 + $0x10] sm:$0xf]
      %v258 = vld [vmem:[%s246 + $0x14] sm:$0xf]
      %v259 = vld [vmem:[%s246 + $0x18] sm:$0xf]
      %v260 = vld [vmem:[%s246 + $0x1c] sm:$0xf]
      %v261 = vld [vmem:[%s246 + $0x20] sm:$0xf]
      %v262 = vld [vmem:[%s246 + $0x24] sm:$0xf]
      %v263 = vld [vmem:[%s246 + $0x28] sm:$0xf]
      %v264 = vld [vmem:[%s246 + $0x2c] sm:$0xf]
      %v265 = vld [vmem:[%s246 + $0x30] sm:$0xf]
      %v266 = vld [vmem:[%s246 + $0x34] sm:$0xf]
      %v267 = vld [vmem:[%s246 + $0x38] sm:$0xf]
      %v268 = vld [vmem:[%s246 + $0x3c] sm:$0xf]
      %v269 = vld [vmem:[%s246 + $0x40] sm:$0xf]
      %v270 = vld [vmem:[%s246 + $0x44] sm:$0xf]
      %v271 = vld [vmem:[%s246 + $0x48] sm:$0xf]
      %v272 = vld [vmem:[%s246 + $0x4c] sm:$0xf]
      %v273 = vld [vmem:[%s246 + $0x50] sm:$0xf]
      %v274 = vld [vmem:[%s246 + $0x54] sm:$0xf]
      %v275 = vld [vmem:[%s246 + $0x58] sm:$0xf]
      %v276 = vld [vmem:[%s246 + $0x5c] sm:$0xf]
      %v277 = vld [vmem:[%s246 + $0x60] sm:$0xf]
      %v278 = vld [vmem:[%s1] sm:$0xff]
      %v279 = vld [vmem:[%s1 + $0x8] sm:$0xff]
      %v280 = vld [vmem:[%s1 + $0x10] sm:$0xff]
      %v281 = vld [vmem:[%s1 + $0x18] sm:$0x33]
      %v282 = vld [vmem:[%s2] sm:$0x3]
      %v284 = vlaneseq
      %v285 = vshrl.u32 %v284, 7
      %v286 = vsub.s32 0, %v285
      %v287 = vrot.slane %v282, %v286
      %v288 = vlaneseq
      %v289 = vshrl.u32 %v288, 7
      %v290 = vsub.s32 1, %v289
      %v291 = vrot.slane %v282, %v290
      %v319 = vunpack.c.l.b16 %v253
      %v320 = vunpack.c.l.b16 %v254
      %v321 = vunpack.c.l.b16 %v255
      %v322 = vunpack.c.l.b16 %v256
      %v323 = vunpack.c.l.b16 %v257
      %v324 = vunpack.c.l.b16 %v258
      %v325 = vunpack.c.l.b16 %v259
      %v326 = vunpack.c.l.b16 %v260
      %v327 = vunpack.c.l.b16 %v261
      %v328 = vunpack.c.l.b16 %v262
      %v329 = vunpack.c.l.b16 %v263
      %v330 = vunpack.c.l.b16 %v264
      %v331 = vunpack.c.l.b16 %v265
      %v332 = vunpack.c.l.b16 %v266
      %v333 = vunpack.c.l.b16 %v267
      %v334 = vunpack.c.l.b16 %v268
      %v335 = vunpack.c.l.b16 %v269
      %v336 = vunpack.c.l.b16 %v270
      %v337 = vunpack.c.l.b16 %v271
      %v338 = vunpack.c.l.b16 %v272
      %v339 = vunpack.c.l.b16 %v273
      %v340 = vunpack.c.l.b16 %v274
      %v341 = vunpack.c.l.b16 %v275
      %v342 = vunpack.c.l.b16 %v276
      %v343 = vunpack.c.l.b16 %v277
      %v344 = vpack.c.b16 %v320, %v319
      %v345 = vpack.c.b16 %v322, %v321
      %v346 = vpack.c.b16 %v324, %v323
      %v347 = vpack.c.b16 %v326, %v325
      %v348 = vpack.c.b16 %v328, %v327
      %v349 = vpack.c.b16 %v330, %v329
      %v350 = vpack.c.b16 %v332, %v331
      %v351 = vpack.c.b16 %v334, %v333
      %v352 = vpack.c.b16 %v336, %v335
      %v353 = vpack.c.b16 %v338, %v337
      %v354 = vpack.c.b16 %v340, %v339
      %v355 = vpack.c.b16 %v342, %v341
      %v356 = vpack.c.b16 %v343, %v343
      %v361 = vunpack.c.l.b16 %v278
      %v362 = vunpack.c.h.b16 %v278
      %v363 = vunpack.c.l.b16 %v279
      %v364 = vunpack.c.h.b16 %v279
      %v365 = vunpack.c.l.b16 %v280
      %v366 = vunpack.c.h.b16 %v280
      %v367 = vunpack.c.l.b16 %v281
      %v368 = vunpack.c.h.b16 %v281
      %v369 = vpack.c.b16 %v363, %v361
      %v370 = vpack.c.b16 %v364, %v362
      %v371 = vpack.c.b16 %v367, %v365
      %v372 = vpack.c.b16 %v368, %v366
      %vm375 = vcmask 220160
      %v377 = vsel %vm375, %v344, 0
      %v380 = vsel %vm375, %v345, 0
      %v383 = vsel %vm375, %v346, 0
      %v386 = vsel %vm375, %v347, 0
      %v389 = vsel %vm375, %v348, 0
      %v392 = vsel %vm375, %v349, 0
      %v395 = vsel %vm375, %v350, 0
      %v398 = vsel %vm375, %v351, 0
      %v401 = vsel %vm375, %v352, 0
      %v404 = vsel %vm375, %v353, 0
      %v407 = vsel %vm375, %v354, 0
      %v410 = vsel %vm375, %v355, 0
      %v413 = vsel %vm375, %v356, 0
      %vm415 = vcmask 1044480
      %vm416 = vcmask 1045504
      %v417 = vsel %vm415, 4294967295, 65535
      %v418 = vsel %vm416, %v417, 0
      %v420 = vand.u32 %v371, %v418
      %v423 = vand.u32 %v372, %v418
      %425 = vmatprep.subr.bf16.mxu0 %v370
      %426 = vmatpush1.bf16.msra.mxu0 %v369
      %427 = vmatprep.subr.bf16.mxu0 %v423
      %428 = vmatpush1.bf16.msra.mxu0 %v420
      %429 = vmatprep.subr.bf16.mxu0 0
      %430 = vmatpush1.bf16.msra.mxu0 0
      %431 = vmatprep.subr.bf16.mxu0 0
      %432 = vmatpush1.bf16.msra.mxu0 0
      %433 = vmatprep.subr.bf16.mxu0 0
      %434 = vmatpush1.bf16.msra.mxu0 0
      %435 = vmatprep.subr.bf16.mxu0 0
      %436 = vmatpush1.bf16.msra.mxu0 0
      %437 = vmatprep.subr.bf16.mxu0 0
      %438 = vmatpush1.bf16.msra.mxu0 0
      %439 = vmatprep.subr.bf16.mxu0 0
      %440 = vmatpush1.bf16.msra.mxu0 0
      %441 = vmatprep.subr.bf16.mxu0 0
      %442 = vmatpush1.bf16.msra.mxu0 0
      %443 = vmatprep.subr.bf16.mxu0 0
      %444 = vmatpush1.bf16.msra.mxu0 0
      %445 = vmatprep.subr.bf16.mxu0 0
      %446 = vmatpush1.bf16.msra.mxu0 0
      %447 = vmatprep.subr.bf16.mxu0 0
      %448 = vmatpush1.bf16.msra.mxu0 0
      %449 = vmatprep.subr.bf16.mxu0 0
      %450 = vmatpush1.bf16.msra.mxu0 0
      %451 = vmatprep.subr.bf16.mxu0 0
      %452 = vmatpush1.bf16.msra.mxu0 0
      %453 = vmatprep.subr.bf16.mxu0 0
      %454 = vmatpush1.bf16.msra.mxu0 0
      %455 = vmatprep.subr.bf16.mxu0 0
      %456 = vmatpush1.bf16.msra.mxu0 0
      %457 = vmatprep.mubr.bf16.mxu0 0
      %458 = vmatmul.mubr.bf16.gmra.mrb[0].mxu0 %v377
      %v459 = vpop.f32.mrb[0].mxu0
      %v460 = vadd.f32 %v287, %v459
      %v461 = vpop.f32.mrb[0].mxu0
      %v462 = vadd.f32 %v291, %v461
      %v463 = vpop.f32.mrb[0].mxu0
      %v464 = vadd.f32 %v287, %v463
      %v465 = vpop.f32.mrb[0].mxu0
      %v466 = vadd.f32 %v291, %v465
      %467 = vmatprep.mubr.bf16.mxu0 0
      %468 = vmatmul.mubr.bf16.gmra.mrb[0].mxu0 %v380
      %v469 = vpop.f32.mrb[0].mxu0
      %v470 = vadd.f32 %v287, %v469
      %v471 = vpop.f32.mrb[0].mxu0
      %v472 = vadd.f32 %v291, %v471
      %v473 = vpop.f32.mrb[0].mxu0
      %v474 = vadd.f32 %v287, %v473
      %v475 = vpop.f32.mrb[0].mxu0
      %v476 = vadd.f32 %v291, %v475
      %477 = vmatprep.mubr.bf16.mxu0 0
      %478 = vmatmul.mubr.bf16.gmra.mrb[0].mxu0 %v383
      %v479 = vpop.f32.mrb[0].mxu0
      %v480 = vadd.f32 %v287, %v479
      %v481 = vpop.f32.mrb[0].mxu0
      %v482 = vadd.f32 %v291, %v481
      %v483 = vpop.f32.mrb[0].mxu0
      %v484 = vadd.f32 %v287, %v483
      %v485 = vpop.f32.mrb[0].mxu0
      %v486 = vadd.f32 %v291, %v485
      %487 = vmatprep.mubr.bf16.mxu0 0
      %488 = vmatmul.mubr.bf16.gmra.mrb[0].mxu0 %v386
      %v489 = vpop.f32.mrb[0].mxu0
      %v490 = vadd.f32 %v287, %v489
      %v491 = vpop.f32.mrb[0].mxu0
      %v492 = vadd.f32 %v291, %v491
      %v493 = vpop.f32.mrb[0].mxu0
      %v494 = vadd.f32 %v287, %v493
      %v495 = vpop.f32.mrb[0].mxu0
      %v496 = vadd.f32 %v291, %v495
      %497 = vmatprep.mubr.bf16.mxu0 0
      %498 = vmatmul.mubr.bf16.gmra.mrb[0].mxu0 %v389
      %v499 = vpop.f32.mrb[0].mxu0
      %v500 = vadd.f32 %v287, %v499
      %v501 = vpop.f32.mrb[0].mxu0
      %v502 = vadd.f32 %v291, %v501
      %v503 = vpop.f32.mrb[0].mxu0
      %v504 = vadd.f32 %v287, %v503
      %v505 = vpop.f32.mrb[0].mxu0
      %v506 = vadd.f32 %v291, %v505
      %507 = vmatprep.mubr.bf16.mxu0 0
      %508 = vmatmul.mubr.bf16.gmra.mrb[0].mxu0 %v392
      %v509 = vpop.f32.mrb[0].mxu0
      %v510 = vadd.f32 %v287, %v509
      %v511 = vpop.f32.mrb[0].mxu0
      %v512 = vadd.f32 %v291, %v511
      %v513 = vpop.f32.mrb[0].mxu0
      %v514 = vadd.f32 %v287, %v513
      %v515 = vpop.f32.mrb[0].mxu0
      %v516 = vadd.f32 %v291, %v515
      %517 = vmatprep.mubr.bf16.mxu0 0
      %518 = vmatmul.mubr.bf16.gmra.mrb[0].mxu0 %v395
      %v519 = vpop.f32.mrb[0].mxu0
      %v520 = vadd.f32 %v287, %v519
      %v521 = vpop.f32.mrb[0].mxu0
      %v522 = vadd.f32 %v291, %v521
      %v523 = vpop.f32.mrb[0].mxu0
      %v524 = vadd.f32 %v287, %v523
      %v525 = vpop.f32.mrb[0].mxu0
      %v526 = vadd.f32 %v291, %v525
      %527 = vmatprep.mubr.bf16.mxu0 0
      %528 = vmatmul.mubr.bf16.gmra.mrb[0].mxu0 %v398
      %v529 = vpop.f32.mrb[0].mxu0
      %v530 = vadd.f32 %v287, %v529
      %v531 = vpop.f32.mrb[0].mxu0
      %v532 = vadd.f32 %v291, %v531
      %v533 = vpop.f32.mrb[0].mxu0
      %v534 = vadd.f32 %v287, %v533
      %v535 = vpop.f32.mrb[0].mxu0
      %v536 = vadd.f32 %v291, %v535
      %537 = vmatprep.mubr.bf16.mxu0 0
      %538 = vmatmul.mubr.bf16.gmra.mrb[0].mxu0 %v401
      %v539 = vpop.f32.mrb[0].mxu0
      %v540 = vadd.f32 %v287, %v539
      %v541 = vpop.f32.mrb[0].mxu0
      %v542 = vadd.f32 %v291, %v541
      %v543 = vpop.f32.mrb[0].mxu0
      %v544 = vadd.f32 %v287, %v543
      %v545 = vpop.f32.mrb[0].mxu0
      %v546 = vadd.f32 %v291, %v545
      %547 = vmatprep.mubr.bf16.mxu0 0
      %548 = vmatmul.mubr.bf16.gmra.mrb[0].mxu0 %v404
      %v549 = vpop.f32.mrb[0].mxu0
      %v550 = vadd.f32 %v287, %v549
      %v551 = vpop.f32.mrb[0].mxu0
      %v552 = vadd.f32 %v291, %v551
      %v553 = vpop.f32.mrb[0].mxu0
      %v554 = vadd.f32 %v287, %v553
      %v555 = vpop.f32.mrb[0].mxu0
      %v556 = vadd.f32 %v291, %v555
      %557 = vmatprep.mubr.bf16.mxu0 0
      %558 = vmatmul.mubr.bf16.gmra.mrb[0].mxu0 %v407
      %v559 = vpop.f32.mrb[0].mxu0
      %v560 = vadd.f32 %v287, %v559
      %v561 = vpop.f32.mrb[0].mxu0
      %v562 = vadd.f32 %v291, %v561
      %v563 = vpop.f32.mrb[0].mxu0
      %v564 = vadd.f32 %v287, %v563
      %v565 = vpop.f32.mrb[0].mxu0
      %v566 = vadd.f32 %v291, %v565
      %567 = vmatprep.mubr.bf16.mxu0 0
      %568 = vmatmul.mubr.bf16.gmra.mrb[0].mxu0 %v410
      %v569 = vpop.f32.mrb[0].mxu0
      %v570 = vadd.f32 %v287, %v569
      %v571 = vpop.f32.mrb[0].mxu0
      %v572 = vadd.f32 %v291, %v571
      %v573 = vpop.f32.mrb[0].mxu0
      %v574 = vadd.f32 %v287, %v573
      %v575 = vpop.f32.mrb[0].mxu0
      %v576 = vadd.f32 %v291, %v575
      %577 = vmatprep.mubr.bf16.mxu0 0
      %578 = vmatmul.mubr.bf16.gmra.mrb[0].mxu0 %v413
      %v579 = vpop.f32.mrb[0].mxu0
      %v580 = vadd.f32 %v287, %v579
      %v581 = vpop.f32.mrb[0].mxu0
      %v582 = vadd.f32 %v291, %v581
      %v583 = vpop.f32.mrb[0].mxu0
      %v584 = vpop.f32.mrb[0].mxu0
      %585 = vdwg.mxu0
      %v586 = vmax.f32 %v460, 0.0
      %v587 = vmax.f32 %v462, 0.0
      %v588 = vmax.f32 %v464, 0.0
      %v589 = vmax.f32 %v466, 0.0
      %v590 = vmax.f32 %v470, 0.0
      %v591 = vmax.f32 %v472, 0.0
      %v592 = vmax.f32 %v474, 0.0
      %v593 = vmax.f32 %v476, 0.0
      %v594 = vmax.f32 %v480, 0.0
      %v595 = vmax.f32 %v482, 0.0
      %v596 = vmax.f32 %v484, 0.0
      %v597 = vmax.f32 %v486, 0.0
      %v598 = vmax.f32 %v490, 0.0
      %v599 = vmax.f32 %v492, 0.0
      %v600 = vmax.f32 %v494, 0.0
      %v601 = vmax.f32 %v496, 0.0
      %v602 = vmax.f32 %v500, 0.0
      %v603 = vmax.f32 %v502, 0.0
      %v604 = vmax.f32 %v504, 0.0
      %v605 = vmax.f32 %v506, 0.0
      %v606 = vmax.f32 %v510, 0.0
      %v607 = vmax.f32 %v512, 0.0
      %v608 = vmax.f32 %v514, 0.0
      %v609 = vmax.f32 %v516, 0.0
      %v610 = vmax.f32 %v520, 0.0
      %v611 = vmax.f32 %v522, 0.0
      %v612 = vmax.f32 %v524, 0.0
      %v613 = vmax.f32 %v526, 0.0
      %v614 = vmax.f32 %v530, 0.0
      %v615 = vmax.f32 %v532, 0.0
      %v616 = vmax.f32 %v534, 0.0
      %v617 = vmax.f32 %v536, 0.0
      %v618 = vmax.f32 %v540, 0.0
      %v619 = vmax.f32 %v542, 0.0
      %v620 = vmax.f32 %v544, 0.0
      %v621 = vmax.f32 %v546, 0.0
      %v622 = vmax.f32 %v550, 0.0
      %v623 = vmax.f32 %v552, 0.0
      %v624 = vmax.f32 %v554, 0.0
      %v625 = vmax.f32 %v556, 0.0
      %v626 = vmax.f32 %v560, 0.0
      %v627 = vmax.f32 %v562, 0.0
      %v628 = vmax.f32 %v564, 0.0
      %v629 = vmax.f32 %v566, 0.0
      %v630 = vmax.f32 %v570, 0.0
      %v631 = vmax.f32 %v572, 0.0
      %v632 = vmax.f32 %v574, 0.0
      %v633 = vmax.f32 %v576, 0.0
      %v634 = vmax.f32 %v580, 0.0
      %v635 = vmax.f32 %v582, 0.0
      %v636 = vld [vmem:[%s3] sm:$0x3]
      %v638 = vlaneseq
      %v639 = vshrl.u32 %v638, 7
      %v640 = vsub.s32 0, %v639
      %v641 = vrot.slane %v636, %v640
      %v642 = vlaneseq
      %v643 = vshrl.u32 %v642, 7
      %v644 = vsub.s32 1, %v643
      %v645 = vrot.slane %v636, %v644
      %v648 = vadd.f32 %v586, %v641
      %v649 = vadd.f32 %v587, %v645
      %v650 = vadd.f32 %v588, %v641
      %v651 = vadd.f32 %v589, %v645
      %v652 = vadd.f32 %v590, %v641
      %v653 = vadd.f32 %v591, %v645
      %v654 = vadd.f32 %v592, %v641
      %v655 = vadd.f32 %v593, %v645
      %v656 = vadd.f32 %v594, %v641
      %v657 = vadd.f32 %v595, %v645
      %v658 = vadd.f32 %v596, %v641
      %v659 = vadd.f32 %v597, %v645
      %v660 = vadd.f32 %v598, %v641
      %v661 = vadd.f32 %v599, %v645
      %v662 = vadd.f32 %v600, %v641
      %v663 = vadd.f32 %v601, %v645
      %v664 = vadd.f32 %v602, %v641
      %v665 = vadd.f32 %v603, %v645
      %v666 = vadd.f32 %v604, %v641
      %v667 = vadd.f32 %v605, %v645
      %v668 = vadd.f32 %v606, %v641
      %v669 = vadd.f32 %v607, %v645
      %v670 = vadd.f32 %v608, %v641
      %v671 = vadd.f32 %v609, %v645
      %v672 = vadd.f32 %v610, %v641
      %v673 = vadd.f32 %v611, %v645
      %v674 = vadd.f32 %v612, %v641
      %v675 = vadd.f32 %v613, %v645
      %v676 = vadd.f32 %v614, %v641
      %v677 = vadd.f32 %v615, %v645
      %v678 = vadd.f32 %v616, %v641
      %v679 = vadd.f32 %v617, %v645
      %v680 = vadd.f32 %v618, %v641
      %v681 = vadd.f32 %v619, %v645
      %v682 = vadd.f32 %v620, %v641
      %v683 = vadd.f32 %v621, %v645
      %v684 = vadd.f32 %v622, %v641
      %v685 = vadd.f32 %v623, %v645
      %v686 = vadd.f32 %v624, %v641
      %v687 = vadd.f32 %v625, %v645
      %v688 = vadd.f32 %v626, %v641
      %v689 = vadd.f32 %v627, %v645
      %v690 = vadd.f32 %v628, %v641
      %v691 = vadd.f32 %v629, %v645
      %v692 = vadd.f32 %v630, %v641
      %v693 = vadd.f32 %v631, %v645
      %v694 = vadd.f32 %v632, %v641
      %v695 = vadd.f32 %v633, %v645
      %v696 = vadd.f32 %v634, %v641
      %v697 = vadd.f32 %v635, %v645
      %698 = vst [vmem:[#allocation2] sm:$0xff] %v648
      %vm699 = vcmask 15360
      %700 = vst.msk [vmem:[#allocation2 + $0x8] sm:$0xff] %vm699, %v649
      %701 = vst [vmem:[#allocation2 + $0x10] sm:$0xff] %v650
      %702 = vst.msk [vmem:[#allocation2 + $0x18] sm:$0xff] %vm699, %v651
      %703 = vst [vmem:[#allocation2 + $0x20] sm:$0xff] %v652
      %704 = vst.msk [vmem:[#allocation2 + $0x28] sm:$0xff] %vm699, %v653
      %705 = vst [vmem:[#allocation2 + $0x30] sm:$0xff] %v654
      %706 = vst.msk [vmem:[#allocation2 + $0x38] sm:$0xff] %vm699, %v655
      %707 = vst [vmem:[#allocation2 + $0x40] sm:$0xff] %v656
      %708 = vst.msk [vmem:[#allocation2 + $0x48] sm:$0xff] %vm699, %v657
      %709 = vst [vmem:[#allocation2 + $0x50] sm:$0xff] %v658
      %710 = vst.msk [vmem:[#allocation2 + $0x58] sm:$0xff] %vm699, %v659
      %711 = vst [vmem:[#allocation2 + $0x60] sm:$0xff] %v660
      %712 = vst.msk [vmem:[#allocation2 + $0x68] sm:$0xff] %vm699, %v661
      %713 = vst [vmem:[#allocation2 + $0x70] sm:$0xff] %v662
      %714 = vst.msk [vmem:[#allocation2 + $0x78] sm:$0xff] %vm699, %v663
      %715 = vst [vmem:[#allocation2 + $0x80] sm:$0xff] %v664
      %716 = vst.msk [vmem:[#allocation2 + $0x88] sm:$0xff] %vm699, %v665
      %717 = vst [vmem:[#allocation2 + $0x90] sm:$0xff] %v666
      %718 = vst.msk [vmem:[#allocation2 + $0x98] sm:$0xff] %vm699, %v667
      %719 = vst [vmem:[#allocation2 + $0xa0] sm:$0xff] %v668
      %720 = vst.msk [vmem:[#allocation2 + $0xa8] sm:$0xff] %vm699, %v669
      %721 = vst [vmem:[#allocation2 + $0xb0] sm:$0xff] %v670
      %722 = vst.msk [vmem:[#allocation2 + $0xb8] sm:$0xff] %vm699, %v671
      %723 = vst [vmem:[#allocation2 + $0xc0] sm:$0xff] %v672
      %724 = vst.msk [vmem:[#allocation2 + $0xc8] sm:$0xff] %vm699, %v673
      %725 = vst [vmem:[#allocation2 + $0xd0] sm:$0xff] %v674
      %726 = vst.msk [vmem:[#allocation2 + $0xd8] sm:$0xff] %vm699, %v675
      %727 = vst [vmem:[#allocation2 + $0xe0] sm:$0xff] %v676
      %728 = vst.msk [vmem:[#allocation2 + $0xe8] sm:$0xff] %vm699, %v677
      %729 = vst [vmem:[#allocation2 + $0xf0] sm:$0xff] %v678
      %730 = vst.msk [vmem:[#allocation2 + $0xf8] sm:$0xff] %vm699, %v679
      %731 = vst [vmem:[#allocation2 + $0x100] sm:$0xff] %v680
      %732 = vst.msk [vmem:[#allocation2 + $0x108] sm:$0xff] %vm699, %v681
      %733 = vst [vmem:[#allocation2 + $0x110] sm:$0xff] %v682
      %734 = vst.msk [vmem:[#allocation2 + $0x118] sm:$0xff] %vm699, %v683
      %735 = vst [vmem:[#allocation2 + $0x120] sm:$0xff] %v684
      %736 = vst.msk [vmem:[#allocation2 + $0x128] sm:$0xff] %vm699, %v685
      %737 = vst [vmem:[#allocation2 + $0x130] sm:$0xff] %v686
      %738 = vst.msk [vmem:[#allocation2 + $0x138] sm:$0xff] %vm699, %v687
      %739 = vst [vmem:[#allocation2 + $0x140] sm:$0xff] %v688
      %740 = vst.msk [vmem:[#allocation2 + $0x148] sm:$0xff] %vm699, %v689
      %741 = vst [vmem:[#allocation2 + $0x150] sm:$0xff] %v690
      %742 = vst.msk [vmem:[#allocation2 + $0x158] sm:$0xff] %vm699, %v691
      %743 = vst [vmem:[#allocation2 + $0x160] sm:$0xff] %v692
      %744 = vst.msk [vmem:[#allocation2 + $0x168] sm:$0xff] %vm699, %v693
      %745 = vst [vmem:[#allocation2 + $0x170] sm:$0xff] %v694
      %746 = vst.msk [vmem:[#allocation2 + $0x178] sm:$0xff] %vm699, %v695
      %747 = vst [vmem:[#allocation2 + $0x180] sm:$0xff] %v696
      %748 = vst.msk [vmem:[#allocation2 + $0x188] sm:$0xff] %vm699, %v697
      %v749 = vld [vmem:[#allocation2] sm:$0xff]
      %v750 = vld [vmem:[#allocation2 + $0x8] sm:$0xff]
      %v751 = vld [vmem:[#allocation2 + $0x10] sm:$0xff]
      %v752 = vld [vmem:[#allocation2 + $0x18] sm:$0xff]
      %v753 = vld [vmem:[#allocation2 + $0x20] sm:$0xff]
      %v754 = vld [vmem:[#allocation2 + $0x28] sm:$0xff]
      %v755 = vld [vmem:[#allocation2 + $0x30] sm:$0xff]
      %v756 = vld [vmem:[#allocation2 + $0x38] sm:$0xff]
      %v757 = vld [vmem:[#allocation2 + $0x40] sm:$0xff]
      %v758 = vld [vmem:[#allocation2 + $0x48] sm:$0xff]
      %v759 = vld [vmem:[#allocation2 + $0x50] sm:$0xff]
      %v760 = vld [vmem:[#allocation2 + $0x58] sm:$0xff]
      %v761 = vld [vmem:[#allocation2 + $0x60] sm:$0xff]
      %v762 = vld [vmem:[#allocation2 + $0x68] sm:$0xff]
      %v763 = vld [vmem:[#allocation2 + $0x70] sm:$0xff]
      %v764 = vld [vmem:[#allocation2 + $0x78] sm:$0xff]
      %v765 = vld [vmem:[#allocation2 + $0x80] sm:$0xff]
      %v766 = vld [vmem:[#allocation2 + $0x88] sm:$0xff]
      %v767 = vld [vmem:[#allocation2 + $0x90] sm:$0xff]
      %v768 = vld [vmem:[#allocation2 + $0x98] sm:$0xff]
      %v769 = vld [vmem:[#allocation2 + $0xa0] sm:$0xff]
      %v770 = vld [vmem:[#allocation2 + $0xa8] sm:$0xff]
      %v771 = vld [vmem:[#allocation2 + $0xb0] sm:$0xff]
      %v772 = vld [vmem:[#allocation2 + $0xb8] sm:$0xff]
      %v773 = vld [vmem:[#allocation2 + $0xc0] sm:$0xff]
      %v774 = vld [vmem:[#allocation2 + $0xc8] sm:$0xff]
      %v775 = vld [vmem:[#allocation2 + $0xd0] sm:$0xff]
      %v776 = vld [vmem:[#allocation2 + $0xd8] sm:$0xff]
      %v777 = vld [vmem:[#allocation2 + $0xe0] sm:$0xff]
      %v778 = vld [vmem:[#allocation2 + $0xe8] sm:$0xff]
      %v779 = vld [vmem:[#allocation2 + $0xf0] sm:$0xff]
      %v780 = vld [vmem:[#allocation2 + $0xf8] sm:$0xff]
      %v781 = vld [vmem:[#allocation2 + $0x100] sm:$0xff]
      %v782 = vld [vmem:[#allocation2 + $0x108] sm:$0xff]
      %v783 = vld [vmem:[#allocation2 + $0x110] sm:$0xff]
      %v784 = vld [vmem:[#allocation2 + $0x118] sm:$0xff]
      %v785 = vld [vmem:[#allocation2 + $0x120] sm:$0xff]
      %v786 = vld [vmem:[#allocation2 + $0x128] sm:$0xff]
      %v787 = vld [vmem:[#allocation2 + $0x130] sm:$0xff]
      %v788 = vld [vmem:[#allocation2 + $0x138] sm:$0xff]
      %v789 = vld [vmem:[#allocation2 + $0x140] sm:$0xff]
      %v790 = vld [vmem:[#allocation2 + $0x148] sm:$0xff]
      %v791 = vld [vmem:[%s4] sm:$0xff]
      %v792 = vld [vmem:[%s4 + $0x8] sm:$0xff]
      %v793 = vld [vmem:[%s4 + $0x10] sm:$0xff]
      %v794 = vld [vmem:[%s4 + $0x18] sm:$0xff]
      %v795 = vld [vmem:[%s4 + $0x20] sm:$0xff]
      %v796 = vld [vmem:[%s4 + $0x28] sm:$0xff]
      %v797 = vld [vmem:[%s4 + $0x30] sm:$0xff]
      %v798 = vld [vmem:[%s4 + $0x38] sm:$0xff]
      %v799 = vld [vmem:[%s4 + $0x40] sm:$0xff]
      %v800 = vld [vmem:[%s4 + $0x48] sm:$0xff]
      %v801 = vld [vmem:[%s4 + $0x50] sm:$0xff]
      %v802 = vld [vmem:[%s4 + $0x58] sm:$0xff]
      %v803 = vld [vmem:[%s4 + $0x60] sm:$0xff]
      %v804 = vld [vmem:[%s4 + $0x68] sm:$0xff]
      %v805 = vld [vmem:[%s4 + $0x70] sm:$0xff]
      %v806 = vld [vmem:[%s4 + $0x78] sm:$0xff]
      %v807 = vld [vmem:[%s4 + $0x80] sm:$0x3]
      %v808 = vld [vmem:[#allocation2] sm:$0xfe]
      %v809 = vld [vmem:[#allocation2 + $0x8] sm:$0xfe]
      %v810 = vld [vmem:[#allocation2 + $0x150] sm:$0x1]
      %v811 = vld [vmem:[#allocation2 + $0x158] sm:$0x1]
      %s812 = scalar_lea.vmem %s4, 136
      %v813 = vld [vmem:[%s812] sm:$0xff]
      %v814 = vld [vmem:[%s812 + $0x8] sm:$0xff]
      %v815 = vld [vmem:[%s812 + $0x10] sm:$0xff]
      %v816 = vld [vmem:[%s812 + $0x18] sm:$0xff]
      %v817 = vld [vmem:[%s812 + $0x20] sm:$0xff]
      %v818 = vld [vmem:[%s812 + $0x28] sm:$0xff]
      %v819 = vld [vmem:[%s812 + $0x30] sm:$0xff]
      %v820 = vld [vmem:[%s812 + $0x38] sm:$0xff]
      %v821 = vld [vmem:[%s812 + $0x40] sm:$0xff]
      %v822 = vld [vmem:[%s812 + $0x48] sm:$0xff]
      %v823 = vld [vmem:[%s812 + $0x50] sm:$0xff]
      %v824 = vld [vmem:[%s812 + $0x58] sm:$0xff]
      %v825 = vld [vmem:[%s812 + $0x60] sm:$0xff]
      %v826 = vld [vmem:[%s812 + $0x68] sm:$0xff]
      %v827 = vld [vmem:[%s812 + $0x70] sm:$0xff]
      %v828 = vld [vmem:[%s812 + $0x78] sm:$0xff]
      %v829 = vld [vmem:[%s812 + $0x80] sm:$0x3]
      %vm874 = vcmask 1046528
      %v875 = vrot.slane %v808, 1
      %v876 = vrot.slane %v751, 1
      %v877 = vsel %vm874, %v875, %v876
      %v878 = vrot.slane %v809, 1
      %v879 = vrot.slane %v752, 1
      %v880 = vsel %vm874, %v878, %v879
      %v881 = vrot.slane %v753, 1
      %v882 = vsel %vm874, %v876, %v881
      %v883 = vrot.slane %v754, 1
      %v884 = vsel %vm874, %v879, %v883
      %v885 = vrot.slane %v755, 1
      %v886 = vsel %vm874, %v881, %v885
      %v887 = vrot.slane %v756, 1
      %v888 = vsel %vm874, %v883, %v887
      %v889 = vrot.slane %v757, 1
      %v890 = vsel %vm874, %v885, %v889
      %v891 = vrot.slane %v758, 1
      %v892 = vsel %vm874, %v887, %v891
      %v893 = vrot.slane %v759, 1
      %v894 = vsel %vm874, %v889, %v893
      %v895 = vrot.slane %v760, 1
      %v896 = vsel %vm874, %v891, %v895
      %v897 = vrot.slane %v761, 1
      %v898 = vsel %vm874, %v893, %v897
      %v899 = vrot.slane %v762, 1
      %v900 = vsel %vm874, %v895, %v899
      %v901 = vrot.slane %v763, 1
      %v902 = vsel %vm874, %v897, %v901
      %v903 = vrot.slane %v764, 1
      %v904 = vsel %vm874, %v899, %v903
      %v905 = vrot.slane %v765, 1
      %v906 = vsel %vm874, %v901, %v905
      %v907 = vrot.slane %v766, 1
      %v908 = vsel %vm874, %v903, %v907
      %v909 = vrot.slane %v767, 1
      %v910 = vsel %vm874, %v905, %v909
      %v911 = vrot.slane %v768, 1
      %v912 = vsel %vm874, %v907, %v911
      %v913 = vrot.slane %v769, 1
      %v914 = vsel %vm874, %v909, %v913
      %v915 = vrot.slane %v770, 1
      %v916 = vsel %vm874, %v911, %v915
      %v917 = vrot.slane %v771, 1
      %v918 = vsel %vm874, %v913, %v917
      %v919 = vrot.slane %v772, 1
      %v920 = vsel %vm874, %v915, %v919
      %v921 = vrot.slane %v773, 1
      %v922 = vsel %vm874, %v917, %v921
      %v923 = vrot.slane %v774, 1
      %v924 = vsel %vm874, %v919, %v923
      %v925 = vrot.slane %v775, 1
      %v926 = vsel %vm874, %v921, %v925
      %v927 = vrot.slane %v776, 1
      %v928 = vsel %vm874, %v923, %v927
      %v929 = vrot.slane %v777, 1
      %v930 = vsel %vm874, %v925, %v929
      %v931 = vrot.slane %v778, 1
      %v932 = vsel %vm874, %v927, %v931
      %v933 = vrot.slane %v779, 1
      %v934 = vsel %vm874, %v929, %v933
      %v935 = vrot.slane %v780, 1
      %v936 = vsel %vm874, %v931, %v935
      %v937 = vrot.slane %v781, 1
      %v938 = vsel %vm874, %v933, %v937
      %v939 = vrot.slane %v782, 1
      %v940 = vsel %vm874, %v935, %v939
      %v941 = vrot.slane %v783, 1
      %v942 = vsel %vm874, %v937, %v941
      %v943 = vrot.slane %v784, 1
      %v944 = vsel %vm874, %v939, %v943
      %v945 = vrot.slane %v785, 1
      %v946 = vsel %vm874, %v941, %v945
      %v947 = vrot.slane %v786, 1
      %v948 = vsel %vm874, %v943, %v947
      %v949 = vrot.slane %v787, 1
      %v950 = vsel %vm874, %v945, %v949
      %v951 = vrot.slane %v788, 1
      %v952 = vsel %vm874, %v947, %v951
      %v953 = vrot.slane %v789, 1
      %v954 = vsel %vm874, %v949, %v953
      %v955 = vrot.slane %v790, 1
      %v956 = vsel %vm874, %v951, %v955
      %v957 = vrot.slane %v810, 1
      %v958 = vsel %vm874, %v953, %v957
      %v959 = vrot.slane %v811, 1
      %v960 = vsel %vm874, %v955, %v959
      %v982 = vsel %vm699, %v880, 0
      %v984 = vsel %vm699, %v884, 0
      %v986 = vsel %vm699, %v888, 0
      %v988 = vsel %vm699, %v892, 0
      %v990 = vsel %vm699, %v896, 0
      %v992 = vsel %vm699, %v900, 0
      %v994 = vsel %vm699, %v904, 0
      %v996 = vsel %vm699, %v908, 0
      %v998 = vsel %vm699, %v912, 0
      %v1000 = vsel %vm699, %v916, 0
      %v1002 = vsel %vm699, %v920, 0
      %v1004 = vsel %vm699, %v924, 0
      %v1006 = vsel %vm699, %v928, 0
      %v1008 = vsel %vm699, %v932, 0
      %v1010 = vsel %vm699, %v936, 0
      %v1012 = vsel %vm699, %v940, 0
      %v1014 = vsel %vm699, %v944, 0
      %v1016 = vsel %vm699, %v948, 0
      %v1018 = vsel %vm699, %v952, 0
      %v1020 = vsel %vm699, %v956, 0
      %v1022 = vsel %vm699, %v960, 0
      %vm1024 = vcmask 1041408
      %v1026 = vsel %vm1024, %v829, 0
      %1028 = vmatprep.subr.mxu0 0.0
      %1029 = vmatpush1.msra.mxu0 %v813
      %1030 = vmatprep.subr.mxu0 0.0
      %1031 = vmatpush1.msra.mxu0 %v814
      %1032 = vmatprep.subr.mxu0 0.0
      %1033 = vmatpush1.msra.mxu0 %v815
      %1034 = vmatprep.subr.mxu0 0.0
      %1035 = vmatpush1.msra.mxu0 %v816
      %1036 = vmatprep.subr.mxu0 0.0
      %1037 = vmatpush1.msra.mxu0 %v817
      %1038 = vmatprep.subr.mxu0 0.0
      %1039 = vmatpush1.msra.mxu0 %v818
      %1040 = vmatprep.subr.mxu0 0.0
      %1041 = vmatpush1.msra.mxu0 %v819
      %1042 = vmatprep.subr.mxu0 0.0
      %1043 = vmatpush1.msra.mxu0 %v820
      %1044 = vmatprep.subr.mxu0 0.0
      %1045 = vmatpush1.msra.mxu0 %v821
      %1046 = vmatprep.subr.mxu0 0.0
      %1047 = vmatpush1.msra.mxu0 %v822
      %1048 = vmatprep.subr.mxu0 0.0
      %1049 = vmatpush1.msra.mxu0 %v823
      %1050 = vmatprep.subr.mxu0 0.0
      %1051 = vmatpush1.msra.mxu0 %v824
      %1052 = vmatprep.subr.mxu0 0.0
      %1053 = vmatpush1.msra.mxu0 %v825
      %1054 = vmatprep.subr.mxu0 0.0
      %1055 = vmatpush1.msra.mxu0 %v826
      %1056 = vmatprep.subr.mxu0 0.0
      %1057 = vmatpush1.msra.mxu0 %v827
      %1058 = vmatprep.subr.mxu0 0.0
      %1059 = vmatpush1.msra.mxu0 %v828
      %1060 = vmatprep.subr.mxu0 0.0
      %1061 = vmatpush1.msra.mxu0 %v1026
      %1062 = vmatprep.subr.mxu0 0.0
      %1063 = vmatpush1.msra.mxu0 0.0
      %1064 = vmatprep.subr.mxu0 0.0
      %1065 = vmatpush1.msra.mxu0 0.0
      %1066 = vmatprep.subr.mxu0 0.0
      %1067 = vmatpush1.msra.mxu0 0.0
      %1068 = vmatprep.subr.mxu0 0.0
      %1069 = vmatpush1.msra.mxu0 0.0
      %1070 = vmatprep.subr.mxu0 0.0
      %1071 = vmatpush1.msra.mxu0 0.0
      %1072 = vmatprep.subr.mxu0 0.0
      %1073 = vmatpush1.msra.mxu0 0.0
      %1074 = vmatprep.subr.mxu0 0.0
      %1075 = vmatpush1.msra.mxu0 0.0
      %1076 = vmatprep.subr.mxu0 0.0
      %1077 = vmatpush1.msra.mxu0 0.0
      %1078 = vmatprep.subr.mxu0 0.0
      %1079 = vmatpush1.msra.mxu0 0.0
      %1080 = vmatprep.subr.mxu0 0.0
      %1081 = vmatpush1.msra.mxu0 0.0
      %1082 = vmatprep.subr.mxu0 0.0
      %1083 = vmatpush1.msra.mxu0 0.0
      %1084 = vmatprep.subr.mxu0 0.0
      %1085 = vmatpush1.msra.mxu0 0.0
      %1086 = vmatprep.subr.mxu0 0.0
      %1087 = vmatpush1.msra.mxu0 0.0
      %1088 = vmatprep.subr.mxu0 0.0
      %1089 = vmatpush1.msra.mxu0 0.0
      %1090 = vmatprep.subr.mxu0 0.0
      %1091 = vmatpush1.msra.mxu0 0.0
      %1092 = vmatprep.mubr.f32.mxu0 %v982
      %1093 = vmatmul.mubr.f32.gmra.mrb[0].mxu0 %v877
      %v1094 = vpop.f32.mrb[0].mxu0
      %v1095 = vadd.f32 0.0, %v1094
      %v1096 = vpop.f32.mrb[0].mxu0
      %1097 = vmatprep.mubr.f32.mxu0 %v984
      %1098 = vmatmul.mubr.f32.gmra.mrb[0].mxu0 %v882
      %v1099 = vpop.f32.mrb[0].mxu0
      %v1100 = vadd.f32 0.0, %v1099
      %v1101 = vpop.f32.mrb[0].mxu0
      %1102 = vmatprep.mubr.f32.mxu0 %v986
      %1103 = vmatmul.mubr.f32.gmra.mrb[0].mxu0 %v886
      %v1104 = vpop.f32.mrb[0].mxu0
      %v1105 = vadd.f32 0.0, %v1104
      %v1106 = vpop.f32.mrb[0].mxu0
      %1107 = vmatprep.mubr.f32.mxu0 %v988
      %1108 = vmatmul.mubr.f32.gmra.mrb[0].mxu0 %v890
      %v1109 = vpop.f32.mrb[0].mxu0
      %v1110 = vadd.f32 0.0, %v1109
      %v1111 = vpop.f32.mrb[0].mxu0
      %1112 = vmatprep.mubr.f32.mxu0 %v990
      %1113 = vmatmul.mubr.f32.gmra.mrb[0].mxu0 %v894
      %v1114 = vpop.f32.mrb[0].mxu0
      %v1115 = vadd.f32 0.0, %v1114
      %v1116 = vpop.f32.mrb[0].mxu0
      %1117 = vmatprep.mubr.f32.mxu0 %v992
      %1118 = vmatmul.mubr.f32.gmra.mrb[0].mxu0 %v898
      %v1119 = vpop.f32.mrb[0].mxu0
      %v1120 = vadd.f32 0.0, %v1119
      %v1121 = vpop.f32.mrb[0].mxu0
      %1122 = vmatprep.mubr.f32.mxu0 %v994
      %1123 = vmatmul.mubr.f32.gmra.mrb[0].mxu0 %v902
      %v1124 = vpop.f32.mrb[0].mxu0
      %v1125 = vadd.f32 0.0, %v1124
      %v1126 = vpop.f32.mrb[0].mxu0
      %1127 = vmatprep.mubr.f32.mxu0 %v996
      %1128 = vmatmul.mubr.f32.gmra.mrb[0].mxu0 %v906
      %v1129 = vpop.f32.mrb[0].mxu0
      %v1130 = vadd.f32 0.0, %v1129
      %v1131 = vpop.f32.mrb[0].mxu0
      %1132 = vmatprep.mubr.f32.mxu0 %v998
      %1133 = vmatmul.mubr.f32.gmra.mrb[0].mxu0 %v910
      %v1134 = vpop.f32.mrb[0].mxu0
      %v1135 = vadd.f32 0.0, %v1134
      %v1136 = vpop.f32.mrb[0].mxu0
      %1137 = vmatprep.mubr.f32.mxu0 %v1000
      %1138 = vmatmul.mubr.f32.gmra.mrb[0].mxu0 %v914
      %v1139 = vpop.f32.mrb[0].mxu0
      %v1140 = vadd.f32 0.0, %v1139
      %v1141 = vpop.f32.mrb[0].mxu0
      %1142 = vmatprep.mubr.f32.mxu0 %v1002
      %1143 = vmatmul.mubr.f32.gmra.mrb[0].mxu0 %v918
      %v1144 = vpop.f32.mrb[0].mxu0
      %v1145 = vadd.f32 0.0, %v1144
      %v1146 = vpop.f32.mrb[0].mxu0
      %1147 = vmatprep.mubr.f32.mxu0 %v1004
      %1148 = vmatmul.mubr.f32.gmra.mrb[0].mxu0 %v922
      %v1149 = vpop.f32.mrb[0].mxu0
      %v1150 = vadd.f32 0.0, %v1149
      %v1151 = vpop.f32.mrb[0].mxu0
      %1152 = vmatprep.mubr.f32.mxu0 %v1006
      %1153 = vmatmul.mubr.f32.gmra.mrb[0].mxu0 %v926
      %v1154 = vpop.f32.mrb[0].mxu0
      %v1155 = vadd.f32 0.0, %v1154
      %v1156 = vpop.f32.mrb[0].mxu0
      %1157 = vmatprep.mubr.f32.mxu0 %v1008
      %1158 = vmatmul.mubr.f32.gmra.mrb[0].mxu0 %v930
      %v1159 = vpop.f32.mrb[0].mxu0
      %v1160 = vadd.f32 0.0, %v1159
      %v1161 = vpop.f32.mrb[0].mxu0
      %1162 = vmatprep.mubr.f32.mxu0 %v1010
      %1163 = vmatmul.mubr.f32.gmra.mrb[0].mxu0 %v934
      %v1164 = vpop.f32.mrb[0].mxu0
      %v1165 = vadd.f32 0.0, %v1164
      %v1166 = vpop.f32.mrb[0].mxu0
      %1167 = vmatprep.mubr.f32.mxu0 %v1012
      %1168 = vmatmul.mubr.f32.gmra.mrb[0].mxu0 %v938
      %v1169 = vpop.f32.mrb[0].mxu0
      %v1170 = vadd.f32 0.0, %v1169
      %v1171 = vpop.f32.mrb[0].mxu0
      %1172 = vmatprep.mubr.f32.mxu0 %v1014
      %1173 = vmatmul.mubr.f32.gmra.mrb[0].mxu0 %v942
      %v1174 = vpop.f32.mrb[0].mxu0
      %v1175 = vadd.f32 0.0, %v1174
      %v1176 = vpop.f32.mrb[0].mxu0
      %1177 = vmatprep.mubr.f32.mxu0 %v1016
      %1178 = vmatmul.mubr.f32.gmra.mrb[0].mxu0 %v946
      %v1179 = vpop.f32.mrb[0].mxu0
      %v1180 = vadd.f32 0.0, %v1179
      %v1181 = vpop.f32.mrb[0].mxu0
      %1182 = vmatprep.mubr.f32.mxu0 %v1018
      %1183 = vmatmul.mubr.f32.gmra.mrb[0].mxu0 %v950
      %v1184 = vpop.f32.mrb[0].mxu0
      %v1185 = vadd.f32 0.0, %v1184
      %v1186 = vpop.f32.mrb[0].mxu0
      %1187 = vmatprep.mubr.f32.mxu0 %v1020
      %1188 = vmatmul.mubr.f32.gmra.mrb[0].mxu0 %v954
      %v1189 = vpop.f32.mrb[0].mxu0
      %v1190 = vadd.f32 0.0, %v1189
      %v1191 = vpop.f32.mrb[0].mxu0
      %1192 = vmatprep.mubr.f32.mxu0 %v1022
      %1193 = vmatmul.mubr.f32.gmra.mrb[0].mxu0 %v958
      %v1194 = vpop.f32.mrb[0].mxu0
      %v1195 = vadd.f32 0.0, %v1194
      %v1196 = vpop.f32.mrb[0].mxu0
      %1197 = vdwg.mxu0
      %v1199 = vsel %vm699, %v750, 0
      %v1201 = vsel %vm699, %v752, 0
      %v1203 = vsel %vm699, %v754, 0
      %v1205 = vsel %vm699, %v756, 0
      %v1207 = vsel %vm699, %v758, 0
      %v1209 = vsel %vm699, %v760, 0
      %v1211 = vsel %vm699, %v762, 0
      %v1213 = vsel %vm699, %v764, 0
      %v1215 = vsel %vm699, %v766, 0
      %v1217 = vsel %vm699, %v768, 0
      %v1219 = vsel %vm699, %v770, 0
      %v1221 = vsel %vm699, %v772, 0
      %v1223 = vsel %vm699, %v774, 0
      %v1225 = vsel %vm699, %v776, 0
      %v1227 = vsel %vm699, %v778, 0
      %v1229 = vsel %vm699, %v780, 0
      %v1231 = vsel %vm699, %v782, 0
      %v1233 = vsel %vm699, %v784, 0
      %v1235 = vsel %vm699, %v786, 0
      %v1237 = vsel %vm699, %v788, 0
      %v1239 = vsel %vm699, %v790, 0
      %v1242 = vsel %vm1024, %v807, 0
      %1244 = vmatprep.subr.mxu0 0.0
      %1245 = vmatpush1.msra.mxu0 %v791
      %1246 = vmatprep.subr.mxu0 0.0
      %1247 = vmatpush1.msra.mxu0 %v792
      %1248 = vmatprep.subr.mxu0 0.0
      %1249 = vmatpush1.msra.mxu0 %v793
      %1250 = vmatprep.subr.mxu0 0.0
      %1251 = vmatpush1.msra.mxu0 %v794
      %1252 = vmatprep.subr.mxu0 0.0
      %1253 = vmatpush1.msra.mxu0 %v795
      %1254 = vmatprep.subr.mxu0 0.0
      %1255 = vmatpush1.msra.mxu0 %v796
      %1256 = vmatprep.subr.mxu0 0.0
      %1257 = vmatpush1.msra.mxu0 %v797
      %1258 = vmatprep.subr.mxu0 0.0
      %1259 = vmatpush1.msra.mxu0 %v798
      %1260 = vmatprep.subr.mxu0 0.0
      %1261 = vmatpush1.msra.mxu0 %v799
      %1262 = vmatprep.subr.mxu0 0.0
      %1263 = vmatpush1.msra.mxu0 %v800
      %1264 = vmatprep.subr.mxu0 0.0
      %1265 = vmatpush1.msra.mxu0 %v801
      %1266 = vmatprep.subr.mxu0 0.0
      %1267 = vmatpush1.msra.mxu0 %v802
      %1268 = vmatprep.subr.mxu0 0.0
      %1269 = vmatpush1.msra.mxu0 %v803
      %1270 = vmatprep.subr.mxu0 0.0
      %1271 = vmatpush1.msra.mxu0 %v804
      %1272 = vmatprep.subr.mxu0 0.0
      %1273 = vmatpush1.msra.mxu0 %v805
      %1274 = vmatprep.subr.mxu0 0.0
      %1275 = vmatpush1.msra.mxu0 %v806
      %1276 = vmatprep.subr.mxu0 0.0
      %1277 = vmatpush1.msra.mxu0 %v1242
      %1278 = vmatprep.subr.mxu0 0.0
      %1279 = vmatpush1.msra.mxu0 0.0
      %1280 = vmatprep.subr.mxu0 0.0
      %1281 = vmatpush1.msra.mxu0 0.0
      %1282 = vmatprep.subr.mxu0 0.0
      %1283 = vmatpush1.msra.mxu0 0.0
      %1284 = vmatprep.subr.mxu0 0.0
      %1285 = vmatpush1.msra.mxu0 0.0
      %1286 = vmatprep.subr.mxu0 0.0
      %1287 = vmatpush1.msra.mxu0 0.0
      %1288 = vmatprep.subr.mxu0 0.0
      %1289 = vmatpush1.msra.mxu0 0.0
      %1290 = vmatprep.subr.mxu0 0.0
      %1291 = vmatpush1.msra.mxu0 0.0
      %1292 = vmatprep.subr.mxu0 0.0
      %1293 = vmatpush1.msra.mxu0 0.0
      %1294 = vmatprep.subr.mxu0 0.0
      %1295 = vmatpush1.msra.mxu0 0.0
      %1296 = vmatprep.subr.mxu0 0.0
      %1297 = vmatpush1.msra.mxu0 0.0
      %1298 = vmatprep.subr.mxu0 0.0
      %1299 = vmatpush1.msra.mxu0 0.0
      %1300 = vmatprep.subr.mxu0 0.0
      %1301 = vmatpush1.msra.mxu0 0.0
      %1302 = vmatprep.subr.mxu0 0.0
      %1303 = vmatpush1.msra.mxu0 0.0
      %1304 = vmatprep.subr.mxu0 0.0
      %1305 = vmatpush1.msra.mxu0 0.0
      %1306 = vmatprep.subr.mxu0 0.0
      %1307 = vmatpush1.msra.mxu0 0.0
      %1308 = vmatprep.mubr.f32.mxu0 %v1199
      %1309 = vmatmul.mubr.f32.gmra.mrb[0].mxu0 %v749
      %v1310 = vpop.f32.mrb[0].mxu0
      %v1311 = vadd.f32 %v1095, %v1310
      %v1312 = vpop.f32.mrb[0].mxu0
      %1313 = vmatprep.mubr.f32.mxu0 %v1201
      %1314 = vmatmul.mubr.f32.gmra.mrb[0].mxu0 %v751
      %v1315 = vpop.f32.mrb[0].mxu0
      %v1316 = vadd.f32 %v1100, %v1315
      %v1317 = vpop.f32.mrb[0].mxu0
      %1318 = vmatprep.mubr.f32.mxu0 %v1203
      %1319 = vmatmul.mubr.f32.gmra.mrb[0].mxu0 %v753
      %v1320 = vpop.f32.mrb[0].mxu0
      %v1321 = vadd.f32 %v1105, %v1320
      %v1322 = vpop.f32.mrb[0].mxu0
      %1323 = vmatprep.mubr.f32.mxu0 %v1205
      %1324 = vmatmul.mubr.f32.gmra.mrb[0].mxu0 %v755
      %v1325 = vpop.f32.mrb[0].mxu0
      %v1326 = vadd.f32 %v1110, %v1325
      %v1327 = vpop.f32.mrb[0].mxu0
      %1328 = vmatprep.mubr.f32.mxu0 %v1207
      %1329 = vmatmul.mubr.f32.gmra.mrb[0].mxu0 %v757
      %v1330 = vpop.f32.mrb[0].mxu0
      %v1331 = vadd.f32 %v1115, %v1330
      %v1332 = vpop.f32.mrb[0].mxu0
      %1333 = vmatprep.mubr.f32.mxu0 %v1209
      %1334 = vmatmul.mubr.f32.gmra.mrb[0].mxu0 %v759
      %v1335 = vpop.f32.mrb[0].mxu0
      %v1336 = vadd.f32 %v1120, %v1335
      %v1337 = vpop.f32.mrb[0].mxu0
      %1338 = vmatprep.mubr.f32.mxu0 %v1211
      %1339 = vmatmul.mubr.f32.gmra.mrb[0].mxu0 %v761
      %v1340 = vpop.f32.mrb[0].mxu0
      %v1341 = vadd.f32 %v1125, %v1340
      %v1342 = vpop.f32.mrb[0].mxu0
      %1343 = vmatprep.mubr.f32.mxu0 %v1213
      %1344 = vmatmul.mubr.f32.gmra.mrb[0].mxu0 %v763
      %v1345 = vpop.f32.mrb[0].mxu0
      %v1346 = vadd.f32 %v1130, %v1345
      %v1347 = vpop.f32.mrb[0].mxu0
      %1348 = vmatprep.mubr.f32.mxu0 %v1215
      %1349 = vmatmul.mubr.f32.gmra.mrb[0].mxu0 %v765
      %v1350 = vpop.f32.mrb[0].mxu0
      %v1351 = vadd.f32 %v1135, %v1350
      %v1352 = vpop.f32.mrb[0].mxu0
      %1353 = vmatprep.mubr.f32.mxu0 %v1217
      %1354 = vmatmul.mubr.f32.gmra.mrb[0].mxu0 %v767
      %v1355 = vpop.f32.mrb[0].mxu0
      %v1356 = vadd.f32 %v1140, %v1355
      %v1357 = vpop.f32.mrb[0].mxu0
      %1358 = vmatprep.mubr.f32.mxu0 %v1219
      %1359 = vmatmul.mubr.f32.gmra.mrb[0].mxu0 %v769
      %v1360 = vpop.f32.mrb[0].mxu0
      %v1361 = vadd.f32 %v1145, %v1360
      %v1362 = vpop.f32.mrb[0].mxu0
      %1363 = vmatprep.mubr.f32.mxu0 %v1221
      %1364 = vmatmul.mubr.f32.gmra.mrb[0].mxu0 %v771
      %v1365 = vpop.f32.mrb[0].mxu0
      %v1366 = vadd.f32 %v1150, %v1365
      %v1367 = vpop.f32.mrb[0].mxu0
      %1368 = vmatprep.mubr.f32.mxu0 %v1223
      %1369 = vmatmul.mubr.f32.gmra.mrb[0].mxu0 %v773
      %v1370 = vpop.f32.mrb[0].mxu0
      %v1371 = vadd.f32 %v1155, %v1370
      %v1372 = vpop.f32.mrb[0].mxu0
      %1373 = vmatprep.mubr.f32.mxu0 %v1225
      %1374 = vmatmul.mubr.f32.gmra.mrb[0].mxu0 %v775
      %v1375 = vpop.f32.mrb[0].mxu0
      %v1376 = vadd.f32 %v1160, %v1375
      %v1377 = vpop.f32.mrb[0].mxu0
      %1378 = vmatprep.mubr.f32.mxu0 %v1227
      %1379 = vmatmul.mubr.f32.gmra.mrb[0].mxu0 %v777
      %v1380 = vpop.f32.mrb[0].mxu0
      %v1381 = vadd.f32 %v1165, %v1380
      %v1382 = vpop.f32.mrb[0].mxu0
      %1383 = vmatprep.mubr.f32.mxu0 %v1229
      %1384 = vmatmul.mubr.f32.gmra.mrb[0].mxu0 %v779
      %v1385 = vpop.f32.mrb[0].mxu0
      %v1386 = vadd.f32 %v1170, %v1385
      %v1387 = vpop.f32.mrb[0].mxu0
      %1388 = vmatprep.mubr.f32.mxu0 %v1231
      %1389 = vmatmul.mubr.f32.gmra.mrb[0].mxu0 %v781
      %v1390 = vpop.f32.mrb[0].mxu0
      %v1391 = vadd.f32 %v1175, %v1390
      %v1392 = vpop.f32.mrb[0].mxu0
      %1393 = vmatprep.mubr.f32.mxu0 %v1233
      %1394 = vmatmul.mubr.f32.gmra.mrb[0].mxu0 %v783
      %v1395 = vpop.f32.mrb[0].mxu0
      %v1396 = vadd.f32 %v1180, %v1395
      %v1397 = vpop.f32.mrb[0].mxu0
      %1398 = vmatprep.mubr.f32.mxu0 %v1235
      %1399 = vmatmul.mubr.f32.gmra.mrb[0].mxu0 %v785
      %v1400 = vpop.f32.mrb[0].mxu0
      %v1401 = vadd.f32 %v1185, %v1400
      %v1402 = vpop.f32.mrb[0].mxu0
      %1403 = vmatprep.mubr.f32.mxu0 %v1237
      %1404 = vmatmul.mubr.f32.gmra.mrb[0].mxu0 %v787
      %v1405 = vpop.f32.mrb[0].mxu0
      %v1406 = vadd.f32 %v1190, %v1405
      %v1407 = vpop.f32.mrb[0].mxu0
      %1408 = vmatprep.mubr.f32.mxu0 %v1239
      %1409 = vmatmul.mubr.f32.gmra.mrb[0].mxu0 %v789
      %v1410 = vpop.f32.mrb[0].mxu0
      %v1411 = vadd.f32 %v1195, %v1410
      %v1412 = vpop.f32.mrb[0].mxu0
      %1413 = vdwg.mxu0
      %v1414 = vld [vmem:[#allocation2] sm:$0xfc]
      %v1415 = vld [vmem:[#allocation2 + $0x8] sm:$0xfc]
      %v1416 = vld [vmem:[#allocation2 + $0x150] sm:$0x3]
      %v1417 = vld [vmem:[#allocation2 + $0x158] sm:$0x3]
      %s1418 = scalar_lea.vmem %s4, 272
      %v1419 = vld [vmem:[%s1418] sm:$0xff]
      %v1420 = vld [vmem:[%s1418 + $0x8] sm:$0xff]
      %v1421 = vld [vmem:[%s1418 + $0x10] sm:$0xff]
      %v1422 = vld [vmem:[%s1418 + $0x18] sm:$0xff]
      %v1423 = vld [vmem:[%s1418 + $0x20] sm:$0xff]
      %v1424 = vld [vmem:[%s1418 + $0x28] sm:$0xff]
      %v1425 = vld [vmem:[%s1418 + $0x30] sm:$0xff]
      %v1426 = vld [vmem:[%s1418 + $0x38] sm:$0xff]
      %v1427 = vld [vmem:[%s1418 + $0x40] sm:$0xff]
      %v1428 = vld [vmem:[%s1418 + $0x48] sm:$0xff]
      %v1429 = vld [vmem:[%s1418 + $0x50] sm:$0xff]
      %v1430 = vld [vmem:[%s1418 + $0x58] sm:$0xff]
      %v1431 = vld [vmem:[%s1418 + $0x60] sm:$0xff]
      %v1432 = vld [vmem:[%s1418 + $0x68] sm:$0xff]
      %v1433 = vld [vmem:[%s1418 + $0x70] sm:$0xff]
      %v1434 = vld [vmem:[%s1418 + $0x78] sm:$0xff]
      %v1435 = vld [vmem:[%s1418 + $0x80] sm:$0x3]
      %v1440 = vrot.slane %v1414, 2
      %v1441 = vrot.slane %v751, 2
      %v1442 = vsel %vm416, %v1440, %v1441
      %v1443 = vrot.slane %v1415, 2
      %v1444 = vrot.slane %v752, 2
      %v1445 = vsel %vm416, %v1443, %v1444
      %v1446 = vrot.slane %v753, 2
      %v1447 = vsel %vm416, %v1441, %v1446
      %v1448 = vrot.slane %v754, 2
      %v1449 = vsel %vm416, %v1444, %v1448
      %v1450 = vrot.slane %v755, 2
      %v1451 = vsel %vm416, %v1446, %v1450
      %v1452 = vrot.slane %v756, 2
      %v1453 = vsel %vm416, %v1448, %v1452
      %v1454 = vrot.slane %v757, 2
      %v1455 = vsel %vm416, %v1450, %v1454
      %v1456 = vrot.slane %v758, 2
      %v1457 = vsel %vm416, %v1452, %v1456
      %v1458 = vrot.slane %v759, 2
      %v1459 = vsel %vm416, %v1454, %v1458
      %v1460 = vrot.slane %v760, 2
      %v1461 = vsel %vm416, %v1456, %v1460
      %v1462 = vrot.slane %v761, 2
      %v1463 = vsel %vm416, %v1458, %v1462
      %v1464 = vrot.slane %v762, 2
      %v1465 = vsel %vm416, %v1460, %v1464
      %v1466 = vrot.slane %v763, 2
      %v1467 = vsel %vm416, %v1462, %v1466
      %v1468 = vrot.slane %v764, 2
      %v1469 = vsel %vm416, %v1464, %v1468
      %v1470 = vrot.slane %v765, 2
      %v1471 = vsel %vm416, %v1466, %v1470
      %v1472 = vrot.slane %v766, 2
      %v1473 = vsel %vm416, %v1468, %v1472
      %v1474 = vrot.slane %v767, 2
      %v1475 = vsel %vm416, %v1470, %v1474
      %v1476 = vrot.slane %v768, 2
      %v1477 = vsel %vm416, %v1472, %v1476
      %v1478 = vrot.slane %v769, 2
      %v1479 = vsel %vm416, %v1474, %v1478
      %v1480 = vrot.slane %v770, 2
      %v1481 = vsel %vm416, %v1476, %v1480
      %v1482 = vrot.slane %v771, 2
      %v1483 = vsel %vm416, %v1478, %v1482
      %v1484 = vrot.slane %v772, 2
      %v1485 = vsel %vm416, %v1480, %v1484
      %v1486 = vrot.slane %v773, 2
      %v1487 = vsel %vm416, %v1482, %v1486
      %v1488 = vrot.slane %v774, 2
      %v1489 = vsel %vm416, %v1484, %v1488
      %v1490 = vrot.slane %v775, 2
      %v1491 = vsel %vm416, %v1486, %v1490
      %v1492 = vrot.slane %v776, 2
      %v1493 = vsel %vm416, %v1488, %v1492
      %v1494 = vrot.slane %v777, 2
      %v1495 = vsel %vm416, %v1490, %v1494
      %v1496 = vrot.slane %v778, 2
      %v1497 = vsel %vm416, %v1492, %v1496
      %v1498 = vrot.slane %v779, 2
      %v1499 = vsel %vm416, %v1494, %v1498
      %v1500 = vrot.slane %v780, 2
      %v1501 = vsel %vm416, %v1496, %v1500
      %v1502 = vrot.slane %v781, 2
      %v1503 = vsel %vm416, %v1498, %v1502
      %v1504 = vrot.slane %v782, 2
      %v1505 = vsel %vm416, %v1500, %v1504
      %v1506 = vrot.slane %v783, 2
      %v1507 = vsel %vm416, %v1502, %v1506
      %v1508 = vrot.slane %v784, 2
      %v1509 = vsel %vm416, %v1504, %v1508
      %v1510 = vrot.slane %v785, 2
      %v1511 = vsel %vm416, %v1506, %v1510
      %v1512 = vrot.slane %v786, 2
      %v1513 = vsel %vm416, %v1508, %v1512
      %v1514 = vrot.slane %v787, 2
      %v1515 = vsel %vm416, %v1510, %v1514
      %v1516 = vrot.slane %v788, 2
      %v1517 = vsel %vm416, %v1512, %v1516
      %v1518 = vrot.slane %v789, 2
      %v1519 = vsel %vm416, %v1514, %v1518
      %v1520 = vrot.slane %v790, 2
      %v1521 = vsel %vm416, %v1516, %v1520
      %v1522 = vrot.slane %v1416, 2
      %v1523 = vsel %vm416, %v1518, %v1522
      %v1524 = vrot.slane %v1417, 2
      %v1525 = vsel %vm416, %v1520, %v1524
      %v1547 = vsel %vm699, %v1445, 0
      %v1549 = vsel %vm699, %v1449, 0
      %v1551 = vsel %vm699, %v1453, 0
      %v1553 = vsel %vm699, %v1457, 0
      %v1555 = vsel %vm699, %v1461, 0
      %v1557 = vsel %vm699, %v1465, 0
      %v1559 = vsel %vm699, %v1469, 0
      %v1561 = vsel %vm699, %v1473, 0
      %v1563 = vsel %vm699, %v1477, 0
      %v1565 = vsel %vm699, %v1481, 0
      %v1567 = vsel %vm699, %v1485, 0
      %v1569 = vsel %vm699, %v1489, 0
      %v1571 = vsel %vm699, %v1493, 0
      %v1573 = vsel %vm699, %v1497, 0
      %v1575 = vsel %vm699, %v1501, 0
      %v1577 = vsel %vm699, %v1505, 0
      %v1579 = vsel %vm699, %v1509, 0
      %v1581 = vsel %vm699, %v1513, 0
      %v1583 = vsel %vm699, %v1517, 0
      %v1585 = vsel %vm699, %v1521, 0
      %v1587 = vsel %vm699, %v1525, 0
      %v1590 = vsel %vm1024, %v1435, 0
      %1592 = vmatprep.subr.mxu0 0.0
      %1593 = vmatpush1.msra.mxu0 %v1419
      %1594 = vmatprep.subr.mxu0 0.0
      %1595 = vmatpush1.msra.mxu0 %v1420
      %1596 = vmatprep.subr.mxu0 0.0
      %1597 = vmatpush1.msra.mxu0 %v1421
      %1598 = vmatprep.subr.mxu0 0.0
      %1599 = vmatpush1.msra.mxu0 %v1422
      %1600 = vmatprep.subr.mxu0 0.0
      %1601 = vmatpush1.msra.mxu0 %v1423
      %1602 = vmatprep.subr.mxu0 0.0
      %1603 = vmatpush1.msra.mxu0 %v1424
      %1604 = vmatprep.subr.mxu0 0.0
      %1605 = vmatpush1.msra.mxu0 %v1425
      %1606 = vmatprep.subr.mxu0 0.0
      %1607 = vmatpush1.msra.mxu0 %v1426
      %1608 = vmatprep.subr.mxu0 0.0
      %1609 = vmatpush1.msra.mxu0 %v1427
      %1610 = vmatprep.subr.mxu0 0.0
      %1611 = vmatpush1.msra.mxu0 %v1428
      %1612 = vmatprep.subr.mxu0 0.0
      %1613 = vmatpush1.msra.mxu0 %v1429
      %1614 = vmatprep.subr.mxu0 0.0
      %1615 = vmatpush1.msra.mxu0 %v1430
      %1616 = vmatprep.subr.mxu0 0.0
      %1617 = vmatpush1.msra.mxu0 %v1431
      %1618 = vmatprep.subr.mxu0 0.0
      %1619 = vmatpush1.msra.mxu0 %v1432
      %1620 = vmatprep.subr.mxu0 0.0
      %1621 = vmatpush1.msra.mxu0 %v1433
      %1622 = vmatprep.subr.mxu0 0.0
      %1623 = vmatpush1.msra.mxu0 %v1434
      %1624 = vmatprep.subr.mxu0 0.0
      %1625 = vmatpush1.msra.mxu0 %v1590
      %1626 = vmatprep.subr.mxu0 0.0
      %1627 = vmatpush1.msra.mxu0 0.0
      %1628 = vmatprep.subr.mxu0 0.0
      %1629 = vmatpush1.msra.mxu0 0.0
      %1630 = vmatprep.subr.mxu0 0.0
      %1631 = vmatpush1.msra.mxu0 0.0
      %1632 = vmatprep.subr.mxu0 0.0
      %1633 = vmatpush1.msra.mxu0 0.0
      %1634 = vmatprep.subr.mxu0 0.0
      %1635 = vmatpush1.msra.mxu0 0.0
      %1636 = vmatprep.subr.mxu0 0.0
      %1637 = vmatpush1.msra.mxu0 0.0
      %1638 = vmatprep.subr.mxu0 0.0
      %1639 = vmatpush1.msra.mxu0 0.0
      %1640 = vmatprep.subr.mxu0 0.0
      %1641 = vmatpush1.msra.mxu0 0.0
      %1642 = vmatprep.subr.mxu0 0.0
      %1643 = vmatpush1.msra.mxu0 0.0
      %1644 = vmatprep.subr.mxu0 0.0
      %1645 = vmatpush1.msra.mxu0 0.0
      %1646 = vmatprep.subr.mxu0 0.0
      %1647 = vmatpush1.msra.mxu0 0.0
      %1648 = vmatprep.subr.mxu0 0.0
      %1649 = vmatpush1.msra.mxu0 0.0
      %1650 = vmatprep.subr.mxu0 0.0
      %1651 = vmatpush1.msra.mxu0 0.0
      %1652 = vmatprep.subr.mxu0 0.0
      %1653 = vmatpush1.msra.mxu0 0.0
      %1654 = vmatprep.subr.mxu0 0.0
      %1655 = vmatpush1.msra.mxu0 0.0
      %1656 = vmatprep.mubr.f32.mxu0 %v1547
      %1657 = vmatmul.mubr.f32.gmra.mrb[0].mxu0 %v1442
      %v1658 = vpop.f32.mrb[0].mxu0
      %v1659 = vadd.f32 0.0, %v1658
      %v1660 = vpop.f32.mrb[0].mxu0
      %1661 = vmatprep.mubr.f32.mxu0 %v1549
      %1662 = vmatmul.mubr.f32.gmra.mrb[0].mxu0 %v1447
      %v1663 = vpop.f32.mrb[0].mxu0
      %v1664 = vadd.f32 0.0, %v1663
      %v1665 = vpop.f32.mrb[0].mxu0
      %1666 = vmatprep.mubr.f32.mxu0 %v1551
      %1667 = vmatmul.mubr.f32.gmra.mrb[0].mxu0 %v1451
      %v1668 = vpop.f32.mrb[0].mxu0
      %v1669 = vadd.f32 0.0, %v1668
      %v1670 = vpop.f32.mrb[0].mxu0
      %1671 = vmatprep.mubr.f32.mxu0 %v1553
      %1672 = vmatmul.mubr.f32.gmra.mrb[0].mxu0 %v1455
      %v1673 = vpop.f32.mrb[0].mxu0
      %v1674 = vadd.f32 0.0, %v1673
      %v1675 = vpop.f32.mrb[0].mxu0
      %1676 = vmatprep.mubr.f32.mxu0 %v1555
      %1677 = vmatmul.mubr.f32.gmra.mrb[0].mxu0 %v1459
      %v1678 = vpop.f32.mrb[0].mxu0
      %v1679 = vadd.f32 0.0, %v1678
      %v1680 = vpop.f32.mrb[0].mxu0
      %1681 = vmatprep.mubr.f32.mxu0 %v1557
      %1682 = vmatmul.mubr.f32.gmra.mrb[0].mxu0 %v1463
      %v1683 = vpop.f32.mrb[0].mxu0
      %v1684 = vadd.f32 0.0, %v1683
      %v1685 = vpop.f32.mrb[0].mxu0
      %1686 = vmatprep.mubr.f32.mxu0 %v1559
      %1687 = vmatmul.mubr.f32.gmra.mrb[0].mxu0 %v1467
      %v1688 = vpop.f32.mrb[0].mxu0
      %v1689 = vadd.f32 0.0, %v1688
      %v1690 = vpop.f32.mrb[0].mxu0
      %1691 = vmatprep.mubr.f32.mxu0 %v1561
      %1692 = vmatmul.mubr.f32.gmra.mrb[0].mxu0 %v1471
      %v1693 = vpop.f32.mrb[0].mxu0
      %v1694 = vadd.f32 0.0, %v1693
      %v1695 = vpop.f32.mrb[0].mxu0
      %1696 = vmatprep.mubr.f32.mxu0 %v1563
      %1697 = vmatmul.mubr.f32.gmra.mrb[0].mxu0 %v1475
      %v1698 = vpop.f32.mrb[0].mxu0
      %v1699 = vadd.f32 0.0, %v1698
      %v1700 = vpop.f32.mrb[0].mxu0
      %1701 = vmatprep.mubr.f32.mxu0 %v1565
      %1702 = vmatmul.mubr.f32.gmra.mrb[0].mxu0 %v1479
      %v1703 = vpop.f32.mrb[0].mxu0
      %v1704 = vadd.f32 0.0, %v1703
      %v1705 = vpop.f32.mrb[0].mxu0
      %1706 = vmatprep.mubr.f32.mxu0 %v1567
      %1707 = vmatmul.mubr.f32.gmra.mrb[0].mxu0 %v1483
      %v1708 = vpop.f32.mrb[0].mxu0
      %v1709 = vadd.f32 0.0, %v1708
      %v1710 = vpop.f32.mrb[0].mxu0
      %1711 = vmatprep.mubr.f32.mxu0 %v1569
      %1712 = vmatmul.mubr.f32.gmra.mrb[0].mxu0 %v1487
      %v1713 = vpop.f32.mrb[0].mxu0
      %v1714 = vadd.f32 0.0, %v1713
      %v1715 = vpop.f32.mrb[0].mxu0
      %1716 = vmatprep.mubr.f32.mxu0 %v1571
      %1717 = vmatmul.mubr.f32.gmra.mrb[0].mxu0 %v1491
      %v1718 = vpop.f32.mrb[0].mxu0
      %v1719 = vadd.f32 0.0, %v1718
      %v1720 = vpop.f32.mrb[0].mxu0
      %1721 = vmatprep.mubr.f32.mxu0 %v1573
      %1722 = vmatmul.mubr.f32.gmra.mrb[0].mxu0 %v1495
      %v1723 = vpop.f32.mrb[0].mxu0
      %v1724 = vadd.f32 0.0, %v1723
      %v1725 = vpop.f32.mrb[0].mxu0
      %1726 = vmatprep.mubr.f32.mxu0 %v1575
      %1727 = vmatmul.mubr.f32.gmra.mrb[0].mxu0 %v1499
      %v1728 = vpop.f32.mrb[0].mxu0
      %v1729 = vadd.f32 0.0, %v1728
      %v1730 = vpop.f32.mrb[0].mxu0
      %1731 = vmatprep.mubr.f32.mxu0 %v1577
      %1732 = vmatmul.mubr.f32.gmra.mrb[0].mxu0 %v1503
      %v1733 = vpop.f32.mrb[0].mxu0
      %v1734 = vadd.f32 0.0, %v1733
      %v1735 = vpop.f32.mrb[0].mxu0
      %1736 = vmatprep.mubr.f32.mxu0 %v1579
      %1737 = vmatmul.mubr.f32.gmra.mrb[0].mxu0 %v1507
      %v1738 = vpop.f32.mrb[0].mxu0
      %v1739 = vadd.f32 0.0, %v1738
      %v1740 = vpop.f32.mrb[0].mxu0
      %1741 = vmatprep.mubr.f32.mxu0 %v1581
      %1742 = vmatmul.mubr.f32.gmra.mrb[0].mxu0 %v1511
      %v1743 = vpop.f32.mrb[0].mxu0
      %v1744 = vadd.f32 0.0, %v1743
      %v1745 = vpop.f32.mrb[0].mxu0
      %1746 = vmatprep.mubr.f32.mxu0 %v1583
      %1747 = vmatmul.mubr.f32.gmra.mrb[0].mxu0 %v1515
      %v1748 = vpop.f32.mrb[0].mxu0
      %v1749 = vadd.f32 0.0, %v1748
      %v1750 = vpop.f32.mrb[0].mxu0
      %1751 = vmatprep.mubr.f32.mxu0 %v1585
      %1752 = vmatmul.mubr.f32.gmra.mrb[0].mxu0 %v1519
      %v1753 = vpop.f32.mrb[0].mxu0
      %v1754 = vadd.f32 0.0, %v1753
      %v1755 = vpop.f32.mrb[0].mxu0
      %1756 = vmatprep.mubr.f32.mxu0 %v1587
      %1757 = vmatmul.mubr.f32.gmra.mrb[0].mxu0 %v1523
      %v1758 = vpop.f32.mrb[0].mxu0
      %v1759 = vadd.f32 0.0, %v1758
      %v1760 = vpop.f32.mrb[0].mxu0
      %1761 = vdwg.mxu0
      %v1762 = vadd.f32 %v1311, %v1659
      %v1763 = vadd.f32 %v1316, %v1664
      %v1764 = vadd.f32 %v1321, %v1669
      %v1765 = vadd.f32 %v1326, %v1674
      %v1766 = vadd.f32 %v1331, %v1679
      %v1767 = vadd.f32 %v1336, %v1684
      %v1768 = vadd.f32 %v1341, %v1689
      %v1769 = vadd.f32 %v1346, %v1694
      %v1770 = vadd.f32 %v1351, %v1699
      %v1771 = vadd.f32 %v1356, %v1704
      %v1772 = vadd.f32 %v1361, %v1709
      %v1773 = vadd.f32 %v1366, %v1714
      %v1774 = vadd.f32 %v1371, %v1719
      %v1775 = vadd.f32 %v1376, %v1724
      %v1776 = vadd.f32 %v1381, %v1729
      %v1777 = vadd.f32 %v1386, %v1734
      %v1778 = vadd.f32 %v1391, %v1739
      %v1779 = vadd.f32 %v1396, %v1744
      %v1780 = vadd.f32 %v1401, %v1749
      %v1781 = vadd.f32 %v1406, %v1754
      %v1782 = vadd.f32 %v1411, %v1759
      %v1783 = vld [vmem:[#allocation2 + $0x10] sm:$0xc0]
      %v1784 = vld [vmem:[#allocation2 + $0x18] sm:$0xc0]
      %v1785 = vld [vmem:[#allocation2 + $0x20] sm:$0xff]
      %v1786 = vld [vmem:[#allocation2 + $0x28] sm:$0xff]
      %v1787 = vld [vmem:[#allocation2 + $0x30] sm:$0xff]
      %v1788 = vld [vmem:[#allocation2 + $0x38] sm:$0xff]
      %v1789 = vld [vmem:[#allocation2 + $0x40] sm:$0xff]
      %v1790 = vld [vmem:[#allocation2 + $0x48] sm:$0xff]
      %v1791 = vld [vmem:[#allocation2 + $0x50] sm:$0xff]
      %v1792 = vld [vmem:[#allocation2 + $0x58] sm:$0xff]
      %v1793 = vld [vmem:[#allocation2 + $0x60] sm:$0xff]
      %v1794 = vld [vmem:[#allocation2 + $0x68] sm:$0xff]
      %v1795 = vld [vmem:[#allocation2 + $0x70] sm:$0xff]
      %v1796 = vld [vmem:[#allocation2 + $0x78] sm:$0xff]
      %v1797 = vld [vmem:[#allocation2 + $0x80] sm:$0xff]
      %v1798 = vld [vmem:[#allocation2 + $0x88] sm:$0xff]
      %v1799 = vld [vmem:[#allocation2 + $0x90] sm:$0xff]
      %v1800 = vld [vmem:[#allocation2 + $0x98] sm:$0xff]
      %v1801 = vld [vmem:[#allocation2 + $0xa0] sm:$0xff]
      %v1802 = vld [vmem:[#allocation2 + $0xa8] sm:$0xff]
      %v1803 = vld [vmem:[#allocation2 + $0xb0] sm:$0xff]
      %v1804 = vld [vmem:[#allocation2 + $0xb8] sm:$0xff]
      %v1805 = vld [vmem:[#allocation2 + $0xc0] sm:$0xff]
      %v1806 = vld [vmem:[#allocation2 + $0xc8] sm:$0xff]
      %v1807 = vld [vmem:[#allocation2 + $0xd0] sm:$0xff]
      %v1808 = vld [vmem:[#allocation2 + $0xd8] sm:$0xff]
      %v1809 = vld [vmem:[#allocation2 + $0xe0] sm:$0xff]
      %v1810 = vld [vmem:[#allocation2 + $0xe8] sm:$0xff]
      %v1811 = vld [vmem:[#allocation2 + $0xf0] sm:$0xff]
      %v1812 = vld [vmem:[#allocation2 + $0xf8] sm:$0xff]
      %v1813 = vld [vmem:[#allocation2 + $0x100] sm:$0xff]
      %v1814 = vld [vmem:[#allocation2 + $0x108] sm:$0xff]
      %v1815 = vld [vmem:[#allocation2 + $0x110] sm:$0xff]
      %v1816 = vld [vmem:[#allocation2 + $0x118] sm:$0xff]
      %v1817 = vld [vmem:[#allocation2 + $0x120] sm:$0xff]
      %v1818 = vld [vmem:[#allocation2 + $0x128] sm:$0xff]
      %v1819 = vld [vmem:[#allocation2 + $0x130] sm:$0xff]
      %v1820 = vld [vmem:[#allocation2 + $0x138] sm:$0xff]
      %v1821 = vld [vmem:[#allocation2 + $0x140] sm:$0xff]
      %v1822 = vld [vmem:[#allocation2 + $0x148] sm:$0xff]
      %v1823 = vld [vmem:[#allocation2 + $0x150] sm:$0xff]
      %v1824 = vld [vmem:[#allocation2 + $0x158] sm:$0xff]
      %v1825 = vld [vmem:[#allocation2 + $0x160] sm:$0x3f]
      %v1826 = vld [vmem:[#allocation2 + $0x168] sm:$0x3f]
      %s1827 = scalar_lea.vmem %s4, 408
      %v1828 = vld [vmem:[%s1827] sm:$0xff]
      %v1829 = vld [vmem:[%s1827 + $0x8] sm:$0xff]
      %v1830 = vld [vmem:[%s1827 + $0x10] sm:$0xff]
      %v1831 = vld [vmem:[%s1827 + $0x18] sm:$0xff]
      %v1832 = vld [vmem:[%s1827 + $0x20] sm:$0xff]
      %v1833 = vld [vmem:[%s1827 + $0x28] sm:$0xff]
      %v1834 = vld [vmem:[%s1827 + $0x30] sm:$0xff]
      %v1835 = vld [vmem:[%s1827 + $0x38] sm:$0xff]
      %v1836 = vld [vmem:[%s1827 + $0x40] sm:$0xff]
      %v1837 = vld [vmem:[%s1827 + $0x48] sm:$0xff]
      %v1838 = vld [vmem:[%s1827 + $0x50] sm:$0xff]
      %v1839 = vld [vmem:[%s1827 + $0x58] sm:$0xff]
      %v1840 = vld [vmem:[%s1827 + $0x60] sm:$0xff]
      %v1841 = vld [vmem:[%s1827 + $0x68] sm:$0xff]
      %v1842 = vld [vmem:[%s1827 + $0x70] sm:$0xff]
      %v1843 = vld [vmem:[%s1827 + $0x78] sm:$0xff]
      %v1844 = vld [vmem:[%s1827 + $0x80] sm:$0x3]
      %v1889 = vrot.slane %v1783, 6
      %v1890 = vrot.slane %v1785, 6
      %v1891 = vsel %vm1024, %v1889, %v1890
      %v1892 = vrot.slane %v1784, 6
      %v1893 = vrot.slane %v1786, 6
      %v1894 = vsel %vm1024, %v1892, %v1893
      %v1895 = vrot.slane %v1787, 6
      %v1896 = vsel %vm1024, %v1890, %v1895
      %v1897 = vrot.slane %v1788, 6
      %v1898 = vsel %vm1024, %v1893, %v1897
      %v1899 = vrot.slane %v1789, 6
      %v1900 = vsel %vm1024, %v1895, %v1899
      %v1901 = vrot.slane %v1790, 6
      %v1902 = vsel %vm1024, %v1897, %v1901
      %v1903 = vrot.slane %v1791, 6
      %v1904 = vsel %vm1024, %v1899, %v1903
      %v1905 = vrot.slane %v1792, 6
      %v1906 = vsel %vm1024, %v1901, %v1905
      %v1907 = vrot.slane %v1793, 6
      %v1908 = vsel %vm1024, %v1903, %v1907
      %v1909 = vrot.slane %v1794, 6
      %v1910 = vsel %vm1024, %v1905, %v1909
      %v1911 = vrot.slane %v1795, 6
      %v1912 = vsel %vm1024, %v1907, %v1911
      %v1913 = vrot.slane %v1796, 6
      %v1914 = vsel %vm1024, %v1909, %v1913
      %v1915 = vrot.slane %v1797, 6
      %v1916 = vsel %vm1024, %v1911, %v1915
      %v1917 = vrot.slane %v1798, 6
      %v1918 = vsel %vm1024, %v1913, %v1917
      %v1919 = vrot.slane %v1799, 6
      %v1920 = vsel %vm1024, %v1915, %v1919
      %v1921 = vrot.slane %v1800, 6
      %v1922 = vsel %vm1024, %v1917, %v1921
      %v1923 = vrot.slane %v1801, 6
      %v1924 = vsel %vm1024, %v1919, %v1923
      %v1925 = vrot.slane %v1802, 6
      %v1926 = vsel %vm1024, %v1921, %v1925
      %v1927 = vrot.slane %v1803, 6
      %v1928 = vsel %vm1024, %v1923, %v1927
      %v1929 = vrot.slane %v1804, 6
      %v1930 = vsel %vm1024, %v1925, %v1929
      %v1931 = vrot.slane %v1805, 6
      %v1932 = vsel %vm1024, %v1927, %v1931
      %v1933 = vrot.slane %v1806, 6
      %v1934 = vsel %vm1024, %v1929, %v1933
      %v1935 = vrot.slane %v1807, 6
      %v1936 = vsel %vm1024, %v1931, %v1935
      %v1937 = vrot.slane %v1808, 6
      %v1938 = vsel %vm1024, %v1933, %v1937
      %v1939 = vrot.slane %v1809, 6
      %v1940 = vsel %vm1024, %v1935, %v1939
      %v1941 = vrot.slane %v1810, 6
      %v1942 = vsel %vm1024, %v1937, %v1941
      %v1943 = vrot.slane %v1811, 6
      %v1944 = vsel %vm1024, %v1939, %v1943
      %v1945 = vrot.slane %v1812, 6
      %v1946 = vsel %vm1024, %v1941, %v1945
      %v1947 = vrot.slane %v1813, 6
      %v1948 = vsel %vm1024, %v1943, %v1947
      %v1949 = vrot.slane %v1814, 6
      %v1950 = vsel %vm1024, %v1945, %v1949
      %v1951 = vrot.slane %v1815, 6
      %v1952 = vsel %vm1024, %v1947, %v1951
      %v1953 = vrot.slane %v1816, 6
      %v1954 = vsel %vm1024, %v1949, %v1953
      %v1955 = vrot.slane %v1817, 6
      %v1956 = vsel %vm1024, %v1951, %v1955
      %v1957 = vrot.slane %v1818, 6
      %v1958 = vsel %vm1024, %v1953, %v1957
      %v1959 = vrot.slane %v1819, 6
      %v1960 = vsel %vm1024, %v1955, %v1959
      %v1961 = vrot.slane %v1820, 6
      %v1962 = vsel %vm1024, %v1957, %v1961
      %v1963 = vrot.slane %v1821, 6
      %v1964 = vsel %vm1024, %v1959, %v1963
      %v1965 = vrot.slane %v1822, 6
      %v1966 = vsel %vm1024, %v1961, %v1965
      %v1967 = vrot.slane %v1823, 6
      %v1968 = vsel %vm1024, %v1963, %v1967
      %v1969 = vrot.slane %v1824, 6
      %v1970 = vsel %vm1024, %v1965, %v1969
      %v1971 = vrot.slane %v1825, 6
      %v1972 = vsel %vm1024, %v1967, %v1971
      %v1973 = vrot.slane %v1826, 6
      %v1974 = vsel %vm1024, %v1969, %v1973
      %v1996 = vsel %vm699, %v1894, 0
      %v1998 = vsel %vm699, %v1898, 0
      %v2000 = vsel %vm699, %v1902, 0
      %v2002 = vsel %vm699, %v1906, 0
      %v2004 = vsel %vm699, %v1910, 0
      %v2006 = vsel %vm699, %v1914, 0
      %v2008 = vsel %vm699, %v1918, 0
      %v2010 = vsel %vm699, %v1922, 0
      %v2012 = vsel %vm699, %v1926, 0
      %v2014 = vsel %vm699, %v1930, 0
      %v2016 = vsel %vm699, %v1934, 0
      %v2018 = vsel %vm699, %v1938, 0
      %v2020 = vsel %vm699, %v1942, 0
      %v2022 = vsel %vm699, %v1946, 0
      %v2024 = vsel %vm699, %v1950, 0
      %v2026 = vsel %vm699, %v1954, 0
      %v2028 = vsel %vm699, %v1958, 0
      %v2030 = vsel %vm699, %v1962, 0
      %v2032 = vsel %vm699, %v1966, 0
      %v2034 = vsel %vm699, %v1970, 0
      %v2036 = vsel %vm699, %v1974, 0
      %v2039 = vsel %vm1024, %v1844, 0
      %2041 = vmatprep.subr.mxu0 0.0
      %2042 = vmatpush1.msra.mxu0 %v1828
      %2043 = vmatprep.subr.mxu0 0.0
      %2044 = vmatpush1.msra.mxu0 %v1829
      %2045 = vmatprep.subr.mxu0 0.0
      %2046 = vmatpush1.msra.mxu0 %v1830
      %2047 = vmatprep.subr.mxu0 0.0
      %2048 = vmatpush1.msra.mxu0 %v1831
      %2049 = vmatprep.subr.mxu0 0.0
      %2050 = vmatpush1.msra.mxu0 %v1832
      %2051 = vmatprep.subr.mxu0 0.0
      %2052 = vmatpush1.msra.mxu0 %v1833
      %2053 = vmatprep.subr.mxu0 0.0
      %2054 = vmatpush1.msra.mxu0 %v1834
      %2055 = vmatprep.subr.mxu0 0.0
      %2056 = vmatpush1.msra.mxu0 %v1835
      %2057 = vmatprep.subr.mxu0 0.0
      %2058 = vmatpush1.msra.mxu0 %v1836
      %2059 = vmatprep.subr.mxu0 0.0
      %2060 = vmatpush1.msra.mxu0 %v1837
      %2061 = vmatprep.subr.mxu0 0.0
      %2062 = vmatpush1.msra.mxu0 %v1838
      %2063 = vmatprep.subr.mxu0 0.0
      %2064 = vmatpush1.msra.mxu0 %v1839
      %2065 = vmatprep.subr.mxu0 0.0
      %2066 = vmatpush1.msra.mxu0 %v1840
      %2067 = vmatprep.subr.mxu0 0.0
      %2068 = vmatpush1.msra.mxu0 %v1841
      %2069 = vmatprep.subr.mxu0 0.0
      %2070 = vmatpush1.msra.mxu0 %v1842
      %2071 = vmatprep.subr.mxu0 0.0
      %2072 = vmatpush1.msra.mxu0 %v1843
      %2073 = vmatprep.subr.mxu0 0.0
      %2074 = vmatpush1.msra.mxu0 %v2039
      %2075 = vmatprep.subr.mxu0 0.0
      %2076 = vmatpush1.msra.mxu0 0.0
      %2077 = vmatprep.subr.mxu0 0.0
      %2078 = vmatpush1.msra.mxu0 0.0
      %2079 = vmatprep.subr.mxu0 0.0
      %2080 = vmatpush1.msra.mxu0 0.0
      %2081 = vmatprep.subr.mxu0 0.0
      %2082 = vmatpush1.msra.mxu0 0.0
      %2083 = vmatprep.subr.mxu0 0.0
      %2084 = vmatpush1.msra.mxu0 0.0
      %2085 = vmatprep.subr.mxu0 0.0
      %2086 = vmatpush1.msra.mxu0 0.0
      %2087 = vmatprep.subr.mxu0 0.0
      %2088 = vmatpush1.msra.mxu0 0.0
      %2089 = vmatprep.subr.mxu0 0.0
      %2090 = vmatpush1.msra.mxu0 0.0
      %2091 = vmatprep.subr.mxu0 0.0
      %2092 = vmatpush1.msra.mxu0 0.0
      %2093 = vmatprep.subr.mxu0 0.0
      %2094 = vmatpush1.msra.mxu0 0.0
      %2095 = vmatprep.subr.mxu0 0.0
      %2096 = vmatpush1.msra.mxu0 0.0
      %2097 = vmatprep.subr.mxu0 0.0
      %2098 = vmatpush1.msra.mxu0 0.0
      %2099 = vmatprep.subr.mxu0 0.0
      %2100 = vmatpush1.msra.mxu0 0.0
      %2101 = vmatprep.subr.mxu0 0.0
      %2102 = vmatpush1.msra.mxu0 0.0
      %2103 = vmatprep.subr.mxu0 0.0
      %2104 = vmatpush1.msra.mxu0 0.0
      %2105 = vmatprep.mubr.f32.mxu0 %v1996
      %2106 = vmatmul.mubr.f32.gmra.mrb[0].mxu0 %v1891
      %v2107 = vpop.f32.mrb[0].mxu0
      %v2108 = vadd.f32 0.0, %v2107
      %v2109 = vpop.f32.mrb[0].mxu0
      %2110 = vmatprep.mubr.f32.mxu0 %v1998
      %2111 = vmatmul.mubr.f32.gmra.mrb[0].mxu0 %v1896
      %v2112 = vpop.f32.mrb[0].mxu0
      %v2113 = vadd.f32 0.0, %v2112
      %v2114 = vpop.f32.mrb[0].mxu0
      %2115 = vmatprep.mubr.f32.mxu0 %v2000
      %2116 = vmatmul.mubr.f32.gmra.mrb[0].mxu0 %v1900
      %v2117 = vpop.f32.mrb[0].mxu0
      %v2118 = vadd.f32 0.0, %v2117
      %v2119 = vpop.f32.mrb[0].mxu0
      %2120 = vmatprep.mubr.f32.mxu0 %v2002
      %2121 = vmatmul.mubr.f32.gmra.mrb[0].mxu0 %v1904
      %v2122 = vpop.f32.mrb[0].mxu0
      %v2123 = vadd.f32 0.0, %v2122
      %v2124 = vpop.f32.mrb[0].mxu0
      %2125 = vmatprep.mubr.f32.mxu0 %v2004
      %2126 = vmatmul.mubr.f32.gmra.mrb[0].mxu0 %v1908
      %v2127 = vpop.f32.mrb[0].mxu0
      %v2128 = vadd.f32 0.0, %v2127
      %v2129 = vpop.f32.mrb[0].mxu0
      %2130 = vmatprep.mubr.f32.mxu0 %v2006
      %2131 = vmatmul.mubr.f32.gmra.mrb[0].mxu0 %v1912
      %v2132 = vpop.f32.mrb[0].mxu0
      %v2133 = vadd.f32 0.0, %v2132
      %v2134 = vpop.f32.mrb[0].mxu0
      %2135 = vmatprep.mubr.f32.mxu0 %v2008
      %2136 = vmatmul.mubr.f32.gmra.mrb[0].mxu0 %v1916
      %v2137 = vpop.f32.mrb[0].mxu0
      %v2138 = vadd.f32 0.0, %v2137
      %v2139 = vpop.f32.mrb[0].mxu0
      %2140 = vmatprep.mubr.f32.mxu0 %v2010
      %2141 = vmatmul.mubr.f32.gmra.mrb[0].mxu0 %v1920
      %v2142 = vpop.f32.mrb[0].mxu0
      %v2143 = vadd.f32 0.0, %v2142
      %v2144 = vpop.f32.mrb[0].mxu0
      %2145 = vmatprep.mubr.f32.mxu0 %v2012
      %2146 = vmatmul.mubr.f32.gmra.mrb[0].mxu0 %v1924
      %v2147 = vpop.f32.mrb[0].mxu0
      %v2148 = vadd.f32 0.0, %v2147
      %v2149 = vpop.f32.mrb[0].mxu0
      %2150 = vmatprep.mubr.f32.mxu0 %v2014
      %2151 = vmatmul.mubr.f32.gmra.mrb[0].mxu0 %v1928
      %v2152 = vpop.f32.mrb[0].mxu0
      %v2153 = vadd.f32 0.0, %v2152
      %v2154 = vpop.f32.mrb[0].mxu0
      %2155 = vmatprep.mubr.f32.mxu0 %v2016
      %2156 = vmatmul.mubr.f32.gmra.mrb[0].mxu0 %v1932
      %v2157 = vpop.f32.mrb[0].mxu0
      %v2158 = vadd.f32 0.0, %v2157
      %v2159 = vpop.f32.mrb[0].mxu0
      %2160 = vmatprep.mubr.f32.mxu0 %v2018
      %2161 = vmatmul.mubr.f32.gmra.mrb[0].mxu0 %v1936
      %v2162 = vpop.f32.mrb[0].mxu0
      %v2163 = vadd.f32 0.0, %v2162
      %v2164 = vpop.f32.mrb[0].mxu0
      %2165 = vmatprep.mubr.f32.mxu0 %v2020
      %2166 = vmatmul.mubr.f32.gmra.mrb[0].mxu0 %v1940
      %v2167 = vpop.f32.mrb[0].mxu0
      %v2168 = vadd.f32 0.0, %v2167
      %v2169 = vpop.f32.mrb[0].mxu0
      %2170 = vmatprep.mubr.f32.mxu0 %v2022
      %2171 = vmatmul.mubr.f32.gmra.mrb[0].mxu0 %v1944
      %v2172 = vpop.f32.mrb[0].mxu0
      %v2173 = vadd.f32 0.0, %v2172
      %v2174 = vpop.f32.mrb[0].mxu0
      %2175 = vmatprep.mubr.f32.mxu0 %v2024
      %2176 = vmatmul.mubr.f32.gmra.mrb[0].mxu0 %v1948
      %v2177 = vpop.f32.mrb[0].mxu0
      %v2178 = vadd.f32 0.0, %v2177
      %v2179 = vpop.f32.mrb[0].mxu0
      %2180 = vmatprep.mubr.f32.mxu0 %v2026
      %2181 = vmatmul.mubr.f32.gmra.mrb[0].mxu0 %v1952
      %v2182 = vpop.f32.mrb[0].mxu0
      %v2183 = vadd.f32 0.0, %v2182
      %v2184 = vpop.f32.mrb[0].mxu0
      %2185 = vmatprep.mubr.f32.mxu0 %v2028
      %2186 = vmatmul.mubr.f32.gmra.mrb[0].mxu0 %v1956
      %v2187 = vpop.f32.mrb[0].mxu0
      %v2188 = vadd.f32 0.0, %v2187
      %v2189 = vpop.f32.mrb[0].mxu0
      %2190 = vmatprep.mubr.f32.mxu0 %v2030
      %2191 = vmatmul.mubr.f32.gmra.mrb[0].mxu0 %v1960
      %v2192 = vpop.f32.mrb[0].mxu0
      %v2193 = vadd.f32 0.0, %v2192
      %v2194 = vpop.f32.mrb[0].mxu0
      %2195 = vmatprep.mubr.f32.mxu0 %v2032
      %2196 = vmatmul.mubr.f32.gmra.mrb[0].mxu0 %v1964
      %v2197 = vpop.f32.mrb[0].mxu0
      %v2198 = vadd.f32 0.0, %v2197
      %v2199 = vpop.f32.mrb[0].mxu0
      %2200 = vmatprep.mubr.f32.mxu0 %v2034
      %2201 = vmatmul.mubr.f32.gmra.mrb[0].mxu0 %v1968
      %v2202 = vpop.f32.mrb[0].mxu0
      %v2203 = vadd.f32 0.0, %v2202
      %v2204 = vpop.f32.mrb[0].mxu0
      %2205 = vmatprep.mubr.f32.mxu0 %v2036
      %2206 = vmatmul.mubr.f32.gmra.mrb[0].mxu0 %v1972
      %v2207 = vpop.f32.mrb[0].mxu0
      %v2208 = vadd.f32 0.0, %v2207
      %v2209 = vpop.f32.mrb[0].mxu0
      %2210 = vdwg.mxu0
      %v2211 = vadd.f32 %v1762, %v2108
      %v2212 = vadd.f32 %v1763, %v2113
      %v2213 = vadd.f32 %v1764, %v2118
      %v2214 = vadd.f32 %v1765, %v2123
      %v2215 = vadd.f32 %v1766, %v2128
      %v2216 = vadd.f32 %v1767, %v2133
      %v2217 = vadd.f32 %v1768, %v2138
      %v2218 = vadd.f32 %v1769, %v2143
      %v2219 = vadd.f32 %v1770, %v2148
      %v2220 = vadd.f32 %v1771, %v2153
      %v2221 = vadd.f32 %v1772, %v2158
      %v2222 = vadd.f32 %v1773, %v2163
      %v2223 = vadd.f32 %v1774, %v2168
      %v2224 = vadd.f32 %v1775, %v2173
      %v2225 = vadd.f32 %v1776, %v2178
      %v2226 = vadd.f32 %v1777, %v2183
      %v2227 = vadd.f32 %v1778, %v2188
      %v2228 = vadd.f32 %v1779, %v2193
      %v2229 = vadd.f32 %v1780, %v2198
      %v2230 = vadd.f32 %v1781, %v2203
      %v2231 = vadd.f32 %v1782, %v2208
      %v2232 = vld [vmem:[#allocation2 + $0x10] sm:$0x80]
      %v2233 = vld [vmem:[#allocation2 + $0x18] sm:$0x80]
      %v2234 = vld [vmem:[#allocation2 + $0x160] sm:$0x7f]
      %v2235 = vld [vmem:[#allocation2 + $0x168] sm:$0x7f]
      %s2236 = scalar_lea.vmem %s4, 544
      %v2237 = vld [vmem:[%s2236] sm:$0xff]
      %v2238 = vld [vmem:[%s2236 + $0x8] sm:$0xff]
      %v2239 = vld [vmem:[%s2236 + $0x10] sm:$0xff]
      %v2240 = vld [vmem:[%s2236 + $0x18] sm:$0xff]
      %v2241 = vld [vmem:[%s2236 + $0x20] sm:$0xff]
      %v2242 = vld [vmem:[%s2236 + $0x28] sm:$0xff]
      %v2243 = vld [vmem:[%s2236 + $0x30] sm:$0xff]
      %v2244 = vld [vmem:[%s2236 + $0x38] sm:$0xff]
      %v2245 = vld [vmem:[%s2236 + $0x40] sm:$0xff]
      %v2246 = vld [vmem:[%s2236 + $0x48] sm:$0xff]
      %v2247 = vld [vmem:[%s2236 + $0x50] sm:$0xff]
      %v2248 = vld [vmem:[%s2236 + $0x58] sm:$0xff]
      %v2249 = vld [vmem:[%s2236 + $0x60] sm:$0xff]
      %v2250 = vld [vmem:[%s2236 + $0x68] sm:$0xff]
      %v2251 = vld [vmem:[%s2236 + $0x70] sm:$0xff]
      %v2252 = vld [vmem:[%s2236 + $0x78] sm:$0xff]
      %v2253 = vld [vmem:[%s2236 + $0x80] sm:$0x3]
      %vm2258 = vcmask 1040384
      %v2259 = vrot.slane %v2232, 7
      %v2260 = vrot.slane %v1785, 7
      %v2261 = vsel %vm2258, %v2259, %v2260
      %v2262 = vrot.slane %v2233, 7
      %v2263 = vrot.slane %v1786, 7
      %v2264 = vsel %vm2258, %v2262, %v2263
      %v2265 = vrot.slane %v1787, 7
      %v2266 = vsel %vm2258, %v2260, %v2265
      %v2267 = vrot.slane %v1788, 7
      %v2268 = vsel %vm2258, %v2263, %v2267
      %v2269 = vrot.slane %v1789, 7
      %v2270 = vsel %vm2258, %v2265, %v2269
      %v2271 = vrot.slane %v1790, 7
      %v2272 = vsel %vm2258, %v2267, %v2271
      %v2273 = vrot.slane %v1791, 7
      %v2274 = vsel %vm2258, %v2269, %v2273
      %v2275 = vrot.slane %v1792, 7
      %v2276 = vsel %vm2258, %v2271, %v2275
      %v2277 = vrot.slane %v1793, 7
      %v2278 = vsel %vm2258, %v2273, %v2277
      %v2279 = vrot.slane %v1794, 7
      %v2280 = vsel %vm2258, %v2275, %v2279
      %v2281 = vrot.slane %v1795, 7
      %v2282 = vsel %vm2258, %v2277, %v2281
      %v2283 = vrot.slane %v1796, 7
      %v2284 = vsel %vm2258, %v2279, %v2283
      %v2285 = vrot.slane %v1797, 7
      %v2286 = vsel %vm2258, %v2281, %v2285
      %v2287 = vrot.slane %v1798, 7
      %v2288 = vsel %vm2258, %v2283, %v2287
      %v2289 = vrot.slane %v1799, 7
      %v2290 = vsel %vm2258, %v2285, %v2289
      %v2291 = vrot.slane %v1800, 7
      %v2292 = vsel %vm2258, %v2287, %v2291
      %v2293 = vrot.slane %v1801, 7
      %v2294 = vsel %vm2258, %v2289, %v2293
      %v2295 = vrot.slane %v1802, 7
      %v2296 = vsel %vm2258, %v2291, %v2295
      %v2297 = vrot.slane %v1803, 7
      %v2298 = vsel %vm2258, %v2293, %v2297
      %v2299 = vrot.slane %v1804, 7
      %v2300 = vsel %vm2258, %v2295, %v2299
      %v2301 = vrot.slane %v1805, 7
      %v2302 = vsel %vm2258, %v2297, %v2301
      %v2303 = vrot.slane %v1806, 7
      %v2304 = vsel %vm2258, %v2299, %v2303
      %v2305 = vrot.slane %v1807, 7
      %v2306 = vsel %vm2258, %v2301, %v2305
      %v2307 = vrot.slane %v1808, 7
      %v2308 = vsel %vm2258, %v2303, %v2307
      %v2309 = vrot.slane %v1809, 7
      %v2310 = vsel %vm2258, %v2305, %v2309
      %v2311 = vrot.slane %v1810, 7
      %v2312 = vsel %vm2258, %v2307, %v2311
      %v2313 = vrot.slane %v1811, 7
      %v2314 = vsel %vm2258, %v2309, %v2313
      %v2315 = vrot.slane %v1812, 7
      %v2316 = vsel %vm2258, %v2311, %v2315
      %v2317 = vrot.slane %v1813, 7
      %v2318 = vsel %vm2258, %v2313, %v2317
      %v2319 = vrot.slane %v1814, 7
      %v2320 = vsel %vm2258, %v2315, %v2319
      %v2321 = vrot.slane %v1815, 7
      %v2322 = vsel %vm2258, %v2317, %v2321
      %v2323 = vrot.slane %v1816, 7
      %v2324 = vsel %vm2258, %v2319, %v2323
      %v2325 = vrot.slane %v1817, 7
      %v2326 = vsel %vm2258, %v2321, %v2325
      %v2327 = vrot.slane %v1818, 7
      %v2328 = vsel %vm2258, %v2323, %v2327
      %v2329 = vrot.slane %v1819, 7
      %v2330 = vsel %vm2258, %v2325, %v2329
      %v2331 = vrot.slane %v1820, 7
      %v2332 = vsel %vm2258, %v2327, %v2331
      %v2333 = vrot.slane %v1821, 7
      %v2334 = vsel %vm2258, %v2329, %v2333
      %v2335 = vrot.slane %v1822, 7
      %v2336 = vsel %vm2258, %v2331, %v2335
      %v2337 = vrot.slane %v1823, 7
      %v2338 = vsel %vm2258, %v2333, %v2337
      %v2339 = vrot.slane %v1824, 7
      %v2340 = vsel %vm2258, %v2335, %v2339
      %v2341 = vrot.slane %v2234, 7
      %v2342 = vsel %vm2258, %v2337, %v2341
      %v2343 = vrot.slane %v2235, 7
      %v2344 = vsel %vm2258, %v2339, %v2343
      %v2366 = vsel %vm699, %v2264, 0
      %v2368 = vsel %vm699, %v2268, 0
      %v2370 = vsel %vm699, %v2272, 0
      %v2372 = vsel %vm699, %v2276, 0
      %v2374 = vsel %vm699, %v2280, 0
      %v2376 = vsel %vm699, %v2284, 0
      %v2378 = vsel %vm699, %v2288, 0
      %v2380 = vsel %vm699, %v2292, 0
      %v2382 = vsel %vm699, %v2296, 0
      %v2384 = vsel %vm699, %v2300, 0
      %v2386 = vsel %vm699, %v2304, 0
      %v2388 = vsel %vm699, %v2308, 0
      %v2390 = vsel %vm699, %v2312, 0
      %v2392 = vsel %vm699, %v2316, 0
      %v2394 = vsel %vm699, %v2320, 0
      %v2396 = vsel %vm699, %v2324, 0
      %v2398 = vsel %vm699, %v2328, 0
      %v2400 = vsel %vm699, %v2332, 0
      %v2402 = vsel %vm699, %v2336, 0
      %v2404 = vsel %vm699, %v2340, 0
      %v2406 = vsel %vm699, %v2344, 0
      %v2409 = vsel %vm1024, %v2253, 0
      %2411 = vmatprep.subr.mxu0 0.0
      %2412 = vmatpush1.msra.mxu0 %v2237
      %2413 = vmatprep.subr.mxu0 0.0
      %2414 = vmatpush1.msra.mxu0 %v2238
      %2415 = vmatprep.subr.mxu0 0.0
      %2416 = vmatpush1.msra.mxu0 %v2239
      %2417 = vmatprep.subr.mxu0 0.0
      %2418 = vmatpush1.msra.mxu0 %v2240
      %2419 = vmatprep.subr.mxu0 0.0
      %2420 = vmatpush1.msra.mxu0 %v2241
      %2421 = vmatprep.subr.mxu0 0.0
      %2422 = vmatpush1.msra.mxu0 %v2242
      %2423 = vmatprep.subr.mxu0 0.0
      %2424 = vmatpush1.msra.mxu0 %v2243
      %2425 = vmatprep.subr.mxu0 0.0
      %2426 = vmatpush1.msra.mxu0 %v2244
      %2427 = vmatprep.subr.mxu0 0.0
      %2428 = vmatpush1.msra.mxu0 %v2245
      %2429 = vmatprep.subr.mxu0 0.0
      %2430 = vmatpush1.msra.mxu0 %v2246
      %2431 = vmatprep.subr.mxu0 0.0
      %2432 = vmatpush1.msra.mxu0 %v2247
      %2433 = vmatprep.subr.mxu0 0.0
      %2434 = vmatpush1.msra.mxu0 %v2248
      %2435 = vmatprep.subr.mxu0 0.0
      %2436 = vmatpush1.msra.mxu0 %v2249
      %2437 = vmatprep.subr.mxu0 0.0
      %2438 = vmatpush1.msra.mxu0 %v2250
      %2439 = vmatprep.subr.mxu0 0.0
      %2440 = vmatpush1.msra.mxu0 %v2251
      %2441 = vmatprep.subr.mxu0 0.0
      %2442 = vmatpush1.msra.mxu0 %v2252
      %2443 = vmatprep.subr.mxu0 0.0
      %2444 = vmatpush1.msra.mxu0 %v2409
      %2445 = vmatprep.subr.mxu0 0.0
      %2446 = vmatpush1.msra.mxu0 0.0
      %2447 = vmatprep.subr.mxu0 0.0
      %2448 = vmatpush1.msra.mxu0 0.0
      %2449 = vmatprep.subr.mxu0 0.0
      %2450 = vmatpush1.msra.mxu0 0.0
      %2451 = vmatprep.subr.mxu0 0.0
      %2452 = vmatpush1.msra.mxu0 0.0
      %2453 = vmatprep.subr.mxu0 0.0
      %2454 = vmatpush1.msra.mxu0 0.0
      %2455 = vmatprep.subr.mxu0 0.0
      %2456 = vmatpush1.msra.mxu0 0.0
      %2457 = vmatprep.subr.mxu0 0.0
      %2458 = vmatpush1.msra.mxu0 0.0
      %2459 = vmatprep.subr.mxu0 0.0
      %2460 = vmatpush1.msra.mxu0 0.0
      %2461 = vmatprep.subr.mxu0 0.0
      %2462 = vmatpush1.msra.mxu0 0.0
      %2463 = vmatprep.subr.mxu0 0.0
      %2464 = vmatpush1.msra.mxu0 0.0
      %2465 = vmatprep.subr.mxu0 0.0
      %2466 = vmatpush1.msra.mxu0 0.0
      %2467 = vmatprep.subr.mxu0 0.0
      %2468 = vmatpush1.msra.mxu0 0.0
      %2469 = vmatprep.subr.mxu0 0.0
      %2470 = vmatpush1.msra.mxu0 0.0
      %2471 = vmatprep.subr.mxu0 0.0
      %2472 = vmatpush1.msra.mxu0 0.0
      %2473 = vmatprep.subr.mxu0 0.0
      %2474 = vmatpush1.msra.mxu0 0.0
      %2475 = vmatprep.mubr.f32.mxu0 %v2366
      %2476 = vmatmul.mubr.f32.gmra.mrb[0].mxu0 %v2261
      %v2477 = vpop.f32.mrb[0].mxu0
      %v2478 = vadd.f32 0.0, %v2477
      %v2479 = vpop.f32.mrb[0].mxu0
      %2480 = vmatprep.mubr.f32.mxu0 %v2368
      %2481 = vmatmul.mubr.f32.gmra.mrb[0].mxu0 %v2266
      %v2482 = vpop.f32.mrb[0].mxu0
      %v2483 = vadd.f32 0.0, %v2482
      %v2484 = vpop.f32.mrb[0].mxu0
      %2485 = vmatprep.mubr.f32.mxu0 %v2370
      %2486 = vmatmul.mubr.f32.gmra.mrb[0].mxu0 %v2270
      %v2487 = vpop.f32.mrb[0].mxu0
      %v2488 = vadd.f32 0.0, %v2487
      %v2489 = vpop.f32.mrb[0].mxu0
      %2490 = vmatprep.mubr.f32.mxu0 %v2372
      %2491 = vmatmul.mubr.f32.gmra.mrb[0].mxu0 %v2274
      %v2492 = vpop.f32.mrb[0].mxu0
      %v2493 = vadd.f32 0.0, %v2492
      %v2494 = vpop.f32.mrb[0].mxu0
      %2495 = vmatprep.mubr.f32.mxu0 %v2374
      %2496 = vmatmul.mubr.f32.gmra.mrb[0].mxu0 %v2278
      %v2497 = vpop.f32.mrb[0].mxu0
      %v2498 = vadd.f32 0.0, %v2497
      %v2499 = vpop.f32.mrb[0].mxu0
      %2500 = vmatprep.mubr.f32.mxu0 %v2376
      %2501 = vmatmul.mubr.f32.gmra.mrb[0].mxu0 %v2282
      %v2502 = vpop.f32.mrb[0].mxu0
      %v2503 = vadd.f32 0.0, %v2502
      %v2504 = vpop.f32.mrb[0].mxu0
      %2505 = vmatprep.mubr.f32.mxu0 %v2378
      %2506 = vmatmul.mubr.f32.gmra.mrb[0].mxu0 %v2286
      %v2507 = vpop.f32.mrb[0].mxu0
      %v2508 = vadd.f32 0.0, %v2507
      %v2509 = vpop.f32.mrb[0].mxu0
      %2510 = vmatprep.mubr.f32.mxu0 %v2380
      %2511 = vmatmul.mubr.f32.gmra.mrb[0].mxu0 %v2290
      %v2512 = vpop.f32.mrb[0].mxu0
      %v2513 = vadd.f32 0.0, %v2512
      %v2514 = vpop.f32.mrb[0].mxu0
      %2515 = vmatprep.mubr.f32.mxu0 %v2382
      %2516 = vmatmul.mubr.f32.gmra.mrb[0].mxu0 %v2294
      %v2517 = vpop.f32.mrb[0].mxu0
      %v2518 = vadd.f32 0.0, %v2517
      %v2519 = vpop.f32.mrb[0].mxu0
      %2520 = vmatprep.mubr.f32.mxu0 %v2384
      %2521 = vmatmul.mubr.f32.gmra.mrb[0].mxu0 %v2298
      %v2522 = vpop.f32.mrb[0].mxu0
      %v2523 = vadd.f32 0.0, %v2522
      %v2524 = vpop.f32.mrb[0].mxu0
      %2525 = vmatprep.mubr.f32.mxu0 %v2386
      %2526 = vmatmul.mubr.f32.gmra.mrb[0].mxu0 %v2302
      %v2527 = vpop.f32.mrb[0].mxu0
      %v2528 = vadd.f32 0.0, %v2527
      %v2529 = vpop.f32.mrb[0].mxu0
      %2530 = vmatprep.mubr.f32.mxu0 %v2388
      %2531 = vmatmul.mubr.f32.gmra.mrb[0].mxu0 %v2306
      %v2532 = vpop.f32.mrb[0].mxu0
      %v2533 = vadd.f32 0.0, %v2532
      %v2534 = vpop.f32.mrb[0].mxu0
      %2535 = vmatprep.mubr.f32.mxu0 %v2390
      %2536 = vmatmul.mubr.f32.gmra.mrb[0].mxu0 %v2310
      %v2537 = vpop.f32.mrb[0].mxu0
      %v2538 = vadd.f32 0.0, %v2537
      %v2539 = vpop.f32.mrb[0].mxu0
      %2540 = vmatprep.mubr.f32.mxu0 %v2392
      %2541 = vmatmul.mubr.f32.gmra.mrb[0].mxu0 %v2314
      %v2542 = vpop.f32.mrb[0].mxu0
      %v2543 = vadd.f32 0.0, %v2542
      %v2544 = vpop.f32.mrb[0].mxu0
      %2545 = vmatprep.mubr.f32.mxu0 %v2394
      %2546 = vmatmul.mubr.f32.gmra.mrb[0].mxu0 %v2318
      %v2547 = vpop.f32.mrb[0].mxu0
      %v2548 = vadd.f32 0.0, %v2547
      %v2549 = vpop.f32.mrb[0].mxu0
      %2550 = vmatprep.mubr.f32.mxu0 %v2396
      %2551 = vmatmul.mubr.f32.gmra.mrb[0].mxu0 %v2322
      %v2552 = vpop.f32.mrb[0].mxu0
      %v2553 = vadd.f32 0.0, %v2552
      %v2554 = vpop.f32.mrb[0].mxu0
      %2555 = vmatprep.mubr.f32.mxu0 %v2398
      %2556 = vmatmul.mubr.f32.gmra.mrb[0].mxu0 %v2326
      %v2557 = vpop.f32.mrb[0].mxu0
      %v2558 = vadd.f32 0.0, %v2557
      %v2559 = vpop.f32.mrb[0].mxu0
      %2560 = vmatprep.mubr.f32.mxu0 %v2400
      %2561 = vmatmul.mubr.f32.gmra.mrb[0].mxu0 %v2330
      %v2562 = vpop.f32.mrb[0].mxu0
      %v2563 = vadd.f32 0.0, %v2562
      %v2564 = vpop.f32.mrb[0].mxu0
      %2565 = vmatprep.mubr.f32.mxu0 %v2402
      %2566 = vmatmul.mubr.f32.gmra.mrb[0].mxu0 %v2334
      %v2567 = vpop.f32.mrb[0].mxu0
      %v2568 = vadd.f32 0.0, %v2567
      %v2569 = vpop.f32.mrb[0].mxu0
      %2570 = vmatprep.mubr.f32.mxu0 %v2404
      %2571 = vmatmul.mubr.f32.gmra.mrb[0].mxu0 %v2338
      %v2572 = vpop.f32.mrb[0].mxu0
      %v2573 = vadd.f32 0.0, %v2572
      %v2574 = vpop.f32.mrb[0].mxu0
      %2575 = vmatprep.mubr.f32.mxu0 %v2406
      %2576 = vmatmul.mubr.f32.gmra.mrb[0].mxu0 %v2342
      %v2577 = vpop.f32.mrb[0].mxu0
      %v2578 = vadd.f32 0.0, %v2577
      %v2579 = vpop.f32.mrb[0].mxu0
      %2580 = vdwg.mxu0
      %v2581 = vadd.f32 %v2211, %v2478
      %v2582 = vadd.f32 %v2212, %v2483
      %v2583 = vadd.f32 %v2213, %v2488
      %v2584 = vadd.f32 %v2214, %v2493
      %v2585 = vadd.f32 %v2215, %v2498
      %v2586 = vadd.f32 %v2216, %v2503
      %v2587 = vadd.f32 %v2217, %v2508
      %v2588 = vadd.f32 %v2218, %v2513
      %v2589 = vadd.f32 %v2219, %v2518
      %v2590 = vadd.f32 %v2220, %v2523
      %v2591 = vadd.f32 %v2221, %v2528
      %v2592 = vadd.f32 %v2222, %v2533
      %v2593 = vadd.f32 %v2223, %v2538
      %v2594 = vadd.f32 %v2224, %v2543
      %v2595 = vadd.f32 %v2225, %v2548
      %v2596 = vadd.f32 %v2226, %v2553
      %v2597 = vadd.f32 %v2227, %v2558
      %v2598 = vadd.f32 %v2228, %v2563
      %v2599 = vadd.f32 %v2229, %v2568
      %v2600 = vadd.f32 %v2230, %v2573
      %v2601 = vadd.f32 %v2231, %v2578
      %v2602 = vld [vmem:[#allocation2 + $0x160] sm:$0xff]
      %v2603 = vld [vmem:[#allocation2 + $0x168] sm:$0xff]
      %s2604 = scalar_lea.vmem %s4, 680
      %v2605 = vld [vmem:[%s2604] sm:$0xff]
      %v2606 = vld [vmem:[%s2604 + $0x8] sm:$0xff]
      %v2607 = vld [vmem:[%s2604 + $0x10] sm:$0xff]
      %v2608 = vld [vmem:[%s2604 + $0x18] sm:$0xff]
      %v2609 = vld [vmem:[%s2604 + $0x20] sm:$0xff]
      %v2610 = vld [vmem:[%s2604 + $0x28] sm:$0xff]
      %v2611 = vld [vmem:[%s2604 + $0x30] sm:$0xff]
      %v2612 = vld [vmem:[%s2604 + $0x38] sm:$0xff]
      %v2613 = vld [vmem:[%s2604 + $0x40] sm:$0xff]
      %v2614 = vld [vmem:[%s2604 + $0x48] sm:$0xff]
      %v2615 = vld [vmem:[%s2604 + $0x50] sm:$0xff]
      %v2616 = vld [vmem:[%s2604 + $0x58] sm:$0xff]
      %v2617 = vld [vmem:[%s2604 + $0x60] sm:$0xff]
      %v2618 = vld [vmem:[%s2604 + $0x68] sm:$0xff]
      %v2619 = vld [vmem:[%s2604 + $0x70] sm:$0xff]
      %v2620 = vld [vmem:[%s2604 + $0x78] sm:$0xff]
      %v2621 = vld [vmem:[%s2604 + $0x80] sm:$0x3]
      %v2622 = vsel %vm699, %v1786, 0
      %v2624 = vsel %vm699, %v1788, 0
      %v2626 = vsel %vm699, %v1790, 0
      %v2628 = vsel %vm699, %v1792, 0
      %v2630 = vsel %vm699, %v1794, 0
      %v2632 = vsel %vm699, %v1796, 0
      %v2634 = vsel %vm699, %v1798, 0
      %v2636 = vsel %vm699, %v1800, 0
      %v2638 = vsel %vm699, %v1802, 0
      %v2640 = vsel %vm699, %v1804, 0
      %v2642 = vsel %vm699, %v1806, 0
      %v2644 = vsel %vm699, %v1808, 0
      %v2646 = vsel %vm699, %v1810, 0
      %v2648 = vsel %vm699, %v1812, 0
      %v2650 = vsel %vm699, %v1814, 0
      %v2652 = vsel %vm699, %v1816, 0
      %v2654 = vsel %vm699, %v1818, 0
      %v2656 = vsel %vm699, %v1820, 0
      %v2658 = vsel %vm699, %v1822, 0
      %v2660 = vsel %vm699, %v1824, 0
      %v2663 = vsel %vm699, %v2603, 0
      %v2666 = vsel %vm1024, %v2621, 0
      %2668 = vmatprep.subr.mxu0 0.0
      %2669 = vmatpush1.msra.mxu0 %v2605
      %2670 = vmatprep.subr.mxu0 0.0
      %2671 = vmatpush1.msra.mxu0 %v2606
      %2672 = vmatprep.subr.mxu0 0.0
      %2673 = vmatpush1.msra.mxu0 %v2607
      %2674 = vmatprep.subr.mxu0 0.0
      %2675 = vmatpush1.msra.mxu0 %v2608
      %2676 = vmatprep.subr.mxu0 0.0
      %2677 = vmatpush1.msra.mxu0 %v2609
      %2678 = vmatprep.subr.mxu0 0.0
      %2679 = vmatpush1.msra.mxu0 %v2610
      %2680 = vmatprep.subr.mxu0 0.0
      %2681 = vmatpush1.msra.mxu0 %v2611
      %2682 = vmatprep.subr.mxu0 0.0
      %2683 = vmatpush1.msra.mxu0 %v2612
      %2684 = vmatprep.subr.mxu0 0.0
      %2685 = vmatpush1.msra.mxu0 %v2613
      %2686 = vmatprep.subr.mxu0 0.0
      %2687 = vmatpush1.msra.mxu0 %v2614
      %2688 = vmatprep.subr.mxu0 0.0
      %2689 = vmatpush1.msra.mxu0 %v2615
      %2690 = vmatprep.subr.mxu0 0.0
      %2691 = vmatpush1.msra.mxu0 %v2616
      %2692 = vmatprep.subr.mxu0 0.0
      %2693 = vmatpush1.msra.mxu0 %v2617
      %2694 = vmatprep.subr.mxu0 0.0
      %2695 = vmatpush1.msra.mxu0 %v2618
      %2696 = vmatprep.subr.mxu0 0.0
      %2697 = vmatpush1.msra.mxu0 %v2619
      %2698 = vmatprep.subr.mxu0 0.0
      %2699 = vmatpush1.msra.mxu0 %v2620
      %2700 = vmatprep.subr.mxu0 0.0
      %2701 = vmatpush1.msra.mxu0 %v2666
      %2702 = vmatprep.subr.mxu0 0.0
      %2703 = vmatpush1.msra.mxu0 0.0
      %2704 = vmatprep.subr.mxu0 0.0
      %2705 = vmatpush1.msra.mxu0 0.0
      %2706 = vmatprep.subr.mxu0 0.0
      %2707 = vmatpush1.msra.mxu0 0.0
      %2708 = vmatprep.subr.mxu0 0.0
      %2709 = vmatpush1.msra.mxu0 0.0
      %2710 = vmatprep.subr.mxu0 0.0
      %2711 = vmatpush1.msra.mxu0 0.0
      %2712 = vmatprep.subr.mxu0 0.0
      %2713 = vmatpush1.msra.mxu0 0.0
      %2714 = vmatprep.subr.mxu0 0.0
      %2715 = vmatpush1.msra.mxu0 0.0
      %2716 = vmatprep.subr.mxu0 0.0
      %2717 = vmatpush1.msra.mxu0 0.0
      %2718 = vmatprep.subr.mxu0 0.0
      %2719 = vmatpush1.msra.mxu0 0.0
      %2720 = vmatprep.subr.mxu0 0.0
      %2721 = vmatpush1.msra.mxu0 0.0
      %2722 = vmatprep.subr.mxu0 0.0
      %2723 = vmatpush1.msra.mxu0 0.0
      %2724 = vmatprep.subr.mxu0 0.0
      %2725 = vmatpush1.msra.mxu0 0.0
      %2726 = vmatprep.subr.mxu0 0.0
      %2727 = vmatpush1.msra.mxu0 0.0
      %2728 = vmatprep.subr.mxu0 0.0
      %2729 = vmatpush1.msra.mxu0 0.0
      %2730 = vmatprep.subr.mxu0 0.0
      %2731 = vmatpush1.msra.mxu0 0.0
      %2732 = vmatprep.mubr.f32.mxu0 %v2622
      %2733 = vmatmul.mubr.f32.gmra.mrb[0].mxu0 %v1785
      %v2734 = vpop.f32.mrb[0].mxu0
      %v2735 = vadd.f32 0.0, %v2734
      %v2736 = vpop.f32.mrb[0].mxu0
      %2737 = vmatprep.mubr.f32.mxu0 %v2624
      %2738 = vmatmul.mubr.f32.gmra.mrb[0].mxu0 %v1787
      %v2739 = vpop.f32.mrb[0].mxu0
      %v2740 = vadd.f32 0.0, %v2739
      %v2741 = vpop.f32.mrb[0].mxu0
      %2742 = vmatprep.mubr.f32.mxu0 %v2626
      %2743 = vmatmul.mubr.f32.gmra.mrb[0].mxu0 %v1789
      %v2744 = vpop.f32.mrb[0].mxu0
      %v2745 = vadd.f32 0.0, %v2744
      %v2746 = vpop.f32.mrb[0].mxu0
      %2747 = vmatprep.mubr.f32.mxu0 %v2628
      %2748 = vmatmul.mubr.f32.gmra.mrb[0].mxu0 %v1791
      %v2749 = vpop.f32.mrb[0].mxu0
      %v2750 = vadd.f32 0.0, %v2749
      %v2751 = vpop.f32.mrb[0].mxu0
      %2752 = vmatprep.mubr.f32.mxu0 %v2630
      %2753 = vmatmul.mubr.f32.gmra.mrb[0].mxu0 %v1793
      %v2754 = vpop.f32.mrb[0].mxu0
      %v2755 = vadd.f32 0.0, %v2754
      %v2756 = vpop.f32.mrb[0].mxu0
      %2757 = vmatprep.mubr.f32.mxu0 %v2632
      %2758 = vmatmul.mubr.f32.gmra.mrb[0].mxu0 %v1795
      %v2759 = vpop.f32.mrb[0].mxu0
      %v2760 = vadd.f32 0.0, %v2759
      %v2761 = vpop.f32.mrb[0].mxu0
      %2762 = vmatprep.mubr.f32.mxu0 %v2634
      %2763 = vmatmul.mubr.f32.gmra.mrb[0].mxu0 %v1797
      %v2764 = vpop.f32.mrb[0].mxu0
      %v2765 = vadd.f32 0.0, %v2764
      %v2766 = vpop.f32.mrb[0].mxu0
      %2767 = vmatprep.mubr.f32.mxu0 %v2636
      %2768 = vmatmul.mubr.f32.gmra.mrb[0].mxu0 %v1799
      %v2769 = vpop.f32.mrb[0].mxu0
      %v2770 = vadd.f32 0.0, %v2769
      %v2771 = vpop.f32.mrb[0].mxu0
      %2772 = vmatprep.mubr.f32.mxu0 %v2638
      %2773 = vmatmul.mubr.f32.gmra.mrb[0].mxu0 %v1801
      %v2774 = vpop.f32.mrb[0].mxu0
      %v2775 = vadd.f32 0.0, %v2774
      %v2776 = vpop.f32.mrb[0].mxu0
      %2777 = vmatprep.mubr.f32.mxu0 %v2640
      %2778 = vmatmul.mubr.f32.gmra.mrb[0].mxu0 %v1803
      %v2779 = vpop.f32.mrb[0].mxu0
      %v2780 = vadd.f32 0.0, %v2779
      %v2781 = vpop.f32.mrb[0].mxu0
      %2782 = vmatprep.mubr.f32.mxu0 %v2642
      %2783 = vmatmul.mubr.f32.gmra.mrb[0].mxu0 %v1805
      %v2784 = vpop.f32.mrb[0].mxu0
      %v2785 = vadd.f32 0.0, %v2784
      %v2786 = vpop.f32.mrb[0].mxu0
      %2787 = vmatprep.mubr.f32.mxu0 %v2644
      %2788 = vmatmul.mubr.f32.gmra.mrb[0].mxu0 %v1807
      %v2789 = vpop.f32.mrb[0].mxu0
      %v2790 = vadd.f32 0.0, %v2789
      %v2791 = vpop.f32.mrb[0].mxu0
      %2792 = vmatprep.mubr.f32.mxu0 %v2646
      %2793 = vmatmul.mubr.f32.gmra.mrb[0].mxu0 %v1809
      %v2794 = vpop.f32.mrb[0].mxu0
      %v2795 = vadd.f32 0.0, %v2794
      %v2796 = vpop.f32.mrb[0].mxu0
      %2797 = vmatprep.mubr.f32.mxu0 %v2648
      %2798 = vmatmul.mubr.f32.gmra.mrb[0].mxu0 %v1811
      %v2799 = vpop.f32.mrb[0].mxu0
      %v2800 = vadd.f32 0.0, %v2799
      %v2801 = vpop.f32.mrb[0].mxu0
      %2802 = vmatprep.mubr.f32.mxu0 %v2650
      %2803 = vmatmul.mubr.f32.gmra.mrb[0].mxu0 %v1813
      %v2804 = vpop.f32.mrb[0].mxu0
      %v2805 = vadd.f32 0.0, %v2804
      %v2806 = vpop.f32.mrb[0].mxu0
      %2807 = vmatprep.mubr.f32.mxu0 %v2652
      %2808 = vmatmul.mubr.f32.gmra.mrb[0].mxu0 %v1815
      %v2809 = vpop.f32.mrb[0].mxu0
      %v2810 = vadd.f32 0.0, %v2809
      %v2811 = vpop.f32.mrb[0].mxu0
      %2812 = vmatprep.mubr.f32.mxu0 %v2654
      %2813 = vmatmul.mubr.f32.gmra.mrb[0].mxu0 %v1817
      %v2814 = vpop.f32.mrb[0].mxu0
      %v2815 = vadd.f32 0.0, %v2814
      %v2816 = vpop.f32.mrb[0].mxu0
      %2817 = vmatprep.mubr.f32.mxu0 %v2656
      %2818 = vmatmul.mubr.f32.gmra.mrb[0].mxu0 %v1819
      %v2819 = vpop.f32.mrb[0].mxu0
      %v2820 = vadd.f32 0.0, %v2819
      %v2821 = vpop.f32.mrb[0].mxu0
      %2822 = vmatprep.mubr.f32.mxu0 %v2658
      %2823 = vmatmul.mubr.f32.gmra.mrb[0].mxu0 %v1821
      %v2824 = vpop.f32.mrb[0].mxu0
      %v2825 = vadd.f32 0.0, %v2824
      %v2826 = vpop.f32.mrb[0].mxu0
      %2827 = vmatprep.mubr.f32.mxu0 %v2660
      %2828 = vmatmul.mubr.f32.gmra.mrb[0].mxu0 %v1823
      %v2829 = vpop.f32.mrb[0].mxu0
      %v2830 = vadd.f32 0.0, %v2829
      %v2831 = vpop.f32.mrb[0].mxu0
      %2832 = vmatprep.mubr.f32.mxu0 %v2663
      %2833 = vmatmul.mubr.f32.gmra.mrb[0].mxu0 %v2602
      %v2834 = vpop.f32.mrb[0].mxu0
      %v2835 = vadd.f32 0.0, %v2834
      %v2836 = vpop.f32.mrb[0].mxu0
      %2837 = vdwg.mxu0
      %v2838 = vadd.f32 %v2581, %v2735
      %v2839 = vadd.f32 %v2582, %v2740
      %v2840 = vadd.f32 %v2583, %v2745
      %v2841 = vadd.f32 %v2584, %v2750
      %v2842 = vadd.f32 %v2585, %v2755
      %v2843 = vadd.f32 %v2586, %v2760
      %v2844 = vadd.f32 %v2587, %v2765
      %v2845 = vadd.f32 %v2588, %v2770
      %v2846 = vadd.f32 %v2589, %v2775
      %v2847 = vadd.f32 %v2590, %v2780
      %v2848 = vadd.f32 %v2591, %v2785
      %v2849 = vadd.f32 %v2592, %v2790
      %v2850 = vadd.f32 %v2593, %v2795
      %v2851 = vadd.f32 %v2594, %v2800
      %v2852 = vadd.f32 %v2595, %v2805
      %v2853 = vadd.f32 %v2596, %v2810
      %v2854 = vadd.f32 %v2597, %v2815
      %v2855 = vadd.f32 %v2598, %v2820
      %v2856 = vadd.f32 %v2599, %v2825
      %v2857 = vadd.f32 %v2600, %v2830
      %v2858 = vadd.f32 %v2601, %v2835
      %v2859 = vld [vmem:[#allocation2 + $0x30] sm:$0xf0]
      %v2860 = vld [vmem:[#allocation2 + $0x38] sm:$0xf0]
      %v2861 = vld [vmem:[#allocation2 + $0x40] sm:$0xff]
      %v2862 = vld [vmem:[#allocation2 + $0x48] sm:$0xff]
      %v2863 = vld [vmem:[#allocation2 + $0x50] sm:$0xff]
      %v2864 = vld [vmem:[#allocation2 + $0x58] sm:$0xff]
      %v2865 = vld [vmem:[#allocation2 + $0x60] sm:$0xff]
      %v2866 = vld [vmem:[#allocation2 + $0x68] sm:$0xff]
      %v2867 = vld [vmem:[#allocation2 + $0x70] sm:$0xff]
      %v2868 = vld [vmem:[#allocation2 + $0x78] sm:$0xff]
      %v2869 = vld [vmem:[#allocation2 + $0x80] sm:$0xff]
      %v2870 = vld [vmem:[#allocation2 + $0x88] sm:$0xff]
      %v2871 = vld [vmem:[#allocation2 + $0x90] sm:$0xff]
      %v2872 = vld [vmem:[#allocation2 + $0x98] sm:$0xff]
      %v2873 = vld [vmem:[#allocation2 + $0xa0] sm:$0xff]
      %v2874 = vld [vmem:[#allocation2 + $0xa8] sm:$0xff]
      %v2875 = vld [vmem:[#allocation2 + $0xb0] sm:$0xff]
      %v2876 = vld [vmem:[#allocation2 + $0xb8] sm:$0xff]
      %v2877 = vld [vmem:[#allocation2 + $0xc0] sm:$0xff]
      %v2878 = vld [vmem:[#allocation2 + $0xc8] sm:$0xff]
      %v2879 = vld [vmem:[#allocation2 + $0xd0] sm:$0xff]
      %v2880 = vld [vmem:[#allocation2 + $0xd8] sm:$0xff]
      %v2881 = vld [vmem:[#allocation2 + $0xe0] sm:$0xff]
      %v2882 = vld [vmem:[#allocation2 + $0xe8] sm:$0xff]
      %v2883 = vld [vmem:[#allocation2 + $0xf0] sm:$0xff]
      %v2884 = vld [vmem:[#allocation2 + $0xf8] sm:$0xff]
      %v2885 = vld [vmem:[#allocation2 + $0x100] sm:$0xff]
      %v2886 = vld [vmem:[#allocation2 + $0x108] sm:$0xff]
      %v2887 = vld [vmem:[#allocation2 + $0x110] sm:$0xff]
      %v2888 = vld [vmem:[#allocation2 + $0x118] sm:$0xff]
      %v2889 = vld [vmem:[#allocation2 + $0x120] sm:$0xff]
      %v2890 = vld [vmem:[#allocation2 + $0x128] sm:$0xff]
      %v2891 = vld [vmem:[#allocation2 + $0x130] sm:$0xff]
      %v2892 = vld [vmem:[#allocation2 + $0x138] sm:$0xff]
      %v2893 = vld [vmem:[#allocation2 + $0x140] sm:$0xff]
      %v2894 = vld [vmem:[#allocation2 + $0x148] sm:$0xff]
      %v2895 = vld [vmem:[#allocation2 + $0x150] sm:$0xff]
      %v2896 = vld [vmem:[#allocation2 + $0x158] sm:$0xff]
      %v2897 = vld [vmem:[#allocation2 + $0x160] sm:$0xff]
      %v2898 = vld [vmem:[#allocation2 + $0x168] sm:$0xff]
      %v2899 = vld [vmem:[#allocation2 + $0x170] sm:$0xff]
      %v2900 = vld [vmem:[#allocation2 + $0x178] sm:$0xff]
      %v2901 = vld [vmem:[#allocation2 + $0x180] sm:$0xf]
      %v2902 = vld [vmem:[#allocation2 + $0x188] sm:$0xf]
      %s2903 = scalar_lea.vmem %s4, 816
      %v2904 = vld [vmem:[%s2903] sm:$0xff]
      %v2905 = vld [vmem:[%s2903 + $0x8] sm:$0xff]
      %v2906 = vld [vmem:[%s2903 + $0x10] sm:$0xff]
      %v2907 = vld [vmem:[%s2903 + $0x18] sm:$0xff]
      %v2908 = vld [vmem:[%s2903 + $0x20] sm:$0xff]
      %v2909 = vld [vmem:[%s2903 + $0x28] sm:$0xff]
      %v2910 = vld [vmem:[%s2903 + $0x30] sm:$0xff]
      %v2911 = vld [vmem:[%s2903 + $0x38] sm:$0xff]
      %v2912 = vld [vmem:[%s2903 + $0x40] sm:$0xff]
      %v2913 = vld [vmem:[%s2903 + $0x48] sm:$0xff]
      %v2914 = vld [vmem:[%s2903 + $0x50] sm:$0xff]
      %v2915 = vld [vmem:[%s2903 + $0x58] sm:$0xff]
      %v2916 = vld [vmem:[%s2903 + $0x60] sm:$0xff]
      %v2917 = vld [vmem:[%s2903 + $0x68] sm:$0xff]
      %v2918 = vld [vmem:[%s2903 + $0x70] sm:$0xff]
      %v2919 = vld [vmem:[%s2903 + $0x78] sm:$0xff]
      %v2920 = vld [vmem:[%s2903 + $0x80] sm:$0x3]
      %vm2965 = vcmask 1043456
      %v2966 = vrot.slane %v2859, 4
      %v2967 = vrot.slane %v2861, 4
      %v2968 = vsel %vm2965, %v2966, %v2967
      %v2969 = vrot.slane %v2860, 4
      %v2970 = vrot.slane %v2862, 4
      %v2971 = vsel %vm2965, %v2969, %v2970
      %v2972 = vrot.slane %v2863, 4
      %v2973 = vsel %vm2965, %v2967, %v2972
      %v2974 = vrot.slane %v2864, 4
      %v2975 = vsel %vm2965, %v2970, %v2974
      %v2976 = vrot.slane %v2865, 4
      %v2977 = vsel %vm2965, %v2972, %v2976
      %v2978 = vrot.slane %v2866, 4
      %v2979 = vsel %vm2965, %v2974, %v2978
      %v2980 = vrot.slane %v2867, 4
      %v2981 = vsel %vm2965, %v2976, %v2980
      %v2982 = vrot.slane %v2868, 4
      %v2983 = vsel %vm2965, %v2978, %v2982
      %v2984 = vrot.slane %v2869, 4
      %v2985 = vsel %vm2965, %v2980, %v2984
      %v2986 = vrot.slane %v2870, 4
      %v2987 = vsel %vm2965, %v2982, %v2986
      %v2988 = vrot.slane %v2871, 4
      %v2989 = vsel %vm2965, %v2984, %v2988
      %v2990 = vrot.slane %v2872, 4
      %v2991 = vsel %vm2965, %v2986, %v2990
      %v2992 = vrot.slane %v2873, 4
      %v2993 = vsel %vm2965, %v2988, %v2992
      %v2994 = vrot.slane %v2874, 4
      %v2995 = vsel %vm2965, %v2990, %v2994
      %v2996 = vrot.slane %v2875, 4
      %v2997 = vsel %vm2965, %v2992, %v2996
      %v2998 = vrot.slane %v2876, 4
      %v2999 = vsel %vm2965, %v2994, %v2998
      %v3000 = vrot.slane %v2877, 4
      %v3001 = vsel %vm2965, %v2996, %v3000
      %v3002 = vrot.slane %v2878, 4
      %v3003 = vsel %vm2965, %v2998, %v3002
      %v3004 = vrot.slane %v2879, 4
      %v3005 = vsel %vm2965, %v3000, %v3004
      %v3006 = vrot.slane %v2880, 4
      %v3007 = vsel %vm2965, %v3002, %v3006
      %v3008 = vrot.slane %v2881, 4
      %v3009 = vsel %vm2965, %v3004, %v3008
      %v3010 = vrot.slane %v2882, 4
      %v3011 = vsel %vm2965, %v3006, %v3010
      %v3012 = vrot.slane %v2883, 4
      %v3013 = vsel %vm2965, %v3008, %v3012
      %v3014 = vrot.slane %v2884, 4
      %v3015 = vsel %vm2965, %v3010, %v3014
      %v3016 = vrot.slane %v2885, 4
      %v3017 = vsel %vm2965, %v3012, %v3016
      %v3018 = vrot.slane %v2886, 4
      %v3019 = vsel %vm2965, %v3014, %v3018
      %v3020 = vrot.slane %v2887, 4
      %v3021 = vsel %vm2965, %v3016, %v3020
      %v3022 = vrot.slane %v2888, 4
      %v3023 = vsel %vm2965, %v3018, %v3022
      %v3024 = vrot.slane %v2889, 4
      %v3025 = vsel %vm2965, %v3020, %v3024
      %v3026 = vrot.slane %v2890, 4
      %v3027 = vsel %vm2965, %v3022, %v3026
      %v3028 = vrot.slane %v2891, 4
      %v3029 = vsel %vm2965, %v3024, %v3028
      %v3030 = vrot.slane %v2892, 4
      %v3031 = vsel %vm2965, %v3026, %v3030
      %v3032 = vrot.slane %v2893, 4
      %v3033 = vsel %vm2965, %v3028, %v3032
      %v3034 = vrot.slane %v2894, 4
      %v3035 = vsel %vm2965, %v3030, %v3034
      %v3036 = vrot.slane %v2895, 4
      %v3037 = vsel %vm2965, %v3032, %v3036
      %v3038 = vrot.slane %v2896, 4
      %v3039 = vsel %vm2965, %v3034, %v3038
      %v3040 = vrot.slane %v2897, 4
      %v3041 = vsel %vm2965, %v3036, %v3040
      %v3042 = vrot.slane %v2898, 4
      %v3043 = vsel %vm2965, %v3038, %v3042
      %v3044 = vrot.slane %v2899, 4
      %v3045 = vsel %vm2965, %v3040, %v3044
      %v3046 = vrot.slane %v2900, 4
      %v3047 = vsel %vm2965, %v3042, %v3046
      %v3048 = vrot.slane %v2901, 4
      %v3049 = vsel %vm2965, %v3044, %v3048
      %v3050 = vrot.slane %v2902, 4
      %v3051 = vsel %vm2965, %v3046, %v3050
      %v3073 = vsel %vm699, %v2971, 0
      %v3075 = vsel %vm699, %v2975, 0
      %v3077 = vsel %vm699, %v2979, 0
      %v3079 = vsel %vm699, %v2983, 0
      %v3081 = vsel %vm699, %v2987, 0
      %v3083 = vsel %vm699, %v2991, 0
      %v3085 = vsel %vm699, %v2995, 0
      %v3087 = vsel %vm699, %v2999, 0
      %v3089 = vsel %vm699, %v3003, 0
      %v3091 = vsel %vm699, %v3007, 0
      %v3093 = vsel %vm699, %v3011, 0
      %v3095 = vsel %vm699, %v3015, 0
      %v3097 = vsel %vm699, %v3019, 0
      %v3099 = vsel %vm699, %v3023, 0
      %v3101 = vsel %vm699, %v3027, 0
      %v3103 = vsel %vm699, %v3031, 0
      %v3105 = vsel %vm699, %v3035, 0
      %v3107 = vsel %vm699, %v3039, 0
      %v3109 = vsel %vm699, %v3043, 0
      %v3111 = vsel %vm699, %v3047, 0
      %v3113 = vsel %vm699, %v3051, 0
      %v3116 = vsel %vm1024, %v2920, 0
      %3118 = vmatprep.subr.mxu0 0.0
      %3119 = vmatpush1.msra.mxu0 %v2904
      %3120 = vmatprep.subr.mxu0 0.0
      %3121 = vmatpush1.msra.mxu0 %v2905
      %3122 = vmatprep.subr.mxu0 0.0
      %3123 = vmatpush1.msra.mxu0 %v2906
      %3124 = vmatprep.subr.mxu0 0.0
      %3125 = vmatpush1.msra.mxu0 %v2907
      %3126 = vmatprep.subr.mxu0 0.0
      %3127 = vmatpush1.msra.mxu0 %v2908
      %3128 = vmatprep.subr.mxu0 0.0
      %3129 = vmatpush1.msra.mxu0 %v2909
      %3130 = vmatprep.subr.mxu0 0.0
      %3131 = vmatpush1.msra.mxu0 %v2910
      %3132 = vmatprep.subr.mxu0 0.0
      %3133 = vmatpush1.msra.mxu0 %v2911
      %3134 = vmatprep.subr.mxu0 0.0
      %3135 = vmatpush1.msra.mxu0 %v2912
      %3136 = vmatprep.subr.mxu0 0.0
      %3137 = vmatpush1.msra.mxu0 %v2913
      %3138 = vmatprep.subr.mxu0 0.0
      %3139 = vmatpush1.msra.mxu0 %v2914
      %3140 = vmatprep.subr.mxu0 0.0
      %3141 = vmatpush1.msra.mxu0 %v2915
      %3142 = vmatprep.subr.mxu0 0.0
      %3143 = vmatpush1.msra.mxu0 %v2916
      %3144 = vmatprep.subr.mxu0 0.0
      %3145 = vmatpush1.msra.mxu0 %v2917
      %3146 = vmatprep.subr.mxu0 0.0
      %3147 = vmatpush1.msra.mxu0 %v2918
      %3148 = vmatprep.subr.mxu0 0.0
      %3149 = vmatpush1.msra.mxu0 %v2919
      %3150 = vmatprep.subr.mxu0 0.0
      %3151 = vmatpush1.msra.mxu0 %v3116
      %3152 = vmatprep.subr.mxu0 0.0
      %3153 = vmatpush1.msra.mxu0 0.0
      %3154 = vmatprep.subr.mxu0 0.0
      %3155 = vmatpush1.msra.mxu0 0.0
      %3156 = vmatprep.subr.mxu0 0.0
      %3157 = vmatpush1.msra.mxu0 0.0
      %3158 = vmatprep.subr.mxu0 0.0
      %3159 = vmatpush1.msra.mxu0 0.0
      %3160 = vmatprep.subr.mxu0 0.0
      %3161 = vmatpush1.msra.mxu0 0.0
      %3162 = vmatprep.subr.mxu0 0.0
      %3163 = vmatpush1.msra.mxu0 0.0
      %3164 = vmatprep.subr.mxu0 0.0
      %3165 = vmatpush1.msra.mxu0 0.0
      %3166 = vmatprep.subr.mxu0 0.0
      %3167 = vmatpush1.msra.mxu0 0.0
      %3168 = vmatprep.subr.mxu0 0.0
      %3169 = vmatpush1.msra.mxu0 0.0
      %3170 = vmatprep.subr.mxu0 0.0
      %3171 = vmatpush1.msra.mxu0 0.0
      %3172 = vmatprep.subr.mxu0 0.0
      %3173 = vmatpush1.msra.mxu0 0.0
      %3174 = vmatprep.subr.mxu0 0.0
      %3175 = vmatpush1.msra.mxu0 0.0
      %3176 = vmatprep.subr.mxu0 0.0
      %3177 = vmatpush1.msra.mxu0 0.0
      %3178 = vmatprep.subr.mxu0 0.0
      %3179 = vmatpush1.msra.mxu0 0.0
      %3180 = vmatprep.subr.mxu0 0.0
      %3181 = vmatpush1.msra.mxu0 0.0
      %3182 = vmatprep.mubr.f32.mxu0 %v3073
      %3183 = vmatmul.mubr.f32.gmra.mrb[0].mxu0 %v2968
      %v3184 = vpop.f32.mrb[0].mxu0
      %v3185 = vadd.f32 0.0, %v3184
      %v3186 = vpop.f32.mrb[0].mxu0
      %3187 = vmatprep.mubr.f32.mxu0 %v3075
      %3188 = vmatmul.mubr.f32.gmra.mrb[0].mxu0 %v2973
      %v3189 = vpop.f32.mrb[0].mxu0
      %v3190 = vadd.f32 0.0, %v3189
      %v3191 = vpop.f32.mrb[0].mxu0
      %3192 = vmatprep.mubr.f32.mxu0 %v3077
      %3193 = vmatmul.mubr.f32.gmra.mrb[0].mxu0 %v2977
      %v3194 = vpop.f32.mrb[0].mxu0
      %v3195 = vadd.f32 0.0, %v3194
      %v3196 = vpop.f32.mrb[0].mxu0
      %3197 = vmatprep.mubr.f32.mxu0 %v3079
      %3198 = vmatmul.mubr.f32.gmra.mrb[0].mxu0 %v2981
      %v3199 = vpop.f32.mrb[0].mxu0
      %v3200 = vadd.f32 0.0, %v3199
      %v3201 = vpop.f32.mrb[0].mxu0
      %3202 = vmatprep.mubr.f32.mxu0 %v3081
      %3203 = vmatmul.mubr.f32.gmra.mrb[0].mxu0 %v2985
      %v3204 = vpop.f32.mrb[0].mxu0
      %v3205 = vadd.f32 0.0, %v3204
      %v3206 = vpop.f32.mrb[0].mxu0
      %3207 = vmatprep.mubr.f32.mxu0 %v3083
      %3208 = vmatmul.mubr.f32.gmra.mrb[0].mxu0 %v2989
      %v3209 = vpop.f32.mrb[0].mxu0
      %v3210 = vadd.f32 0.0, %v3209
      %v3211 = vpop.f32.mrb[0].mxu0
      %3212 = vmatprep.mubr.f32.mxu0 %v3085
      %3213 = vmatmul.mubr.f32.gmra.mrb[0].mxu0 %v2993
      %v3214 = vpop.f32.mrb[0].mxu0
      %v3215 = vadd.f32 0.0, %v3214
      %v3216 = vpop.f32.mrb[0].mxu0
      %3217 = vmatprep.mubr.f32.mxu0 %v3087
      %3218 = vmatmul.mubr.f32.gmra.mrb[0].mxu0 %v2997
      %v3219 = vpop.f32.mrb[0].mxu0
      %v3220 = vadd.f32 0.0, %v3219
      %v3221 = vpop.f32.mrb[0].mxu0
      %3222 = vmatprep.mubr.f32.mxu0 %v3089
      %3223 = vmatmul.mubr.f32.gmra.mrb[0].mxu0 %v3001
      %v3224 = vpop.f32.mrb[0].mxu0
      %v3225 = vadd.f32 0.0, %v3224
      %v3226 = vpop.f32.mrb[0].mxu0
      %3227 = vmatprep.mubr.f32.mxu0 %v3091
      %3228 = vmatmul.mubr.f32.gmra.mrb[0].mxu0 %v3005
      %v3229 = vpop.f32.mrb[0].mxu0
      %v3230 = vadd.f32 0.0, %v3229
      %v3231 = vpop.f32.mrb[0].mxu0
      %3232 = vmatprep.mubr.f32.mxu0 %v3093
      %3233 = vmatmul.mubr.f32.gmra.mrb[0].mxu0 %v3009
      %v3234 = vpop.f32.mrb[0].mxu0
      %v3235 = vadd.f32 0.0, %v3234
      %v3236 = vpop.f32.mrb[0].mxu0
      %3237 = vmatprep.mubr.f32.mxu0 %v3095
      %3238 = vmatmul.mubr.f32.gmra.mrb[0].mxu0 %v3013
      %v3239 = vpop.f32.mrb[0].mxu0
      %v3240 = vadd.f32 0.0, %v3239
      %v3241 = vpop.f32.mrb[0].mxu0
      %3242 = vmatprep.mubr.f32.mxu0 %v3097
      %3243 = vmatmul.mubr.f32.gmra.mrb[0].mxu0 %v3017
      %v3244 = vpop.f32.mrb[0].mxu0
      %v3245 = vadd.f32 0.0, %v3244
      %v3246 = vpop.f32.mrb[0].mxu0
      %3247 = vmatprep.mubr.f32.mxu0 %v3099
      %3248 = vmatmul.mubr.f32.gmra.mrb[0].mxu0 %v3021
      %v3249 = vpop.f32.mrb[0].mxu0
      %v3250 = vadd.f32 0.0, %v3249
      %v3251 = vpop.f32.mrb[0].mxu0
      %3252 = vmatprep.mubr.f32.mxu0 %v3101
      %3253 = vmatmul.mubr.f32.gmra.mrb[0].mxu0 %v3025
      %v3254 = vpop.f32.mrb[0].mxu0
      %v3255 = vadd.f32 0.0, %v3254
      %v3256 = vpop.f32.mrb[0].mxu0
      %3257 = vmatprep.mubr.f32.mxu0 %v3103
      %3258 = vmatmul.mubr.f32.gmra.mrb[0].mxu0 %v3029
      %v3259 = vpop.f32.mrb[0].mxu0
      %v3260 = vadd.f32 0.0, %v3259
      %v3261 = vpop.f32.mrb[0].mxu0
      %3262 = vmatprep.mubr.f32.mxu0 %v3105
      %3263 = vmatmul.mubr.f32.gmra.mrb[0].mxu0 %v3033
      %v3264 = vpop.f32.mrb[0].mxu0
      %v3265 = vadd.f32 0.0, %v3264
      %v3266 = vpop.f32.mrb[0].mxu0
      %3267 = vmatprep.mubr.f32.mxu0 %v3107
      %3268 = vmatmul.mubr.f32.gmra.mrb[0].mxu0 %v3037
      %v3269 = vpop.f32.mrb[0].mxu0
      %v3270 = vadd.f32 0.0, %v3269
      %v3271 = vpop.f32.mrb[0].mxu0
      %3272 = vmatprep.mubr.f32.mxu0 %v3109
      %3273 = vmatmul.mubr.f32.gmra.mrb[0].mxu0 %v3041
      %v3274 = vpop.f32.mrb[0].mxu0
      %v3275 = vadd.f32 0.0, %v3274
      %v3276 = vpop.f32.mrb[0].mxu0
      %3277 = vmatprep.mubr.f32.mxu0 %v3111
      %3278 = vmatmul.mubr.f32.gmra.mrb[0].mxu0 %v3045
      %v3279 = vpop.f32.mrb[0].mxu0
      %v3280 = vadd.f32 0.0, %v3279
      %v3281 = vpop.f32.mrb[0].mxu0
      %3282 = vmatprep.mubr.f32.mxu0 %v3113
      %3283 = vmatmul.mubr.f32.gmra.mrb[0].mxu0 %v3049
      %v3284 = vpop.f32.mrb[0].mxu0
      %v3285 = vadd.f32 0.0, %v3284
      %v3286 = vpop.f32.mrb[0].mxu0
      %3287 = vdwg.mxu0
      %v3288 = vadd.f32 %v2838, %v3185
      %v3289 = vadd.f32 %v2839, %v3190
      %v3290 = vadd.f32 %v2840, %v3195
      %v3291 = vadd.f32 %v2841, %v3200
      %v3292 = vadd.f32 %v2842, %v3205
      %v3293 = vadd.f32 %v2843, %v3210
      %v3294 = vadd.f32 %v2844, %v3215
      %v3295 = vadd.f32 %v2845, %v3220
      %v3296 = vadd.f32 %v2846, %v3225
      %v3297 = vadd.f32 %v2847, %v3230
      %v3298 = vadd.f32 %v2848, %v3235
      %v3299 = vadd.f32 %v2849, %v3240
      %v3300 = vadd.f32 %v2850, %v3245
      %v3301 = vadd.f32 %v2851, %v3250
      %v3302 = vadd.f32 %v2852, %v3255
      %v3303 = vadd.f32 %v2853, %v3260
      %v3304 = vadd.f32 %v2854, %v3265
      %v3305 = vadd.f32 %v2855, %v3270
      %v3306 = vadd.f32 %v2856, %v3275
      %v3307 = vadd.f32 %v2857, %v3280
      %v3308 = vadd.f32 %v2858, %v3285
      %v3309 = vld [vmem:[#allocation2 + $0x30] sm:$0xe0]
      %v3310 = vld [vmem:[#allocation2 + $0x38] sm:$0xe0]
      %v3311 = vld [vmem:[#allocation2 + $0x180] sm:$0x1f]
      %v3312 = vld [vmem:[#allocation2 + $0x188] sm:$0x1f]
      %s3313 = scalar_lea.vmem %s4, 952
      %v3314 = vld [vmem:[%s3313] sm:$0xff]
      %v3315 = vld [vmem:[%s3313 + $0x8] sm:$0xff]
      %v3316 = vld [vmem:[%s3313 + $0x10] sm:$0xff]
      %v3317 = vld [vmem:[%s3313 + $0x18] sm:$0xff]
      %v3318 = vld [vmem:[%s3313 + $0x20] sm:$0xff]
      %v3319 = vld [vmem:[%s3313 + $0x28] sm:$0xff]
      %v3320 = vld [vmem:[%s3313 + $0x30] sm:$0xff]
      %v3321 = vld [vmem:[%s3313 + $0x38] sm:$0xff]
      %v3322 = vld [vmem:[%s3313 + $0x40] sm:$0xff]
      %v3323 = vld [vmem:[%s3313 + $0x48] sm:$0xff]
      %v3324 = vld [vmem:[%s3313 + $0x50] sm:$0xff]
      %v3325 = vld [vmem:[%s3313 + $0x58] sm:$0xff]
      %v3326 = vld [vmem:[%s3313 + $0x60] sm:$0xff]
      %v3327 = vld [vmem:[%s3313 + $0x68] sm:$0xff]
      %v3328 = vld [vmem:[%s3313 + $0x70] sm:$0xff]
      %v3329 = vld [vmem:[%s3313 + $0x78] sm:$0xff]
      %v3330 = vld [vmem:[%s3313 + $0x80] sm:$0x3]
      %vm3335 = vcmask 1042432
      %v3336 = vrot.slane %v3309, 5
      %v3337 = vrot.slane %v2861, 5
      %v3338 = vsel %vm3335, %v3336, %v3337
      %v3339 = vrot.slane %v3310, 5
      %v3340 = vrot.slane %v2862, 5
      %v3341 = vsel %vm3335, %v3339, %v3340
      %v3342 = vrot.slane %v2863, 5
      %v3343 = vsel %vm3335, %v3337, %v3342
      %v3344 = vrot.slane %v2864, 5
      %v3345 = vsel %vm3335, %v3340, %v3344
      %v3346 = vrot.slane %v2865, 5
      %v3347 = vsel %vm3335, %v3342, %v3346
      %v3348 = vrot.slane %v2866, 5
      %v3349 = vsel %vm3335, %v3344, %v3348
      %v3350 = vrot.slane %v2867, 5
      %v3351 = vsel %vm3335, %v3346, %v3350
      %v3352 = vrot.slane %v2868, 5
      %v3353 = vsel %vm3335, %v3348, %v3352
      %v3354 = vrot.slane %v2869, 5
      %v3355 = vsel %vm3335, %v3350, %v3354
      %v3356 = vrot.slane %v2870, 5
      %v3357 = vsel %vm3335, %v3352, %v3356
      %v3358 = vrot.slane %v2871, 5
      %v3359 = vsel %vm3335, %v3354, %v3358
      %v3360 = vrot.slane %v2872, 5
      %v3361 = vsel %vm3335, %v3356, %v3360
      %v3362 = vrot.slane %v2873, 5
      %v3363 = vsel %vm3335, %v3358, %v3362
      %v3364 = vrot.slane %v2874, 5
      %v3365 = vsel %vm3335, %v3360, %v3364
      %v3366 = vrot.slane %v2875, 5
      %v3367 = vsel %vm3335, %v3362, %v3366
      %v3368 = vrot.slane %v2876, 5
      %v3369 = vsel %vm3335, %v3364, %v3368
      %v3370 = vrot.slane %v2877, 5
      %v3371 = vsel %vm3335, %v3366, %v3370
      %v3372 = vrot.slane %v2878, 5
      %v3373 = vsel %vm3335, %v3368, %v3372
      %v3374 = vrot.slane %v2879, 5
      %v3375 = vsel %vm3335, %v3370, %v3374
      %v3376 = vrot.slane %v2880, 5
      %v3377 = vsel %vm3335, %v3372, %v3376
      %v3378 = vrot.slane %v2881, 5
      %v3379 = vsel %vm3335, %v3374, %v3378
      %v3380 = vrot.slane %v2882, 5
      %v3381 = vsel %vm3335, %v3376, %v3380
      %v3382 = vrot.slane %v2883, 5
      %v3383 = vsel %vm3335, %v3378, %v3382
      %v3384 = vrot.slane %v2884, 5
      %v3385 = vsel %vm3335, %v3380, %v3384
      %v3386 = vrot.slane %v2885, 5
      %v3387 = vsel %vm3335, %v3382, %v3386
      %v3388 = vrot.slane %v2886, 5
      %v3389 = vsel %vm3335, %v3384, %v3388
      %v3390 = vrot.slane %v2887, 5
      %v3391 = vsel %vm3335, %v3386, %v3390
      %v3392 = vrot.slane %v2888, 5
      %v3393 = vsel %vm3335, %v3388, %v3392
      %v3394 = vrot.slane %v2889, 5
      %v3395 = vsel %vm3335, %v3390, %v3394
      %v3396 = vrot.slane %v2890, 5
      %v3397 = vsel %vm3335, %v3392, %v3396
      %v3398 = vrot.slane %v2891, 5
      %v3399 = vsel %vm3335, %v3394, %v3398
      %v3400 = vrot.slane %v2892, 5
      %v3401 = vsel %vm3335, %v3396, %v3400
      %v3402 = vrot.slane %v2893, 5
      %v3403 = vsel %vm3335, %v3398, %v3402
      %v3404 = vrot.slane %v2894, 5
      %v3405 = vsel %vm3335, %v3400, %v3404
      %v3406 = vrot.slane %v2895, 5
      %v3407 = vsel %vm3335, %v3402, %v3406
      %v3408 = vrot.slane %v2896, 5
      %v3409 = vsel %vm3335, %v3404, %v3408
      %v3410 = vrot.slane %v2897, 5
      %v3411 = vsel %vm3335, %v3406, %v3410
      %v3412 = vrot.slane %v2898, 5
      %v3413 = vsel %vm3335, %v3408, %v3412
      %v3414 = vrot.slane %v2899, 5
      %v3415 = vsel %vm3335, %v3410, %v3414
      %v3416 = vrot.slane %v2900, 5
      %v3417 = vsel %vm3335, %v3412, %v3416
      %v3418 = vrot.slane %v3311, 5
      %v3419 = vsel %vm3335, %v3414, %v3418
      %v3420 = vrot.slane %v3312, 5
      %v3421 = vsel %vm3335, %v3416, %v3420
      %v3443 = vsel %vm699, %v3341, 0
      %v3445 = vsel %vm699, %v3345, 0
      %v3447 = vsel %vm699, %v3349, 0
      %v3449 = vsel %vm699, %v3353, 0
      %v3451 = vsel %vm699, %v3357, 0
      %v3453 = vsel %vm699, %v3361, 0
      %v3455 = vsel %vm699, %v3365, 0
      %v3457 = vsel %vm699, %v3369, 0
      %v3459 = vsel %vm699, %v3373, 0
      %v3461 = vsel %vm699, %v3377, 0
      %v3463 = vsel %vm699, %v3381, 0
      %v3465 = vsel %vm699, %v3385, 0
      %v3467 = vsel %vm699, %v3389, 0
      %v3469 = vsel %vm699, %v3393, 0
      %v3471 = vsel %vm699, %v3397, 0
      %v3473 = vsel %vm699, %v3401, 0
      %v3475 = vsel %vm699, %v3405, 0
      %v3477 = vsel %vm699, %v3409, 0
      %v3479 = vsel %vm699, %v3413, 0
      %v3481 = vsel %vm699, %v3417, 0
      %v3483 = vsel %vm699, %v3421, 0
      %v3486 = vsel %vm1024, %v3330, 0
      %3488 = vmatprep.subr.mxu0 0.0
      %3489 = vmatpush1.msra.mxu0 %v3314
      %3490 = vmatprep.subr.mxu0 0.0
      %3491 = vmatpush1.msra.mxu0 %v3315
      %3492 = vmatprep.subr.mxu0 0.0
      %3493 = vmatpush1.msra.mxu0 %v3316
      %3494 = vmatprep.subr.mxu0 0.0
      %3495 = vmatpush1.msra.mxu0 %v3317
      %3496 = vmatprep.subr.mxu0 0.0
      %3497 = vmatpush1.msra.mxu0 %v3318
      %3498 = vmatprep.subr.mxu0 0.0
      %3499 = vmatpush1.msra.mxu0 %v3319
      %3500 = vmatprep.subr.mxu0 0.0
      %3501 = vmatpush1.msra.mxu0 %v3320
      %3502 = vmatprep.subr.mxu0 0.0
      %3503 = vmatpush1.msra.mxu0 %v3321
      %3504 = vmatprep.subr.mxu0 0.0
      %3505 = vmatpush1.msra.mxu0 %v3322
      %3506 = vmatprep.subr.mxu0 0.0
      %3507 = vmatpush1.msra.mxu0 %v3323
      %3508 = vmatprep.subr.mxu0 0.0
      %3509 = vmatpush1.msra.mxu0 %v3324
      %3510 = vmatprep.subr.mxu0 0.0
      %3511 = vmatpush1.msra.mxu0 %v3325
      %3512 = vmatprep.subr.mxu0 0.0
      %3513 = vmatpush1.msra.mxu0 %v3326
      %3514 = vmatprep.subr.mxu0 0.0
      %3515 = vmatpush1.msra.mxu0 %v3327
      %3516 = vmatprep.subr.mxu0 0.0
      %3517 = vmatpush1.msra.mxu0 %v3328
      %3518 = vmatprep.subr.mxu0 0.0
      %3519 = vmatpush1.msra.mxu0 %v3329
      %3520 = vmatprep.subr.mxu0 0.0
      %3521 = vmatpush1.msra.mxu0 %v3486
      %3522 = vmatprep.subr.mxu0 0.0
      %3523 = vmatpush1.msra.mxu0 0.0
      %3524 = vmatprep.subr.mxu0 0.0
      %3525 = vmatpush1.msra.mxu0 0.0
      %3526 = vmatprep.subr.mxu0 0.0
      %3527 = vmatpush1.msra.mxu0 0.0
      %3528 = vmatprep.subr.mxu0 0.0
      %3529 = vmatpush1.msra.mxu0 0.0
      %3530 = vmatprep.subr.mxu0 0.0
      %3531 = vmatpush1.msra.mxu0 0.0
      %3532 = vmatprep.subr.mxu0 0.0
      %3533 = vmatpush1.msra.mxu0 0.0
      %3534 = vmatprep.subr.mxu0 0.0
      %3535 = vmatpush1.msra.mxu0 0.0
      %3536 = vmatprep.subr.mxu0 0.0
      %3537 = vmatpush1.msra.mxu0 0.0
      %3538 = vmatprep.subr.mxu0 0.0
      %3539 = vmatpush1.msra.mxu0 0.0
      %3540 = vmatprep.subr.mxu0 0.0
      %3541 = vmatpush1.msra.mxu0 0.0
      %3542 = vmatprep.subr.mxu0 0.0
      %3543 = vmatpush1.msra.mxu0 0.0
      %3544 = vmatprep.subr.mxu0 0.0
      %3545 = vmatpush1.msra.mxu0 0.0
      %3546 = vmatprep.subr.mxu0 0.0
      %3547 = vmatpush1.msra.mxu0 0.0
      %3548 = vmatprep.subr.mxu0 0.0
      %3549 = vmatpush1.msra.mxu0 0.0
      %3550 = vmatprep.subr.mxu0 0.0
      %3551 = vmatpush1.msra.mxu0 0.0
      %3552 = vmatprep.mubr.f32.mxu0 %v3443
      %3553 = vmatmul.mubr.f32.gmra.mrb[0].mxu0 %v3338
      %v3554 = vpop.f32.mrb[0].mxu0
      %v3555 = vadd.f32 0.0, %v3554
      %v3556 = vpop.f32.mrb[0].mxu0
      %3557 = vmatprep.mubr.f32.mxu0 %v3445
      %3558 = vmatmul.mubr.f32.gmra.mrb[0].mxu0 %v3343
      %v3559 = vpop.f32.mrb[0].mxu0
      %v3560 = vadd.f32 0.0, %v3559
      %v3561 = vpop.f32.mrb[0].mxu0
      %3562 = vmatprep.mubr.f32.mxu0 %v3447
      %3563 = vmatmul.mubr.f32.gmra.mrb[0].mxu0 %v3347
      %v3564 = vpop.f32.mrb[0].mxu0
      %v3565 = vadd.f32 0.0, %v3564
      %v3566 = vpop.f32.mrb[0].mxu0
      %3567 = vmatprep.mubr.f32.mxu0 %v3449
      %3568 = vmatmul.mubr.f32.gmra.mrb[0].mxu0 %v3351
      %v3569 = vpop.f32.mrb[0].mxu0
      %v3570 = vadd.f32 0.0, %v3569
      %v3571 = vpop.f32.mrb[0].mxu0
      %3572 = vmatprep.mubr.f32.mxu0 %v3451
      %3573 = vmatmul.mubr.f32.gmra.mrb[0].mxu0 %v3355
      %v3574 = vpop.f32.mrb[0].mxu0
      %v3575 = vadd.f32 0.0, %v3574
      %v3576 = vpop.f32.mrb[0].mxu0
      %3577 = vmatprep.mubr.f32.mxu0 %v3453
      %3578 = vmatmul.mubr.f32.gmra.mrb[0].mxu0 %v3359
      %v3579 = vpop.f32.mrb[0].mxu0
      %v3580 = vadd.f32 0.0, %v3579
      %v3581 = vpop.f32.mrb[0].mxu0
      %3582 = vmatprep.mubr.f32.mxu0 %v3455
      %3583 = vmatmul.mubr.f32.gmra.mrb[0].mxu0 %v3363
      %v3584 = vpop.f32.mrb[0].mxu0
      %v3585 = vadd.f32 0.0, %v3584
      %v3586 = vpop.f32.mrb[0].mxu0
      %3587 = vmatprep.mubr.f32.mxu0 %v3457
      %3588 = vmatmul.mubr.f32.gmra.mrb[0].mxu0 %v3367
      %v3589 = vpop.f32.mrb[0].mxu0
      %v3590 = vadd.f32 0.0, %v3589
      %v3591 = vpop.f32.mrb[0].mxu0
      %3592 = vmatprep.mubr.f32.mxu0 %v3459
      %3593 = vmatmul.mubr.f32.gmra.mrb[0].mxu0 %v3371
      %v3594 = vpop.f32.mrb[0].mxu0
      %v3595 = vadd.f32 0.0, %v3594
      %v3596 = vpop.f32.mrb[0].mxu0
      %3597 = vmatprep.mubr.f32.mxu0 %v3461
      %3598 = vmatmul.mubr.f32.gmra.mrb[0].mxu0 %v3375
      %v3599 = vpop.f32.mrb[0].mxu0
      %v3600 = vadd.f32 0.0, %v3599
      %v3601 = vpop.f32.mrb[0].mxu0
      %3602 = vmatprep.mubr.f32.mxu0 %v3463
      %3603 = vmatmul.mubr.f32.gmra.mrb[0].mxu0 %v3379
      %v3604 = vpop.f32.mrb[0].mxu0
      %v3605 = vadd.f32 0.0, %v3604
      %v3606 = vpop.f32.mrb[0].mxu0
      %3607 = vmatprep.mubr.f32.mxu0 %v3465
      %3608 = vmatmul.mubr.f32.gmra.mrb[0].mxu0 %v3383
      %v3609 = vpop.f32.mrb[0].mxu0
      %v3610 = vadd.f32 0.0, %v3609
      %v3611 = vpop.f32.mrb[0].mxu0
      %3612 = vmatprep.mubr.f32.mxu0 %v3467
      %3613 = vmatmul.mubr.f32.gmra.mrb[0].mxu0 %v3387
      %v3614 = vpop.f32.mrb[0].mxu0
      %v3615 = vadd.f32 0.0, %v3614
      %v3616 = vpop.f32.mrb[0].mxu0
      %3617 = vmatprep.mubr.f32.mxu0 %v3469
      %3618 = vmatmul.mubr.f32.gmra.mrb[0].mxu0 %v3391
      %v3619 = vpop.f32.mrb[0].mxu0
      %v3620 = vadd.f32 0.0, %v3619
      %v3621 = vpop.f32.mrb[0].mxu0
      %3622 = vmatprep.mubr.f32.mxu0 %v3471
      %3623 = vmatmul.mubr.f32.gmra.mrb[0].mxu0 %v3395
      %v3624 = vpop.f32.mrb[0].mxu0
      %v3625 = vadd.f32 0.0, %v3624
      %v3626 = vpop.f32.mrb[0].mxu0
      %3627 = vmatprep.mubr.f32.mxu0 %v3473
      %3628 = vmatmul.mubr.f32.gmra.mrb[0].mxu0 %v3399
      %v3629 = vpop.f32.mrb[0].mxu0
      %v3630 = vadd.f32 0.0, %v3629
      %v3631 = vpop.f32.mrb[0].mxu0
      %3632 = vmatprep.mubr.f32.mxu0 %v3475
      %3633 = vmatmul.mubr.f32.gmra.mrb[0].mxu0 %v3403
      %v3634 = vpop.f32.mrb[0].mxu0
      %v3635 = vadd.f32 0.0, %v3634
      %v3636 = vpop.f32.mrb[0].mxu0
      %3637 = vmatprep.mubr.f32.mxu0 %v3477
      %3638 = vmatmul.mubr.f32.gmra.mrb[0].mxu0 %v3407
      %v3639 = vpop.f32.mrb[0].mxu0
      %v3640 = vadd.f32 0.0, %v3639
      %v3641 = vpop.f32.mrb[0].mxu0
      %3642 = vmatprep.mubr.f32.mxu0 %v3479
      %3643 = vmatmul.mubr.f32.gmra.mrb[0].mxu0 %v3411
      %v3644 = vpop.f32.mrb[0].mxu0
      %v3645 = vadd.f32 0.0, %v3644
      %v3646 = vpop.f32.mrb[0].mxu0
      %3647 = vmatprep.mubr.f32.mxu0 %v3481
      %3648 = vmatmul.mubr.f32.gmra.mrb[0].mxu0 %v3415
      %v3649 = vpop.f32.mrb[0].mxu0
      %v3650 = vadd.f32 0.0, %v3649
      %v3651 = vpop.f32.mrb[0].mxu0
      %3652 = vmatprep.mubr.f32.mxu0 %v3483
      %3653 = vmatmul.mubr.f32.gmra.mrb[0].mxu0 %v3419
      %v3654 = vpop.f32.mrb[0].mxu0
      %v3655 = vadd.f32 0.0, %v3654
      %v3656 = vpop.f32.mrb[0].mxu0
      %3657 = vdwg.mxu0
      %v3658 = vadd.f32 %v3288, %v3555
      %v3659 = vadd.f32 %v3289, %v3560
      %v3660 = vadd.f32 %v3290, %v3565
      %v3661 = vadd.f32 %v3291, %v3570
      %v3662 = vadd.f32 %v3292, %v3575
      %v3663 = vadd.f32 %v3293, %v3580
      %v3664 = vadd.f32 %v3294, %v3585
      %v3665 = vadd.f32 %v3295, %v3590
      %v3666 = vadd.f32 %v3296, %v3595
      %v3667 = vadd.f32 %v3297, %v3600
      %v3668 = vadd.f32 %v3298, %v3605
      %v3669 = vadd.f32 %v3299, %v3610
      %v3670 = vadd.f32 %v3300, %v3615
      %v3671 = vadd.f32 %v3301, %v3620
      %v3672 = vadd.f32 %v3302, %v3625
      %v3673 = vadd.f32 %v3303, %v3630
      %v3674 = vadd.f32 %v3304, %v3635
      %v3675 = vadd.f32 %v3305, %v3640
      %v3676 = vadd.f32 %v3306, %v3645
      %v3677 = vadd.f32 %v3307, %v3650
      %v3678 = vadd.f32 %v3308, %v3655
      %v3679 = vld [vmem:[#allocation2 + $0x30] sm:$0xc0]
      %v3680 = vld [vmem:[#allocation2 + $0x38] sm:$0xc0]
      %v3681 = vld [vmem:[#allocation2 + $0x180] sm:$0x3f]
      %v3682 = vld [vmem:[#allocation2 + $0x188] sm:$0x3f]
      %s3683 = scalar_lea.vmem %s4, 1088
      %v3684 = vld [vmem:[%s3683] sm:$0xff]
      %v3685 = vld [vmem:[%s3683 + $0x8] sm:$0xff]
      %v3686 = vld [vmem:[%s3683 + $0x10] sm:$0xff]
      %v3687 = vld [vmem:[%s3683 + $0x18] sm:$0xff]
      %v3688 = vld [vmem:[%s3683 + $0x20] sm:$0xff]
      %v3689 = vld [vmem:[%s3683 + $0x28] sm:$0xff]
      %v3690 = vld [vmem:[%s3683 + $0x30] sm:$0xff]
      %v3691 = vld [vmem:[%s3683 + $0x38] sm:$0xff]
      %v3692 = vld [vmem:[%s3683 + $0x40] sm:$0xff]
      %v3693 = vld [vmem:[%s3683 + $0x48] sm:$0xff]
      %v3694 = vld [vmem:[%s3683 + $0x50] sm:$0xff]
      %v3695 = vld [vmem:[%s3683 + $0x58] sm:$0xff]
      %v3696 = vld [vmem:[%s3683 + $0x60] sm:$0xff]
      %v3697 = vld [vmem:[%s3683 + $0x68] sm:$0xff]
      %v3698 = vld [vmem:[%s3683 + $0x70] sm:$0xff]
      %v3699 = vld [vmem:[%s3683 + $0x78] sm:$0xff]
      %v3700 = vld [vmem:[%s3683 + $0x80] sm:$0x3]
      %v3705 = vrot.slane %v3679, 6
      %v3706 = vrot.slane %v2861, 6
      %v3707 = vsel %vm1024, %v3705, %v3706
      %v3708 = vrot.slane %v3680, 6
      %v3709 = vrot.slane %v2862, 6
      %v3710 = vsel %vm1024, %v3708, %v3709
      %v3711 = vrot.slane %v2863, 6
      %v3712 = vsel %vm1024, %v3706, %v3711
      %v3713 = vrot.slane %v2864, 6
      %v3714 = vsel %vm1024, %v3709, %v3713
      %v3715 = vrot.slane %v2865, 6
      %v3716 = vsel %vm1024, %v3711, %v3715
      %v3717 = vrot.slane %v2866, 6
      %v3718 = vsel %vm1024, %v3713, %v3717
      %v3719 = vrot.slane %v2867, 6
      %v3720 = vsel %vm1024, %v3715, %v3719
      %v3721 = vrot.slane %v2868, 6
      %v3722 = vsel %vm1024, %v3717, %v3721
      %v3723 = vrot.slane %v2869, 6
      %v3724 = vsel %vm1024, %v3719, %v3723
      %v3725 = vrot.slane %v2870, 6
      %v3726 = vsel %vm1024, %v3721, %v3725
      %v3727 = vrot.slane %v2871, 6
      %v3728 = vsel %vm1024, %v3723, %v3727
      %v3729 = vrot.slane %v2872, 6
      %v3730 = vsel %vm1024, %v3725, %v3729
      %v3731 = vrot.slane %v2873, 6
      %v3732 = vsel %vm1024, %v3727, %v3731
      %v3733 = vrot.slane %v2874, 6
      %v3734 = vsel %vm1024, %v3729, %v3733
      %v3735 = vrot.slane %v2875, 6
      %v3736 = vsel %vm1024, %v3731, %v3735
      %v3737 = vrot.slane %v2876, 6
      %v3738 = vsel %vm1024, %v3733, %v3737
      %v3739 = vrot.slane %v2877, 6
      %v3740 = vsel %vm1024, %v3735, %v3739
      %v3741 = vrot.slane %v2878, 6
      %v3742 = vsel %vm1024, %v3737, %v3741
      %v3743 = vrot.slane %v2879, 6
      %v3744 = vsel %vm1024, %v3739, %v3743
      %v3745 = vrot.slane %v2880, 6
      %v3746 = vsel %vm1024, %v3741, %v3745
      %v3747 = vrot.slane %v2881, 6
      %v3748 = vsel %vm1024, %v3743, %v3747
      %v3749 = vrot.slane %v2882, 6
      %v3750 = vsel %vm1024, %v3745, %v3749
      %v3751 = vrot.slane %v2883, 6
      %v3752 = vsel %vm1024, %v3747, %v3751
      %v3753 = vrot.slane %v2884, 6
      %v3754 = vsel %vm1024, %v3749, %v3753
      %v3755 = vrot.slane %v2885, 6
      %v3756 = vsel %vm1024, %v3751, %v3755
      %v3757 = vrot.slane %v2886, 6
      %v3758 = vsel %vm1024, %v3753, %v3757
      %v3759 = vrot.slane %v2887, 6
      %v3760 = vsel %vm1024, %v3755, %v3759
      %v3761 = vrot.slane %v2888, 6
      %v3762 = vsel %vm1024, %v3757, %v3761
      %v3763 = vrot.slane %v2889, 6
      %v3764 = vsel %vm1024, %v3759, %v3763
      %v3765 = vrot.slane %v2890, 6
      %v3766 = vsel %vm1024, %v3761, %v3765
      %v3767 = vrot.slane %v2891, 6
      %v3768 = vsel %vm1024, %v3763, %v3767
      %v3769 = vrot.slane %v2892, 6
      %v3770 = vsel %vm1024, %v3765, %v3769
      %v3771 = vrot.slane %v2893, 6
      %v3772 = vsel %vm1024, %v3767, %v3771
      %v3773 = vrot.slane %v2894, 6
      %v3774 = vsel %vm1024, %v3769, %v3773
      %v3775 = vrot.slane %v2895, 6
      %v3776 = vsel %vm1024, %v3771, %v3775
      %v3777 = vrot.slane %v2896, 6
      %v3778 = vsel %vm1024, %v3773, %v3777
      %v3779 = vrot.slane %v2897, 6
      %v3780 = vsel %vm1024, %v3775, %v3779
      %v3781 = vrot.slane %v2898, 6
      %v3782 = vsel %vm1024, %v3777, %v3781
      %v3783 = vrot.slane %v2899, 6
      %v3784 = vsel %vm1024, %v3779, %v3783
      %v3785 = vrot.slane %v2900, 6
      %v3786 = vsel %vm1024, %v3781, %v3785
      %v3787 = vrot.slane %v3681, 6
      %v3788 = vsel %vm1024, %v3783, %v3787
      %v3789 = vrot.slane %v3682, 6
      %v3790 = vsel %vm1024, %v3785, %v3789
      %v3812 = vsel %vm699, %v3710, 0
      %v3814 = vsel %vm699, %v3714, 0
      %v3816 = vsel %vm699, %v3718, 0
      %v3818 = vsel %vm699, %v3722, 0
      %v3820 = vsel %vm699, %v3726, 0
      %v3822 = vsel %vm699, %v3730, 0
      %v3824 = vsel %vm699, %v3734, 0
      %v3826 = vsel %vm699, %v3738, 0
      %v3828 = vsel %vm699, %v3742, 0
      %v3830 = vsel %vm699, %v3746, 0
      %v3832 = vsel %vm699, %v3750, 0
      %v3834 = vsel %vm699, %v3754, 0
      %v3836 = vsel %vm699, %v3758, 0
      %v3838 = vsel %vm699, %v3762, 0
      %v3840 = vsel %vm699, %v3766, 0
      %v3842 = vsel %vm699, %v3770, 0
      %v3844 = vsel %vm699, %v3774, 0
      %v3846 = vsel %vm699, %v3778, 0
      %v3848 = vsel %vm699, %v3782, 0
      %v3850 = vsel %vm699, %v3786, 0
      %v3852 = vsel %vm699, %v3790, 0
      %v3855 = vsel %vm1024, %v3700, 0
      %3857 = vmatprep.subr.mxu0 0.0
      %3858 = vmatpush1.msra.mxu0 %v3684
      %3859 = vmatprep.subr.mxu0 0.0
      %3860 = vmatpush1.msra.mxu0 %v3685
      %3861 = vmatprep.subr.mxu0 0.0
      %3862 = vmatpush1.msra.mxu0 %v3686
      %3863 = vmatprep.subr.mxu0 0.0
      %3864 = vmatpush1.msra.mxu0 %v3687
      %3865 = vmatprep.subr.mxu0 0.0
      %3866 = vmatpush1.msra.mxu0 %v3688
      %3867 = vmatprep.subr.mxu0 0.0
      %3868 = vmatpush1.msra.mxu0 %v3689
      %3869 = vmatprep.subr.mxu0 0.0
      %3870 = vmatpush1.msra.mxu0 %v3690
      %3871 = vmatprep.subr.mxu0 0.0
      %3872 = vmatpush1.msra.mxu0 %v3691
      %3873 = vmatprep.subr.mxu0 0.0
      %3874 = vmatpush1.msra.mxu0 %v3692
      %3875 = vmatprep.subr.mxu0 0.0
      %3876 = vmatpush1.msra.mxu0 %v3693
      %3877 = vmatprep.subr.mxu0 0.0
      %3878 = vmatpush1.msra.mxu0 %v3694
      %3879 = vmatprep.subr.mxu0 0.0
      %3880 = vmatpush1.msra.mxu0 %v3695
      %3881 = vmatprep.subr.mxu0 0.0
      %3882 = vmatpush1.msra.mxu0 %v3696
      %3883 = vmatprep.subr.mxu0 0.0
      %3884 = vmatpush1.msra.mxu0 %v3697
      %3885 = vmatprep.subr.mxu0 0.0
      %3886 = vmatpush1.msra.mxu0 %v3698
      %3887 = vmatprep.subr.mxu0 0.0
      %3888 = vmatpush1.msra.mxu0 %v3699
      %3889 = vmatprep.subr.mxu0 0.0
      %3890 = vmatpush1.msra.mxu0 %v3855
      %3891 = vmatprep.subr.mxu0 0.0
      %3892 = vmatpush1.msra.mxu0 0.0
      %3893 = vmatprep.subr.mxu0 0.0
      %3894 = vmatpush1.msra.mxu0 0.0
      %3895 = vmatprep.subr.mxu0 0.0
      %3896 = vmatpush1.msra.mxu0 0.0
      %3897 = vmatprep.subr.mxu0 0.0
      %3898 = vmatpush1.msra.mxu0 0.0
      %3899 = vmatprep.subr.mxu0 0.0
      %3900 = vmatpush1.msra.mxu0 0.0
      %3901 = vmatprep.subr.mxu0 0.0
      %3902 = vmatpush1.msra.mxu0 0.0
      %3903 = vmatprep.subr.mxu0 0.0
      %3904 = vmatpush1.msra.mxu0 0.0
      %3905 = vmatprep.subr.mxu0 0.0
      %3906 = vmatpush1.msra.mxu0 0.0
      %3907 = vmatprep.subr.mxu0 0.0
      %3908 = vmatpush1.msra.mxu0 0.0
      %3909 = vmatprep.subr.mxu0 0.0
      %3910 = vmatpush1.msra.mxu0 0.0
      %3911 = vmatprep.subr.mxu0 0.0
      %3912 = vmatpush1.msra.mxu0 0.0
      %3913 = vmatprep.subr.mxu0 0.0
      %3914 = vmatpush1.msra.mxu0 0.0
      %3915 = vmatprep.subr.mxu0 0.0
      %3916 = vmatpush1.msra.mxu0 0.0
      %3917 = vmatprep.subr.mxu0 0.0
      %3918 = vmatpush1.msra.mxu0 0.0
      %3919 = vmatprep.subr.mxu0 0.0
      %3920 = vmatpush1.msra.mxu0 0.0
      %3921 = vmatprep.mubr.f32.mxu0 %v3812
      %3922 = vmatmul.mubr.f32.gmra.mrb[0].mxu0 %v3707
      %v3923 = vpop.f32.mrb[0].mxu0
      %v3924 = vadd.f32 0.0, %v3923
      %v3925 = vpop.f32.mrb[0].mxu0
      %3926 = vmatprep.mubr.f32.mxu0 %v3814
      %3927 = vmatmul.mubr.f32.gmra.mrb[0].mxu0 %v3712
      %v3928 = vpop.f32.mrb[0].mxu0
      %v3929 = vadd.f32 0.0, %v3928
      %v3930 = vpop.f32.mrb[0].mxu0
      %3931 = vmatprep.mubr.f32.mxu0 %v3816
      %3932 = vmatmul.mubr.f32.gmra.mrb[0].mxu0 %v3716
      %v3933 = vpop.f32.mrb[0].mxu0
      %v3934 = vadd.f32 0.0, %v3933
      %v3935 = vpop.f32.mrb[0].mxu0
      %3936 = vmatprep.mubr.f32.mxu0 %v3818
      %3937 = vmatmul.mubr.f32.gmra.mrb[0].mxu0 %v3720
      %v3938 = vpop.f32.mrb[0].mxu0
      %v3939 = vadd.f32 0.0, %v3938
      %v3940 = vpop.f32.mrb[0].mxu0
      %3941 = vmatprep.mubr.f32.mxu0 %v3820
      %3942 = vmatmul.mubr.f32.gmra.mrb[0].mxu0 %v3724
      %v3943 = vpop.f32.mrb[0].mxu0
      %v3944 = vadd.f32 0.0, %v3943
      %v3945 = vpop.f32.mrb[0].mxu0
      %3946 = vmatprep.mubr.f32.mxu0 %v3822
      %3947 = vmatmul.mubr.f32.gmra.mrb[0].mxu0 %v3728
      %v3948 = vpop.f32.mrb[0].mxu0
      %v3949 = vadd.f32 0.0, %v3948
      %v3950 = vpop.f32.mrb[0].mxu0
      %3951 = vmatprep.mubr.f32.mxu0 %v3824
      %3952 = vmatmul.mubr.f32.gmra.mrb[0].mxu0 %v3732
      %v3953 = vpop.f32.mrb[0].mxu0
      %v3954 = vadd.f32 0.0, %v3953
      %v3955 = vpop.f32.mrb[0].mxu0
      %3956 = vmatprep.mubr.f32.mxu0 %v3826
      %3957 = vmatmul.mubr.f32.gmra.mrb[0].mxu0 %v3736
      %v3958 = vpop.f32.mrb[0].mxu0
      %v3959 = vadd.f32 0.0, %v3958
      %v3960 = vpop.f32.mrb[0].mxu0
      %3961 = vmatprep.mubr.f32.mxu0 %v3828
      %3962 = vmatmul.mubr.f32.gmra.mrb[0].mxu0 %v3740
      %v3963 = vpop.f32.mrb[0].mxu0
      %v3964 = vadd.f32 0.0, %v3963
      %v3965 = vpop.f32.mrb[0].mxu0
      %3966 = vmatprep.mubr.f32.mxu0 %v3830
      %3967 = vmatmul.mubr.f32.gmra.mrb[0].mxu0 %v3744
      %v3968 = vpop.f32.mrb[0].mxu0
      %v3969 = vadd.f32 0.0, %v3968
      %v3970 = vpop.f32.mrb[0].mxu0
      %3971 = vmatprep.mubr.f32.mxu0 %v3832
      %3972 = vmatmul.mubr.f32.gmra.mrb[0].mxu0 %v3748
      %v3973 = vpop.f32.mrb[0].mxu0
      %v3974 = vadd.f32 0.0, %v3973
      %v3975 = vpop.f32.mrb[0].mxu0
      %3976 = vmatprep.mubr.f32.mxu0 %v3834
      %3977 = vmatmul.mubr.f32.gmra.mrb[0].mxu0 %v3752
      %v3978 = vpop.f32.mrb[0].mxu0
      %v3979 = vadd.f32 0.0, %v3978
      %v3980 = vpop.f32.mrb[0].mxu0
      %3981 = vmatprep.mubr.f32.mxu0 %v3836
      %3982 = vmatmul.mubr.f32.gmra.mrb[0].mxu0 %v3756
      %v3983 = vpop.f32.mrb[0].mxu0
      %v3984 = vadd.f32 0.0, %v3983
      %v3985 = vpop.f32.mrb[0].mxu0
      %3986 = vmatprep.mubr.f32.mxu0 %v3838
      %3987 = vmatmul.mubr.f32.gmra.mrb[0].mxu0 %v3760
      %v3988 = vpop.f32.mrb[0].mxu0
      %v3989 = vadd.f32 0.0, %v3988
      %v3990 = vpop.f32.mrb[0].mxu0
      %3991 = vmatprep.mubr.f32.mxu0 %v3840
      %3992 = vmatmul.mubr.f32.gmra.mrb[0].mxu0 %v3764
      %v3993 = vpop.f32.mrb[0].mxu0
      %v3994 = vadd.f32 0.0, %v3993
      %v3995 = vpop.f32.mrb[0].mxu0
      %3996 = vmatprep.mubr.f32.mxu0 %v3842
      %3997 = vmatmul.mubr.f32.gmra.mrb[0].mxu0 %v3768
      %v3998 = vpop.f32.mrb[0].mxu0
      %v3999 = vadd.f32 0.0, %v3998
      %v4000 = vpop.f32.mrb[0].mxu0
      %4001 = vmatprep.mubr.f32.mxu0 %v3844
      %4002 = vmatmul.mubr.f32.gmra.mrb[0].mxu0 %v3772
      %v4003 = vpop.f32.mrb[0].mxu0
      %v4004 = vadd.f32 0.0, %v4003
      %v4005 = vpop.f32.mrb[0].mxu0
      %4006 = vmatprep.mubr.f32.mxu0 %v3846
      %4007 = vmatmul.mubr.f32.gmra.mrb[0].mxu0 %v3776
      %v4008 = vpop.f32.mrb[0].mxu0
      %v4009 = vadd.f32 0.0, %v4008
      %v4010 = vpop.f32.mrb[0].mxu0
      %4011 = vmatprep.mubr.f32.mxu0 %v3848
      %4012 = vmatmul.mubr.f32.gmra.mrb[0].mxu0 %v3780
      %v4013 = vpop.f32.mrb[0].mxu0
      %v4014 = vadd.f32 0.0, %v4013
      %v4015 = vpop.f32.mrb[0].mxu0
      %4016 = vmatprep.mubr.f32.mxu0 %v3850
      %4017 = vmatmul.mubr.f32.gmra.mrb[0].mxu0 %v3784
      %v4018 = vpop.f32.mrb[0].mxu0
      %v4019 = vadd.f32 0.0, %v4018
      %v4020 = vpop.f32.mrb[0].mxu0
      %4021 = vmatprep.mubr.f32.mxu0 %v3852
      %4022 = vmatmul.mubr.f32.gmra.mrb[0].mxu0 %v3788
      %v4023 = vpop.f32.mrb[0].mxu0
      %v4024 = vadd.f32 0.0, %v4023
      %v4025 = vpop.f32.mrb[0].mxu0
      %4026 = vdwg.mxu0
      %v4027 = vadd.f32 %v3658, %v3924
      %v4028 = vadd.f32 %v3659, %v3929
      %v4029 = vadd.f32 %v3660, %v3934
      %v4030 = vadd.f32 %v3661, %v3939
      %v4031 = vadd.f32 %v3662, %v3944
      %v4032 = vadd.f32 %v3663, %v3949
      %v4033 = vadd.f32 %v3664, %v3954
      %v4034 = vadd.f32 %v3665, %v3959
      %v4035 = vadd.f32 %v3666, %v3964
      %v4036 = vadd.f32 %v3667, %v3969
      %v4037 = vadd.f32 %v3668, %v3974
      %v4038 = vadd.f32 %v3669, %v3979
      %v4039 = vadd.f32 %v3670, %v3984
      %v4040 = vadd.f32 %v3671, %v3989
      %v4041 = vadd.f32 %v3672, %v3994
      %v4042 = vadd.f32 %v3673, %v3999
      %v4043 = vadd.f32 %v3674, %v4004
      %v4044 = vadd.f32 %v3675, %v4009
      %v4045 = vadd.f32 %v3676, %v4014
      %v4046 = vadd.f32 %v3677, %v4019
      %v4047 = vadd.f32 %v3678, %v4024
      %v4048 = vld [vmem:[%s5] sm:$0x1]
      %v4050 = vlaneseq
      %v4051 = vshrl.u32 %v4050, 7
      %v4052 = vsub.s32 0, %v4051
      %v4053 = vrot.slane %v4048, %v4052
      %v4055 = vadd.f32 %v4027, %v4053
      %v4056 = vadd.f32 %v4028, %v4053
      %v4057 = vadd.f32 %v4029, %v4053
      %v4058 = vadd.f32 %v4030, %v4053
      %v4059 = vadd.f32 %v4031, %v4053
      %v4060 = vadd.f32 %v4032, %v4053
      %v4061 = vadd.f32 %v4033, %v4053
      %v4062 = vadd.f32 %v4034, %v4053
      %v4063 = vadd.f32 %v4035, %v4053
      %v4064 = vadd.f32 %v4036, %v4053
      %v4065 = vadd.f32 %v4037, %v4053
      %v4066 = vadd.f32 %v4038, %v4053
      %v4067 = vadd.f32 %v4039, %v4053
      %v4068 = vadd.f32 %v4040, %v4053
      %v4069 = vadd.f32 %v4041, %v4053
      %v4070 = vadd.f32 %v4042, %v4053
      %v4071 = vadd.f32 %v4043, %v4053
      %v4072 = vadd.f32 %v4044, %v4053
      %v4073 = vadd.f32 %v4045, %v4053
      %v4074 = vadd.f32 %v4046, %v4053
      %v4075 = vadd.f32 %v4047, %v4053
      %vm4076 = vcmask 130048
      %4077 = vst.msk [vmem:[%s251] sm:$0xff] %vm4076, %v4055
      %4078 = vst.msk [vmem:[%s251 + $0x8] sm:$0xff] %vm4076, %v4056
      %4079 = vst.msk [vmem:[%s251 + $0x10] sm:$0xff] %vm4076, %v4057
      %4080 = vst.msk [vmem:[%s251 + $0x18] sm:$0xff] %vm4076, %v4058
      %4081 = vst.msk [vmem:[%s251 + $0x20] sm:$0xff] %vm4076, %v4059
      %4082 = vst.msk [vmem:[%s251 + $0x28] sm:$0xff] %vm4076, %v4060
      %4083 = vst.msk [vmem:[%s251 + $0x30] sm:$0xff] %vm4076, %v4061
      %4084 = vst.msk [vmem:[%s251 + $0x38] sm:$0xff] %vm4076, %v4062
      %4085 = vst.msk [vmem:[%s251 + $0x40] sm:$0xff] %vm4076, %v4063
      %4086 = vst.msk [vmem:[%s251 + $0x48] sm:$0xff] %vm4076, %v4064
      %4087 = vst.msk [vmem:[%s251 + $0x50] sm:$0xff] %vm4076, %v4065
      %4088 = vst.msk [vmem:[%s251 + $0x58] sm:$0xff] %vm4076, %v4066
      %4089 = vst.msk [vmem:[%s251 + $0x60] sm:$0xff] %vm4076, %v4067
      %4090 = vst.msk [vmem:[%s251 + $0x68] sm:$0xff] %vm4076, %v4068
      %4091 = vst.msk [vmem:[%s251 + $0x70] sm:$0xff] %vm4076, %v4069
      %4092 = vst.msk [vmem:[%s251 + $0x78] sm:$0xff] %vm4076, %v4070
      %4093 = vst.msk [vmem:[%s251 + $0x80] sm:$0xff] %vm4076, %v4071
      %4094 = vst.msk [vmem:[%s251 + $0x88] sm:$0xff] %vm4076, %v4072
      %4095 = vst.msk [vmem:[%s251 + $0x90] sm:$0xff] %vm4076, %v4073
      %4096 = vst.msk [vmem:[%s251 + $0x98] sm:$0xff] %vm4076, %v4074
      %4097 = vst.msk [vmem:[%s251 + $0xa0] sm:$0xff] %vm4076, %v4075
      %p4098 = scmp.lt.s32.totalorder %s17, 1
      %s4099 = scalar_select %p4098, %s17, 1
      %s4100 = smul.addr %s4099, 21
      %s4101 = smul.addr %s4100, 8
      %s4102 = scalar_lea.vmem %s6, %s4101
      // Predicated region
      $region45: #{advanced_const_quant_net.1} parent=43 // pred_check
        %p4103 = pneg %p166
      $region46: #{advanced_const_quant_net.1} parent=43 // pred_check_branch
        %4105 = sbr.rel (%p4103) target = $region48
      $region47: #{advanced_const_quant_net.1} parent=43 // pred_region
        _
      $region48: #{advanced_const_quant_net.1} parent=43 // pred_fallthru
        _
    $region44: #{advanced_const_quant_net.1} parent=5 // pred_fallthru
      _
    %p4106 = scmp.le.s32.totalorder 2, %s12
    // Predicated region
    $region49: #{advanced_const_quant_net.1} parent=5 // pred_check
      %p4107 = pneg %p4106
    $region50: #{advanced_const_quant_net.1} parent=5 // pred_check_branch
      %4109 = sbr.rel (%p4107) target = $region52
    $region51: #{advanced_const_quant_net.1} parent=5 // pred_region
      %s4110 = ssub.s32 %s12, 2
      // Predicated region
      $region53: #{advanced_const_quant_net.1} parent=51 // pred_check
        %p4111 = pneg %p172
      $region54: #{advanced_const_quant_net.1} parent=51 // pred_check_branch
        %4113 = sbr.rel (%p4111) target = $region56
      $region55: #{advanced_const_quant_net.1} parent=51 // pred_region
        %p4114 = scmp.lt.s32.totalorder %s18, 1
        %s4115 = scalar_select %p4114, %s18, 1
        %s4116 = smul.addr %s4115, 21
        %s4117 = smul.addr %s4116, 8
        %s4118 = scalar_lea.vmem %s6, %s4117
      $region56: #{advanced_const_quant_net.1} parent=51 // pred_fallthru
        _
    $region52: #{advanced_const_quant_net.1} parent=5 // pred_fallthru
      _
  $region6: #{advanced_const_quant_net.1} parent=0 // loop_footer
    %s16 = sadd.s32 1, %s12
  $region7: #{advanced_const_quant_net.1} parent=0 // loop_footer_branch
    %11 = sbr.rel target = $region3
  $region8: #{advanced_const_quant_net.1} parent=0 // loop_exit
    _

</llo_original>
